<compile_context>
chip_gen: v7x
topology: tpu7x:2x2x1
jax: 0.10.0
libtpu: 0.0.40
codegen_flags: <defaults>
</compile_context>

<pallas_src>
import functools

import jax
import jax.numpy as jnp
from jax import lax
from jax.experimental import pallas as pl
from jax.experimental.pallas import tpu as pltpu


# ----------------------------------------------------------------------------
# In-kernel helpers (traced inside the Pallas kernel body).
# ----------------------------------------------------------------------------
def _tsm_shift(v, sframe, fold):
    """TSM shift for one segment in the (C, frames*positions) lane-major layout.

    v: (C, L) f32, frames concatenated along lanes at stride `sframe`.
    Channels [0, fold): frame t <- t+1; [fold, 2*fold): frame t <- t-1; rest: keep.
    Frame shift == lane shift by `sframe` (slice + zero tail).  Positions where the
    shift would wrap across segment ends are zero-filled (the TSM boundary rule) or
    land on never-consumed garbage positions of the flattened padded grid.
    """
    c, l = v.shape
    z = jnp.zeros((c, sframe), v.dtype)
    fwd = jnp.concatenate([v[:, sframe:], z], axis=1)
    bwd = jnp.concatenate([z, v[:, :l - sframe]], axis=1)
    # Channel groups live on sublanes and the fold boundary is not 8-aligned, so a
    # sublane-broadcast select is cheaper here than a misaligned sublane concat.
    cidx = lax.broadcasted_iota(jnp.int32, (c, l), 0)
    return jnp.where(cidx < fold, fwd, jnp.where(cidx < 2 * fold, bwd, v))


def _conv3x3_tanh(v, w_ref, b_ref, wstride):
    """3x3 conv + bias + tanh on the lane-flattened padded grid.

    v:      (Cin, Lin) f32  (row stride `wstride`, frames concatenated on lanes)
    w_ref:  (Cout, 9*Cin) bf16 ref, K index = (ky*3 + kx)*Cin + cin
    b_ref:  (Cout, 1) f32 ref
    Returns (Cout, Lin - 2*wstride - 2) f32.

    All 9 taps are fused into ONE MXU contraction of depth 9*Cin; the stacked-tap
    operand is 9 lane-shifted views concatenated along sublanes (Cin is a multiple
    of 8, so the concat is tile-aligned).  Frames ride along in the N dimension.
    """
    cin, lin = v.shape
    lout = lin - (2 * wstride + 2)
    taps = [v[:, ky * wstride + kx: ky * wstride + kx + lout]
            for ky in range(3) for kx in range(3)]
    xk = jnp.concatenate(taps, axis=0).astype(jnp.bfloat16)          # (9*Cin, Lout)
    acc = lax.dot_general(w_ref[...], xk,
                          dimension_numbers=(((1,), (0,)), ((), ())),
                          preferred_element_type=jnp.float32)        # (Cout, Lout)
    return jnp.tanh(acc + b_ref[...])


def _pool_matmul(g, s_ref):
    """AvgPool(2,2) + subsample + zero-ring placement as one 2-D bf16 matmul.

    g: (C, L_in) f32; s_ref: (L_in, L_out) bf16 constant (block-diagonal over frames).
    """
    return lax.dot_general(g.astype(jnp.bfloat16), s_ref[...],
                           dimension_numbers=(((1,), (0,)), ((), ())),
                           preferred_element_type=jnp.float32)


# ----------------------------------------------------------------------------
# The fused kernel: one TSM segment (n_frame frames) per grid step.
# ----------------------------------------------------------------------------
def _motion_kernel(x_ref, att_ref, m2f_ref,
                   w1_ref, b1_ref, w2_ref, b2_ref,
                   w3_ref, b3_ref, w4_ref, b4_ref,
                   s1_ref, s2_ref, o_ref,
                   *, sf1, sf2, ws1, ws2, fold1, fold2, fold3, fold4):
    x = x_ref[...]                                                   # (Cin_p, L0) f32

    # Stage 1: TSM+conv1('same')+tanh, TSM+conv2('valid')+tanh
    m1 = _conv3x3_tanh(_tsm_shift(x, sf1, fold1), w1_ref, b1_ref, ws1)
    m2 = _conv3x3_tanh(_tsm_shift(m1, sf1, fold2), w2_ref, b2_ref, ws1)

    # g1 = tanh((ones @ mask1) * M2) -- attention factor = column sums of mask1,
    # pre-laid out on M2's lane grid as a (1, L2) row, broadcast over sublanes.
    g1 = jnp.tanh(att_ref[...] * m2)

    # M3 = AvgPool2d(2,2)(g1); M4 = Dropout2d(M3) == M3 (inference).
    # Pool + subsample + zero ring for conv3 ('same') fused into one bf16 matmul.
    m4 = _pool_matmul(g1, s1_ref)                                    # (C2, L3)

    # Stage 2: TSM+conv3('same')+tanh, TSM+conv4('valid')+tanh
    m5 = _conv3x3_tanh(_tsm_shift(m4, sf2, fold3), w3_ref, b3_ref, ws2)
    m6 = _conv3x3_tanh(_tsm_shift(m5, sf2, fold4), w4_ref, b4_ref, ws2)

    # g2 = tanh(mask2 * M6); out = tanh(AvgPool2d(2,2)(g2))  (dropout = identity)
    g2 = jnp.tanh(m2f_ref[...] * m6)
    o_ref[...] = jnp.tanh(_pool_matmul(g2, s2_ref))                  # (C4, LO)


# ----------------------------------------------------------------------------
# Forward wrapper: layout plumbing + constant matrices, then one pallas_call.
# ----------------------------------------------------------------------------
def motion_model_ts_forward(params, inputs_nchw, mask1_nchw, mask2_nchw, n_frame=4):
    N, Cin, H, W = inputs_nchw.shape
    assert N % n_frame == 0, "batch must be a multiple of the TSM segment length"
    F = n_frame
    nseg = N // F
    f32 = jnp.float32

    C1 = params["b1"].shape[0]
    C2 = params["b2"].shape[0]
    C3 = params["b3"].shape[0]
    C4 = params["b4"].shape[0]

    # Spatial bookkeeping (stride-1 3x3 convs, AvgPool2d(2,2) floor).
    Hp1, Wp1 = H + 2, W + 2                  # conv1 'same' padded grid
    H1, W1 = H, W                            # conv1 output
    H2, W2 = H1 - 2, W1 - 2                  # conv2 ('valid') output
    H3, W3 = H2 // 2, W2 // 2                # pool1 output
    Hp2, Wp2 = H3 + 2, W3 + 2                # conv3 'same' padded grid
    H4, W4 = H3 - 2, W3 - 2                  # conv4 ('valid') output
    H5, W5 = H4 // 2, W4 // 2                # pool2 output

    P0, Q0, PO = Hp1 * Wp1, Hp2 * Wp2, H5 * W5   # per-frame flattened grid sizes
    smax1, smax2 = 2 * Wp1 + 2, 2 * Wp2 + 2      # largest tap offsets

    # Per-stage global lane lengths: frames concatenated at stride P0 / Q0; each conv
    # output is `smax` lanes shorter than its input so every tap slice stays in-bounds
    # and garbage positions are never consumed by valid outputs.
    L0 = F * P0                              # x
    L1 = L0 - smax1                          # M1
    L2 = L1 - smax1                          # M2 / g1 / att1
    L3 = F * Q0                              # M4 on the stage-2 padded grid
    L4 = L3 - smax2                          # M5
    L5 = L4 - smax2                          # M6 / g2 / mask2
    LO = F * PO                              # pooled output

    # Static "garbage never consumed" invariants (perf-review correctness note).
    assert (H1 - 1) * Wp1 + W1 <= P0 - smax1
    assert (H2 - 1) * Wp1 + W2 <= P0 - 2 * smax1
    assert (H3 - 1) * Wp2 + W3 <= Q0 - smax2
    assert (H4 - 1) * Wp2 + W4 <= Q0 - 2 * smax2
    assert H3 >= 3 and W3 >= 3 and H4 >= 2 and W4 >= 2

    # --- input: NCHW -> pad channels to a multiple of 8 -> zero ring -> (nseg,Cp,L0) ---
    Cin_p = ((Cin + 7) // 8) * 8
    x = inputs_nchw.astype(f32)
    if Cin_p > Cin:
        x = jnp.pad(x, ((0, 0), (0, Cin_p - Cin), (0, 0), (0, 0)))
    x = jnp.pad(x, ((0, 0), (0, 0), (1, 1), (1, 1)))
    x = x.reshape(N, Cin_p, P0)
    x = x.reshape(nseg, F, Cin_p, P0).transpose(0, 2, 1, 3).reshape(nseg, Cin_p, L0)

    # --- ones @ mask1 == column sums of mask1, laid out on M2's lane grid ---
    colsum = jnp.sum(mask1_nchw.astype(f32)[:, 0], axis=1)                 # (N, W2)
    row = jnp.pad(colsum, ((0, 0), (0, Wp1 - W2)))                         # (N, Wp1)
    attf = jnp.broadcast_to(row[:, None, :], (N, H2, Wp1)).reshape(N, H2 * Wp1)
    attf = jnp.pad(attf, ((0, 0), (0, P0 - H2 * Wp1)))                     # (N, P0)
    att = attf.reshape(nseg, F * P0)[:, :L2][:, None, :]                   # (nseg,1,L2)

    # --- mask2 laid out on M6's lane grid ---
    m2g = jnp.pad(mask2_nchw.astype(f32)[:, 0], ((0, 0), (0, 0), (0, Wp2 - W4)))
    m2g = m2g.reshape(N, H4 * Wp2)
    m2g = jnp.pad(m2g, ((0, 0), (0, Q0 - H4 * Wp2)))                       # (N, Q0)
    m2f = m2g.reshape(nseg, F * Q0)[:, :L5][:, None, :]                    # (nseg,1,L5)

    # --- constant pooling selection matrices (2x2 avg + subsample + zero ring), bf16 ---
    p = jnp.arange(L2)
    pf, pr = p // P0, p % P0
    pi, pj = pr // Wp1, pr % Wp1
    q = jnp.arange(L3)
    qf, qr = q // Q0, q % Q0
    oy, ox = qr // Wp2 - 1, qr % Wp2 - 1
    colv = (oy >= 0) & (oy < H3) & (ox >= 0) & (ox < W3)
    hit = ((pf[:, None] == qf[None, :]) & colv[None, :]
           & ((pi[:, None] == 2 * oy[None, :]) | (pi[:, None] == 2 * oy[None, :] + 1))
           & ((pj[:, None] == 2 * ox[None, :]) | (pj[:, None] == 2 * ox[None, :] + 1)))
    S1 = jnp.where(hit, 0.25, 0.0).astype(jnp.bfloat16)                    # (L2, L3)

    p = jnp.arange(L5)
    pf, pr = p // Q0, p % Q0
    pi, pj = pr // Wp2, pr % Wp2
    r = jnp.arange(LO)
    rf, rr = r // PO, r % PO
    ry, rx = rr // W5, rr % W5
    hit = ((pf[:, None] == rf[None, :])
           & ((pi[:, None] == 2 * ry[None, :]) | (pi[:, None] == 2 * ry[None, :] + 1))
           & ((pj[:, None] == 2 * rx[None, :]) | (pj[:, None] == 2 * rx[None, :] + 1)))
    S2 = jnp.where(hit, 0.25, 0.0).astype(jnp.bfloat16)                    # (L5, LO)

    # --- weights: (Cout, Cin, 3, 3) -> (Cout, 9*Cin) bf16 with K=(ky*3+kx)*Cin+c ---
    def prep_w(w, cin_pad=None):
        cout, cin = w.shape[0], w.shape[1]
        if cin_pad is not None and cin_pad > cin:
            w = jnp.pad(w, ((0, 0), (0, cin_pad - cin), (0, 0), (0, 0)))
            cin = cin_pad
        return jnp.transpose(w, (0, 2, 3, 1)).reshape(cout, 9 * cin).astype(jnp.bfloat16)

    def prep_b(b):
        return b.reshape(-1, 1).astype(f32)

    kernel = functools.partial(
        _motion_kernel, sf1=P0, sf2=Q0, ws1=Wp1, ws2=Wp2,
        fold1=Cin // 3, fold2=C1 // 3, fold3=C2 // 3, fold4=C3 // 3)

    out_flat = pl.pallas_call(
        kernel,
        out_shape=jax.ShapeDtypeStruct((nseg, C4, LO), f32),
        grid_spec=pltpu.PrefetchScalarGridSpec(
            num_scalar_prefetch=0,
            grid=(nseg,),
            in_specs=[
                pl.BlockSpec((None, Cin_p, L0), lambda s: (s, 0, 0)),
                pl.BlockSpec((None, 1, L2), lambda s: (s, 0, 0)),
                pl.BlockSpec((None, 1, L5), lambda s: (s, 0, 0)),
                pl.BlockSpec((C1, 9 * Cin_p), lambda s: (0, 0)),
                pl.BlockSpec((C1, 1), lambda s: (0, 0)),
                pl.BlockSpec((C2, 9 * C1), lambda s: (0, 0)),
                pl.BlockSpec((C2, 1), lambda s: (0, 0)),
                pl.BlockSpec((C3, 9 * C2), lambda s: (0, 0)),
                pl.BlockSpec((C3, 1), lambda s: (0, 0)),
                pl.BlockSpec((C4, 9 * C3), lambda s: (0, 0)),
                pl.BlockSpec((C4, 1), lambda s: (0, 0)),
                pl.BlockSpec((L2, L3), lambda s: (0, 0)),
                pl.BlockSpec((L5, LO), lambda s: (0, 0)),
            ],
            out_specs=pl.BlockSpec((None, C4, LO), lambda s: (s, 0, 0)),
        ),
        compiler_params=pltpu.CompilerParams(
            dimension_semantics=("parallel",),
            vmem_limit_bytes=8 * 1024 * 1024,   # real footprint is a few MiB
        ),
    )(x, att, m2f,
      prep_w(params["w1"], Cin_p), prep_b(params["b1"]),
      prep_w(params["w2"]), prep_b(params["b2"]),
      prep_w(params["w3"]), prep_b(params["b3"]),
      prep_w(params["w4"]), prep_b(params["b4"]),
      S1, S2)

    out = out_flat.reshape(nseg, C4, F, H5, W5)
    return out.transpose(0, 2, 1, 3, 4).reshape(N, C4, H5, W5)      # back to NCHW


# ----------------------------------------------------------------------------
# Pure-JAX reference (same semantics as the PyTorch module, inference mode).
# ----------------------------------------------------------------------------
def motion_model_ts_reference(params, inputs, mask1, mask2, n_frame=4):
    def tsm(x):
        n, c, h, w = x.shape
        fold = c // 3
        xr = x.reshape(n // n_frame, n_frame, c, h, w)
        zero = jnp.zeros_like(xr[:, :1])
        fwd = jnp.concatenate([xr[:, 1:], zero], axis=1)
        bwd = jnp.concatenate([zero, xr[:, :-1]], axis=1)
        out = jnp.concatenate([fwd[:, :, :fold], bwd[:, :, fold:2 * fold],
                               xr[:, :, 2 * fold:]], axis=2)
        return out.reshape(n, c, h, w)

    def conv(x, w, b, padding):
        y = lax.conv_general_dilated(x, w, (1, 1), padding,
                                     dimension_numbers=("NCHW", "OIHW", "NCHW"))
        return y + b[None, :, None, None]

    def pool2(x):
        n, c, h, w = x.shape
        x = x[:, :, :(h // 2) * 2, :(w // 2) * 2]
        return x.reshape(n, c, h // 2, 2, w // 2, 2).mean(axis=(3, 5))

    M1 = jnp.tanh(conv(tsm(inputs), params["w1"], params["b1"], "SAME"))
    M2 = jnp.tanh(conv(tsm(M1), params["w2"], params["b2"], "VALID"))
    att = jnp.sum(mask1, axis=2, keepdims=True)      # ones @ mask1 == column sums
    g1 = jnp.tanh(att * M2)
    M4 = pool2(g1)                                   # dropout == identity (eval)
    M5 = jnp.tanh(conv(tsm(M4), params["w3"], params["b3"], "SAME"))
    M6 = jnp.tanh(conv(tsm(M5), params["w4"], params["b4"], "VALID"))
    g2 = jnp.tanh(mask2 * M6)
    return jnp.tanh(pool2(g2))


# ----------------------------------------------------------------------------
# Parameter init (matches torch Conv2d default uniform init ranges).
# ----------------------------------------------------------------------------
def init_params(key, in_channels, out_channels):
    ks = jax.random.split(key, 8)

    def conv_init(kw, kb, cin, cout):
        scale = 1.0 / jnp.sqrt(cin * 9.0)
        w = jax.random.uniform(kw, (cout, cin, 3, 3), jnp.float32, -scale, scale)
        b = jax.random.uniform(kb, (cout,), jnp.float32, -scale, scale)
        return w, b

    w1, b1 = conv_init(ks[0], ks[1], in_channels, out_channels)
    w2, b2 = conv_init(ks[2], ks[3], out_channels, out_channels)
    w3, b3 = conv_init(ks[4], ks[5], out_channels, out_channels * 2)
    w4, b4 = conv_init(ks[6], ks[7], out_channels * 2, out_channels * 2)
    return {"w1": w1, "b1": b1, "w2": w2, "b2": b2,
            "w3": w3, "b3": b3, "w4": w4, "b4": b4}


if __name__ == "__main__":
    key = jax.random.PRNGKey(0)
    k_in, k_m1, k_m2, k_p = jax.random.split(key, 4)

    # 8 frames (2 TSM segments of 4), 3 input channels, 16x16 spatial.
    N, CIN, COUT, H, W = 8, 3, 8, 16, 16
    inputs = jax.random.normal(k_in, (N, CIN, H, W), jnp.float32)        # NCHW
    mask1 = jax.random.uniform(k_m1, (N, 1, H - 2, W - 2), jnp.float32)  # M2 spatial (14x14)
    mask2 = jax.random.uniform(k_m2, (N, 1, 5, 5), jnp.float32)          # M6 spatial (5x5)

    params = init_params(k_p, CIN, COUT)

    out = jax.jit(motion_model_ts_forward)(params, inputs, mask1, mask2)
    out = jax.block_until_ready(out)
    assert out.shape == (N, COUT * 2, 2, 2), out.shape
    assert bool(jnp.all(jnp.isfinite(out)))

    # End-to-end tolerance check of the bf16-MXU kernel against a pure-JAX reference.
    ref = motion_model_ts_reference(params, inputs, mask1, mask2)
    max_err = float(jnp.max(jnp.abs(out - ref)))
    assert max_err < 0.1, f"max |kernel - reference| = {max_err}"

    print("KERNEL_OK")
</pallas_src>

<mosaic_0001>
module attributes {stable_mosaic.version = 11 : i64} {
  func.func @_motion_kernel(%arg0: i32, %arg1: memref<1x8x1296xf32, #tpu.memory_space<vmem>>, %arg2: memref<1x1x1220xf32, #tpu.memory_space<vmem>>, %arg3: memref<1x1x284xf32, #tpu.memory_space<vmem>>, %arg4: memref<8x72xbf16, #tpu.memory_space<vmem>>, %arg5: memref<8x1xf32, #tpu.memory_space<vmem>>, %arg6: memref<8x72xbf16, #tpu.memory_space<vmem>>, %arg7: memref<8x1xf32, #tpu.memory_space<vmem>>, %arg8: memref<16x72xbf16, #tpu.memory_space<vmem>>, %arg9: memref<16x1xf32, #tpu.memory_space<vmem>>, %arg10: memref<16x144xbf16, #tpu.memory_space<vmem>>, %arg11: memref<16x1xf32, #tpu.memory_space<vmem>>, %arg12: memref<1220x324xbf16, #tpu.memory_space<vmem>>, %arg13: memref<284x16xbf16, #tpu.memory_space<vmem>>, %arg14: memref<1x16x16xf32, #tpu.memory_space<vmem>>) attributes {dimension_semantics = [#tpu.dimension_semantics<parallel>], iteration_bounds = array<i64: 2>, scalar_prefetch = 0 : i64, scratch_operands = 0 : i64, tpu.core_type = #tpu.core_type<tc>, window_params = [{transform_indices = @transform_0, window_bounds = array<i64: 1, 8, 1296>}, {transform_indices = @transform_1, window_bounds = array<i64: 1, 1, 1220>}, {transform_indices = @transform_2, window_bounds = array<i64: 1, 1, 284>}, {pipeline_mode = #tpu.pipeline_mode<synchronous>, transform_indices = @transform_3, window_bounds = array<i64: 8, 72>}, {pipeline_mode = #tpu.pipeline_mode<synchronous>, transform_indices = @transform_4, window_bounds = array<i64: 8, 1>}, {pipeline_mode = #tpu.pipeline_mode<synchronous>, transform_indices = @transform_5, window_bounds = array<i64: 8, 72>}, {pipeline_mode = #tpu.pipeline_mode<synchronous>, transform_indices = @transform_6, window_bounds = array<i64: 8, 1>}, {pipeline_mode = #tpu.pipeline_mode<synchronous>, transform_indices = @transform_7, window_bounds = array<i64: 16, 72>}, {pipeline_mode = #tpu.pipeline_mode<synchronous>, transform_indices = @transform_8, window_bounds = array<i64: 16, 1>}, {pipeline_mode = #tpu.pipeline_mode<synchronous>, transform_indices = @transform_9, window_bounds = array<i64: 16, 144>}, {pipeline_mode = #tpu.pipeline_mode<synchronous>, transform_indices = @transform_10, window_bounds = array<i64: 16, 1>}, {pipeline_mode = #tpu.pipeline_mode<synchronous>, transform_indices = @transform_11, window_bounds = array<i64: 1220, 324>}, {pipeline_mode = #tpu.pipeline_mode<synchronous>, transform_indices = @transform_12, window_bounds = array<i64: 284, 16>}, {transform_indices = @transform_13, window_bounds = array<i64: 1, 16, 16>}]} {
    %c0 = arith.constant 0 : index
    %c0_0 = arith.constant 0 : index
    %c0_1 = arith.constant 0 : index
    %0 = vector.load %arg1[%c0, %c0_0, %c0_1] : memref<1x8x1296xf32, #tpu.memory_space<vmem>>, vector<1x8x1296xf32>
    %1 = vector.shape_cast %0 : vector<1x8x1296xf32> to vector<8x1296xf32>
    %cst = arith.constant 0.000000e+00 : f32
    %2 = vector.broadcast %cst : f32 to vector<8x324xf32>
    %3 = vector.extract_strided_slice %1 {offsets = [0, 324], sizes = [8, 972], strides = [1, 1]} : vector<8x1296xf32> to vector<8x972xf32>
    %4 = tpu.concatenate %3, %2 in 1 : vector<8x972xf32>, vector<8x324xf32> -> vector<8x1296xf32>
    %5 = vector.extract_strided_slice %1 {offsets = [0, 0], sizes = [8, 972], strides = [1, 1]} : vector<8x1296xf32> to vector<8x972xf32>
    %6 = tpu.concatenate %2, %5 in 1 : vector<8x324xf32>, vector<8x972xf32> -> vector<8x1296xf32>
    %7 = tpu.iota {dimensions = array<i32: 0>} : vector<8x1296xi32>
    %c1_i32 = arith.constant 1 : i32
    %8 = vector.broadcast %c1_i32 : i32 to vector<8x1296xi32>
    %9 = arith.cmpi slt, %7, %8 : vector<8x1296xi32>
    %c2_i32 = arith.constant 2 : i32
    %10 = vector.broadcast %c2_i32 : i32 to vector<8x1296xi32>
    %11 = arith.cmpi slt, %7, %10 : vector<8x1296xi32>
    %12 = arith.select %11, %6, %1 : vector<8x1296xi1>, vector<8x1296xf32>
    %13 = arith.select %9, %4, %12 : vector<8x1296xi1>, vector<8x1296xf32>
    %14 = vector.extract_strided_slice %13 {offsets = [0, 0], sizes = [8, 1258], strides = [1, 1]} : vector<8x1296xf32> to vector<8x1258xf32>
    %15 = vector.extract_strided_slice %13 {offsets = [0, 1], sizes = [8, 1258], strides = [1, 1]} : vector<8x1296xf32> to vector<8x1258xf32>
    %16 = vector.extract_strided_slice %13 {offsets = [0, 2], sizes = [8, 1258], strides = [1, 1]} : vector<8x1296xf32> to vector<8x1258xf32>
    %17 = vector.extract_strided_slice %13 {offsets = [0, 18], sizes = [8, 1258], strides = [1, 1]} : vector<8x1296xf32> to vector<8x1258xf32>
    %18 = vector.extract_strided_slice %13 {offsets = [0, 19], sizes = [8, 1258], strides = [1, 1]} : vector<8x1296xf32> to vector<8x1258xf32>
    %19 = vector.extract_strided_slice %13 {offsets = [0, 20], sizes = [8, 1258], strides = [1, 1]} : vector<8x1296xf32> to vector<8x1258xf32>
    %20 = vector.extract_strided_slice %13 {offsets = [0, 36], sizes = [8, 1258], strides = [1, 1]} : vector<8x1296xf32> to vector<8x1258xf32>
    %21 = vector.extract_strided_slice %13 {offsets = [0, 37], sizes = [8, 1258], strides = [1, 1]} : vector<8x1296xf32> to vector<8x1258xf32>
    %22 = vector.extract_strided_slice %13 {offsets = [0, 38], sizes = [8, 1258], strides = [1, 1]} : vector<8x1296xf32> to vector<8x1258xf32>
    %23 = tpu.concatenate %14, %15, %16, %17, %18, %19, %20, %21, %22 in 0 : vector<8x1258xf32>, vector<8x1258xf32>, vector<8x1258xf32>, vector<8x1258xf32>, vector<8x1258xf32>, vector<8x1258xf32>, vector<8x1258xf32>, vector<8x1258xf32>, vector<8x1258xf32> -> vector<72x1258xf32>
    %24 = arith.truncf %23 : vector<72x1258xf32> to vector<72x1258xbf16>
    %c0_2 = arith.constant 0 : index
    %c0_3 = arith.constant 0 : index
    %25 = vector.load %arg4[%c0_2, %c0_3] : memref<8x72xbf16, #tpu.memory_space<vmem>>, vector<8x72xbf16>
    %cst_4 = arith.constant dense<0.000000e+00> : vector<8x1258xf32>
    %26 = tpu.matmul %25, %24, %cst_4 {dimension_numbers = #tpu.dot_dimension_numbers<[1], [0], [0], [1], [0, 0, 1, 1], [], []>} : vector<8x72xbf16>, vector<72x1258xbf16>, vector<8x1258xf32> -> vector<8x1258xf32>
    %c0_5 = arith.constant 0 : index
    %c0_6 = arith.constant 0 : index
    %27 = vector.load %arg5[%c0_5, %c0_6] : memref<8x1xf32, #tpu.memory_space<vmem>>, vector<8x1xf32>
    %28 = vector.broadcast %27 : vector<8x1xf32> to vector<8x1258xf32>
    %29 = arith.addf %26, %28 : vector<8x1258xf32>
    %30 = math.tanh %29 : vector<8x1258xf32>
    %cst_7 = arith.constant 0.000000e+00 : f32
    %31 = vector.broadcast %cst_7 : f32 to vector<8x324xf32>
    %32 = vector.extract_strided_slice %30 {offsets = [0, 324], sizes = [8, 934], strides = [1, 1]} : vector<8x1258xf32> to vector<8x934xf32>
    %33 = tpu.concatenate %32, %31 in 1 : vector<8x934xf32>, vector<8x324xf32> -> vector<8x1258xf32>
    %34 = vector.extract_strided_slice %30 {offsets = [0, 0], sizes = [8, 934], strides = [1, 1]} : vector<8x1258xf32> to vector<8x934xf32>
    %35 = tpu.concatenate %31, %34 in 1 : vector<8x324xf32>, vector<8x934xf32> -> vector<8x1258xf32>
    %36 = tpu.iota {dimensions = array<i32: 0>} : vector<8x1258xi32>
    %c2_i32_8 = arith.constant 2 : i32
    %37 = vector.broadcast %c2_i32_8 : i32 to vector<8x1258xi32>
    %38 = arith.cmpi slt, %36, %37 : vector<8x1258xi32>
    %c4_i32 = arith.constant 4 : i32
    %39 = vector.broadcast %c4_i32 : i32 to vector<8x1258xi32>
    %40 = arith.cmpi slt, %36, %39 : vector<8x1258xi32>
    %41 = arith.select %40, %35, %30 : vector<8x1258xi1>, vector<8x1258xf32>
    %42 = arith.select %38, %33, %41 : vector<8x1258xi1>, vector<8x1258xf32>
    %43 = vector.extract_strided_slice %42 {offsets = [0, 0], sizes = [8, 1220], strides = [1, 1]} : vector<8x1258xf32> to vector<8x1220xf32>
    %44 = vector.extract_strided_slice %42 {offsets = [0, 1], sizes = [8, 1220], strides = [1, 1]} : vector<8x1258xf32> to vector<8x1220xf32>
    %45 = vector.extract_strided_slice %42 {offsets = [0, 2], sizes = [8, 1220], strides = [1, 1]} : vector<8x1258xf32> to vector<8x1220xf32>
    %46 = vector.extract_strided_slice %42 {offsets = [0, 18], sizes = [8, 1220], strides = [1, 1]} : vector<8x1258xf32> to vector<8x1220xf32>
    %47 = vector.extract_strided_slice %42 {offsets = [0, 19], sizes = [8, 1220], strides = [1, 1]} : vector<8x1258xf32> to vector<8x1220xf32>
    %48 = vector.extract_strided_slice %42 {offsets = [0, 20], sizes = [8, 1220], strides = [1, 1]} : vector<8x1258xf32> to vector<8x1220xf32>
    %49 = vector.extract_strided_slice %42 {offsets = [0, 36], sizes = [8, 1220], strides = [1, 1]} : vector<8x1258xf32> to vector<8x1220xf32>
    %50 = vector.extract_strided_slice %42 {offsets = [0, 37], sizes = [8, 1220], strides = [1, 1]} : vector<8x1258xf32> to vector<8x1220xf32>
    %51 = vector.extract_strided_slice %42 {offsets = [0, 38], sizes = [8, 1220], strides = [1, 1]} : vector<8x1258xf32> to vector<8x1220xf32>
    %52 = tpu.concatenate %43, %44, %45, %46, %47, %48, %49, %50, %51 in 0 : vector<8x1220xf32>, vector<8x1220xf32>, vector<8x1220xf32>, vector<8x1220xf32>, vector<8x1220xf32>, vector<8x1220xf32>, vector<8x1220xf32>, vector<8x1220xf32>, vector<8x1220xf32> -> vector<72x1220xf32>
    %53 = arith.truncf %52 : vector<72x1220xf32> to vector<72x1220xbf16>
    %c0_9 = arith.constant 0 : index
    %c0_10 = arith.constant 0 : index
    %54 = vector.load %arg6[%c0_9, %c0_10] : memref<8x72xbf16, #tpu.memory_space<vmem>>, vector<8x72xbf16>
    %cst_11 = arith.constant dense<0.000000e+00> : vector<8x1220xf32>
    %55 = tpu.matmul %54, %53, %cst_11 {dimension_numbers = #tpu.dot_dimension_numbers<[1], [0], [0], [1], [0, 0, 1, 1], [], []>} : vector<8x72xbf16>, vector<72x1220xbf16>, vector<8x1220xf32> -> vector<8x1220xf32>
    %c0_12 = arith.constant 0 : index
    %c0_13 = arith.constant 0 : index
    %56 = vector.load %arg7[%c0_12, %c0_13] : memref<8x1xf32, #tpu.memory_space<vmem>>, vector<8x1xf32>
    %57 = vector.broadcast %56 : vector<8x1xf32> to vector<8x1220xf32>
    %58 = arith.addf %55, %57 : vector<8x1220xf32>
    %59 = math.tanh %58 : vector<8x1220xf32>
    %c0_14 = arith.constant 0 : index
    %c0_15 = arith.constant 0 : index
    %c0_16 = arith.constant 0 : index
    %60 = vector.load %arg2[%c0_14, %c0_15, %c0_16] : memref<1x1x1220xf32, #tpu.memory_space<vmem>>, vector<1x1x1220xf32>
    %61 = vector.shape_cast %60 : vector<1x1x1220xf32> to vector<1x1220xf32>
    %62 = vector.broadcast %61 : vector<1x1220xf32> to vector<8x1220xf32>
    %63 = arith.mulf %62, %59 : vector<8x1220xf32>
    %64 = math.tanh %63 : vector<8x1220xf32>
    %65 = arith.truncf %64 : vector<8x1220xf32> to vector<8x1220xbf16>
    %c0_17 = arith.constant 0 : index
    %c0_18 = arith.constant 0 : index
    %66 = vector.load %arg12[%c0_17, %c0_18] : memref<1220x324xbf16, #tpu.memory_space<vmem>>, vector<1220x324xbf16>
    %cst_19 = arith.constant dense<0.000000e+00> : vector<8x324xf32>
    %67 = tpu.matmul %65, %66, %cst_19 {dimension_numbers = #tpu.dot_dimension_numbers<[1], [0], [0], [1], [0, 0, 1, 1], [], []>} : vector<8x1220xbf16>, vector<1220x324xbf16>, vector<8x324xf32> -> vector<8x324xf32>
    %cst_20 = arith.constant 0.000000e+00 : f32
    %68 = vector.broadcast %cst_20 : f32 to vector<8x81xf32>
    %69 = vector.extract_strided_slice %67 {offsets = [0, 81], sizes = [8, 243], strides = [1, 1]} : vector<8x324xf32> to vector<8x243xf32>
    %70 = tpu.concatenate %69, %68 in 1 : vector<8x243xf32>, vector<8x81xf32> -> vector<8x324xf32>
    %71 = vector.extract_strided_slice %67 {offsets = [0, 0], sizes = [8, 243], strides = [1, 1]} : vector<8x324xf32> to vector<8x243xf32>
    %72 = tpu.concatenate %68, %71 in 1 : vector<8x81xf32>, vector<8x243xf32> -> vector<8x324xf32>
    %73 = tpu.iota {dimensions = array<i32: 0>} : vector<8x324xi32>
    %c2_i32_21 = arith.constant 2 : i32
    %74 = vector.broadcast %c2_i32_21 : i32 to vector<8x324xi32>
    %75 = arith.cmpi slt, %73, %74 : vector<8x324xi32>
    %c4_i32_22 = arith.constant 4 : i32
    %76 = vector.broadcast %c4_i32_22 : i32 to vector<8x324xi32>
    %77 = arith.cmpi slt, %73, %76 : vector<8x324xi32>
    %78 = arith.select %77, %72, %67 : vector<8x324xi1>, vector<8x324xf32>
    %79 = arith.select %75, %70, %78 : vector<8x324xi1>, vector<8x324xf32>
    %80 = vector.extract_strided_slice %79 {offsets = [0, 0], sizes = [8, 304], strides = [1, 1]} : vector<8x324xf32> to vector<8x304xf32>
    %81 = vector.extract_strided_slice %79 {offsets = [0, 1], sizes = [8, 304], strides = [1, 1]} : vector<8x324xf32> to vector<8x304xf32>
    %82 = vector.extract_strided_slice %79 {offsets = [0, 2], sizes = [8, 304], strides = [1, 1]} : vector<8x324xf32> to vector<8x304xf32>
    %83 = vector.extract_strided_slice %79 {offsets = [0, 9], sizes = [8, 304], strides = [1, 1]} : vector<8x324xf32> to vector<8x304xf32>
    %84 = vector.extract_strided_slice %79 {offsets = [0, 10], sizes = [8, 304], strides = [1, 1]} : vector<8x324xf32> to vector<8x304xf32>
    %85 = vector.extract_strided_slice %79 {offsets = [0, 11], sizes = [8, 304], strides = [1, 1]} : vector<8x324xf32> to vector<8x304xf32>
    %86 = vector.extract_strided_slice %79 {offsets = [0, 18], sizes = [8, 304], strides = [1, 1]} : vector<8x324xf32> to vector<8x304xf32>
    %87 = vector.extract_strided_slice %79 {offsets = [0, 19], sizes = [8, 304], strides = [1, 1]} : vector<8x324xf32> to vector<8x304xf32>
    %88 = vector.extract_strided_slice %79 {offsets = [0, 20], sizes = [8, 304], strides = [1, 1]} : vector<8x324xf32> to vector<8x304xf32>
    %89 = tpu.concatenate %80, %81, %82, %83, %84, %85, %86, %87, %88 in 0 : vector<8x304xf32>, vector<8x304xf32>, vector<8x304xf32>, vector<8x304xf32>, vector<8x304xf32>, vector<8x304xf32>, vector<8x304xf32>, vector<8x304xf32>, vector<8x304xf32> -> vector<72x304xf32>
    %90 = arith.truncf %89 : vector<72x304xf32> to vector<72x304xbf16>
    %c0_23 = arith.constant 0 : index
    %c0_24 = arith.constant 0 : index
    %91 = vector.load %arg8[%c0_23, %c0_24] : memref<16x72xbf16, #tpu.memory_space<vmem>>, vector<16x72xbf16>
    %cst_25 = arith.constant dense<0.000000e+00> : vector<16x304xf32>
    %92 = tpu.matmul %91, %90, %cst_25 {dimension_numbers = #tpu.dot_dimension_numbers<[1], [0], [0], [1], [0, 0, 1, 1], [], []>} : vector<16x72xbf16>, vector<72x304xbf16>, vector<16x304xf32> -> vector<16x304xf32>
    %c0_26 = arith.constant 0 : index
    %c0_27 = arith.constant 0 : index
    %93 = vector.load %arg9[%c0_26, %c0_27] : memref<16x1xf32, #tpu.memory_space<vmem>>, vector<16x1xf32>
    %94 = vector.broadcast %93 : vector<16x1xf32> to vector<16x304xf32>
    %95 = arith.addf %92, %94 : vector<16x304xf32>
    %96 = math.tanh %95 : vector<16x304xf32>
    %cst_28 = arith.constant 0.000000e+00 : f32
    %97 = vector.broadcast %cst_28 : f32 to vector<16x81xf32>
    %98 = vector.extract_strided_slice %96 {offsets = [0, 81], sizes = [16, 223], strides = [1, 1]} : vector<16x304xf32> to vector<16x223xf32>
    %99 = tpu.concatenate %98, %97 in 1 : vector<16x223xf32>, vector<16x81xf32> -> vector<16x304xf32>
    %100 = vector.extract_strided_slice %96 {offsets = [0, 0], sizes = [16, 223], strides = [1, 1]} : vector<16x304xf32> to vector<16x223xf32>
    %101 = tpu.concatenate %97, %100 in 1 : vector<16x81xf32>, vector<16x223xf32> -> vector<16x304xf32>
    %102 = tpu.iota {dimensions = array<i32: 0>} : vector<16x304xi32>
    %c5_i32 = arith.constant 5 : i32
    %103 = vector.broadcast %c5_i32 : i32 to vector<16x304xi32>
    %104 = arith.cmpi slt, %102, %103 : vector<16x304xi32>
    %c10_i32 = arith.constant 10 : i32
    %105 = vector.broadcast %c10_i32 : i32 to vector<16x304xi32>
    %106 = arith.cmpi slt, %102, %105 : vector<16x304xi32>
    %107 = arith.select %106, %101, %96 : vector<16x304xi1>, vector<16x304xf32>
    %108 = arith.select %104, %99, %107 : vector<16x304xi1>, vector<16x304xf32>
    %109 = vector.extract_strided_slice %108 {offsets = [0, 0], sizes = [16, 284], strides = [1, 1]} : vector<16x304xf32> to vector<16x284xf32>
    %110 = vector.extract_strided_slice %108 {offsets = [0, 1], sizes = [16, 284], strides = [1, 1]} : vector<16x304xf32> to vector<16x284xf32>
    %111 = vector.extract_strided_slice %108 {offsets = [0, 2], sizes = [16, 284], strides = [1, 1]} : vector<16x304xf32> to vector<16x284xf32>
    %112 = vector.extract_strided_slice %108 {offsets = [0, 9], sizes = [16, 284], strides = [1, 1]} : vector<16x304xf32> to vector<16x284xf32>
    %113 = vector.extract_strided_slice %108 {offsets = [0, 10], sizes = [16, 284], strides = [1, 1]} : vector<16x304xf32> to vector<16x284xf32>
    %114 = vector.extract_strided_slice %108 {offsets = [0, 11], sizes = [16, 284], strides = [1, 1]} : vector<16x304xf32> to vector<16x284xf32>
    %115 = vector.extract_strided_slice %108 {offsets = [0, 18], sizes = [16, 284], strides = [1, 1]} : vector<16x304xf32> to vector<16x284xf32>
    %116 = vector.extract_strided_slice %108 {offsets = [0, 19], sizes = [16, 284], strides = [1, 1]} : vector<16x304xf32> to vector<16x284xf32>
    %117 = vector.extract_strided_slice %108 {offsets = [0, 20], sizes = [16, 284], strides = [1, 1]} : vector<16x304xf32> to vector<16x284xf32>
    %118 = tpu.concatenate %109, %110, %111, %112, %113, %114, %115, %116, %117 in 0 : vector<16x284xf32>, vector<16x284xf32>, vector<16x284xf32>, vector<16x284xf32>, vector<16x284xf32>, vector<16x284xf32>, vector<16x284xf32>, vector<16x284xf32>, vector<16x284xf32> -> vector<144x284xf32>
    %119 = arith.truncf %118 : vector<144x284xf32> to vector<144x284xbf16>
    %c0_29 = arith.constant 0 : index
    %c0_30 = arith.constant 0 : index
    %120 = vector.load %arg10[%c0_29, %c0_30] : memref<16x144xbf16, #tpu.memory_space<vmem>>, vector<16x144xbf16>
    %cst_31 = arith.constant dense<0.000000e+00> : vector<16x284xf32>
    %121 = tpu.matmul %120, %119, %cst_31 {dimension_numbers = #tpu.dot_dimension_numbers<[1], [0], [0], [1], [0, 0, 1, 1], [], []>} : vector<16x144xbf16>, vector<144x284xbf16>, vector<16x284xf32> -> vector<16x284xf32>
    %c0_32 = arith.constant 0 : index
    %c0_33 = arith.constant 0 : index
    %122 = vector.load %arg11[%c0_32, %c0_33] : memref<16x1xf32, #tpu.memory_space<vmem>>, vector<16x1xf32>
    %123 = vector.broadcast %122 : vector<16x1xf32> to vector<16x284xf32>
    %124 = arith.addf %121, %123 : vector<16x284xf32>
    %125 = math.tanh %124 : vector<16x284xf32>
    %c0_34 = arith.constant 0 : index
    %c0_35 = arith.constant 0 : index
    %c0_36 = arith.constant 0 : index
    %126 = vector.load %arg3[%c0_34, %c0_35, %c0_36] : memref<1x1x284xf32, #tpu.memory_space<vmem>>, vector<1x1x284xf32>
    %127 = vector.shape_cast %126 : vector<1x1x284xf32> to vector<1x284xf32>
    %128 = vector.broadcast %127 : vector<1x284xf32> to vector<16x284xf32>
    %129 = arith.mulf %128, %125 : vector<16x284xf32>
    %130 = math.tanh %129 : vector<16x284xf32>
    %131 = arith.truncf %130 : vector<16x284xf32> to vector<16x284xbf16>
    %c0_37 = arith.constant 0 : index
    %c0_38 = arith.constant 0 : index
    %132 = vector.load %arg13[%c0_37, %c0_38] : memref<284x16xbf16, #tpu.memory_space<vmem>>, vector<284x16xbf16>
    %cst_39 = arith.constant dense<0.000000e+00> : vector<16x16xf32>
    %133 = tpu.matmul %131, %132, %cst_39 {dimension_numbers = #tpu.dot_dimension_numbers<[1], [0], [0], [1], [0, 0, 1, 1], [], []>} : vector<16x284xbf16>, vector<284x16xbf16>, vector<16x16xf32> -> vector<16x16xf32>
    %134 = math.tanh %133 : vector<16x16xf32>
    %c0_40 = arith.constant 0 : index
    %c0_41 = arith.constant 0 : index
    %c0_42 = arith.constant 0 : index
    %135 = vector.load %arg14[%c0_40, %c0_41, %c0_42] : memref<1x16x16xf32, #tpu.memory_space<vmem>>, vector<1x16x16xf32>
    %136 = vector.shape_cast %135 : vector<1x16x16xf32> to vector<16x16xf32>
    %137 = vector.shape_cast %134 : vector<16x16xf32> to vector<1x16x16xf32>
    tpu.vector_store %arg14[%c0_40, %c0_41, %c0_42], %137 {strides = array<i32>} : memref<1x16x16xf32, #tpu.memory_space<vmem>>, vector<1x16x16xf32>,
    return
  }
  func.func @transform_0(%arg0: i32) -> (i32, i32, i32) {
    %c0_i32 = arith.constant 0 : i32
    %c0_i32_0 = arith.constant 0 : i32
    %c0_i32_1 = arith.constant 0 : i32
    return %arg0, %c0_i32, %c0_i32_0 : i32, i32, i32
  }
  func.func @transform_1(%arg0: i32) -> (i32, i32, i32) {
    %c0_i32 = arith.constant 0 : i32
    %c0_i32_0 = arith.constant 0 : i32
    %c0_i32_1 = arith.constant 0 : i32
    return %arg0, %c0_i32, %c0_i32_0 : i32, i32, i32
  }
  func.func @transform_2(%arg0: i32) -> (i32, i32, i32) {
    %c0_i32 = arith.constant 0 : i32
    %c0_i32_0 = arith.constant 0 : i32
    %c0_i32_1 = arith.constant 0 : i32
    return %arg0, %c0_i32, %c0_i32_0 : i32, i32, i32
  }
  func.func @transform_3(%arg0: i32) -> (i32, i32) {
    %c0_i32 = arith.constant 0 : i32
    %c0_i32_0 = arith.constant 0 : i32
    %c0_i32_1 = arith.constant 0 : i32
    return %c0_i32, %c0_i32_0 : i32, i32
  }
  func.func @transform_4(%arg0: i32) -> (i32, i32) {
    %c0_i32 = arith.constant 0 : i32
    %c0_i32_0 = arith.constant 0 : i32
    %c0_i32_1 = arith.constant 0 : i32
    return %c0_i32, %c0_i32_0 : i32, i32
  }
  func.func @transform_5(%arg0: i32) -> (i32, i32) {
    %c0_i32 = arith.constant 0 : i32
    %c0_i32_0 = arith.constant 0 : i32
    %c0_i32_1 = arith.constant 0 : i32
    return %c0_i32, %c0_i32_0 : i32, i32
  }
  func.func @transform_6(%arg0: i32) -> (i32, i32) {
    %c0_i32 = arith.constant 0 : i32
    %c0_i32_0 = arith.constant 0 : i32
    %c0_i32_1 = arith.constant 0 : i32
    return %c0_i32, %c0_i32_0 : i32, i32
  }
  func.func @transform_7(%arg0: i32) -> (i32, i32) {
    %c0_i32 = arith.constant 0 : i32
    %c0_i32_0 = arith.constant 0 : i32
    %c0_i32_1 = arith.constant 0 : i32
    return %c0_i32, %c0_i32_0 : i32, i32
  }
  func.func @transform_8(%arg0: i32) -> (i32, i32) {
    %c0_i32 = arith.constant 0 : i32
    %c0_i32_0 = arith.constant 0 : i32
    %c0_i32_1 = arith.constant 0 : i32
    return %c0_i32, %c0_i32_0 : i32, i32
  }
  func.func @transform_9(%arg0: i32) -> (i32, i32) {
    %c0_i32 = arith.constant 0 : i32
    %c0_i32_0 = arith.constant 0 : i32
    %c0_i32_1 = arith.constant 0 : i32
    return %c0_i32, %c0_i32_0 : i32, i32
  }
  func.func @transform_10(%arg0: i32) -> (i32, i32) {
    %c0_i32 = arith.constant 0 : i32
    %c0_i32_0 = arith.constant 0 : i32
    %c0_i32_1 = arith.constant 0 : i32
    return %c0_i32, %c0_i32_0 : i32, i32
  }
  func.func @transform_11(%arg0: i32) -> (i32, i32) {
    %c0_i32 = arith.constant 0 : i32
    %c0_i32_0 = arith.constant 0 : i32
    %c0_i32_1 = arith.constant 0 : i32
    return %c0_i32, %c0_i32_0 : i32, i32
  }
  func.func @transform_12(%arg0: i32) -> (i32, i32) {
    %c0_i32 = arith.constant 0 : i32
    %c0_i32_0 = arith.constant 0 : i32
    %c0_i32_1 = arith.constant 0 : i32
    return %c0_i32, %c0_i32_0 : i32, i32
  }
  func.func @transform_13(%arg0: i32) -> (i32, i32, i32) {
    %c0_i32 = arith.constant 0 : i32
    %c0_i32_0 = arith.constant 0 : i32
    %c0_i32_1 = arith.constant 0 : i32
    return %arg0, %c0_i32, %c0_i32_0 : i32, i32, i32
  }
}

</mosaic_0001>

<llo_original>
// kernel: motion_model_ts_forward.1
$region0: #{motion_model_ts_forward.1}
  #allocation0 [shape = 'u32[]', space=smem, size = 0x4, offset = 0x4, fixed_abs, tag = 'smem constant byte address 0x4 - core index']
  #allocation1 [shape = 'u32[144,128]{1,0:T(1,128)}', space=vmem, size = 0x12000, scoped, tag = 'internal scratch']
  %s0 = inlined_call_operand.vmem [shape: f32[2,8,1296], index: 0, kind: input, shape index: {}]
  %s1 = inlined_call_operand.vmem [shape: f32[2,1,1220], index: 1, kind: input, shape index: {}]
  %s2 = inlined_call_operand.vmem [shape: f32[2,1,284], index: 2, kind: input, shape index: {}]
  %s3 = inlined_call_operand.vmem [shape: bf16[8,72], index: 3, kind: input, shape index: {}]
  %s4 = inlined_call_operand.vmem [shape: f32[8,1], index: 4, kind: input, shape index: {}]
  %s5 = inlined_call_operand.vmem [shape: bf16[8,72], index: 5, kind: input, shape index: {}]
  %s6 = inlined_call_operand.vmem [shape: f32[8,1], index: 6, kind: input, shape index: {}]
  %s7 = inlined_call_operand.vmem [shape: bf16[16,72], index: 7, kind: input, shape index: {}]
  %s8 = inlined_call_operand.vmem [shape: f32[16,1], index: 8, kind: input, shape index: {}]
  %s9 = inlined_call_operand.vmem [shape: bf16[16,144], index: 9, kind: input, shape index: {}]
  %s10 = inlined_call_operand.vmem [shape: f32[16,1], index: 10, kind: input, shape index: {}]
  %s11 = inlined_call_operand.vmem [shape: bf16[1220,324], index: 11, kind: input, shape index: {}]
  %s12 = inlined_call_operand.vmem [shape: bf16[284,16], index: 12, kind: input, shape index: {}]
  %s13 = inlined_call_operand.vmem [shape: f32[2,16,16], index: 13, kind: output, shape index: {}]
  %s14 = sld [smem:[#allocation0]]
  $region85: #{motion_model_ts_forward.1} parent=0
    _
  %s16 = ssub.s32 1, %s14
  %s17 = scalar_select 0, %s16, %s14
  loop: start=0, step=1, limit=4
  $region2: #{motion_model_ts_forward.1} parent=0 // loop_pre_header
    _
  $region3: #{motion_model_ts_forward.1} parent=0 // loop_header
    %s19 = sphi 0, %s23
    %p20 = scmp.ge.s32.totalorder %s19, 4
    %s29 = sphi 0, %s31
    %s32 = sphi 0, %s29
    %s33 = sphi 0, %s32
    %s49 = sphi 0, %s33
    %s55 = sphi 0, %s57
    %s58 = sphi 0, %s55
    %s59 = sphi 0, %s58
    %s75 = sphi 0, %s59
    %s81 = sphi 0, %s83
    %s84 = sphi 0, %s81
    %s85 = sphi 0, %s84
    %s101 = sphi 0, %s85
    %s105 = sphi 0, %s105
    %s107 = sphi 0, %s105
    %s108 = sphi 0, %s107
    %s122 = sphi 0, %s108
    %s126 = sphi 0, %s126
    %s128 = sphi 0, %s126
    %s129 = sphi 0, %s128
    %s143 = sphi 0, %s129
    %s147 = sphi 0, %s147
    %s149 = sphi 0, %s147
    %s150 = sphi 0, %s149
    %s164 = sphi 0, %s150
    %s168 = sphi 0, %s168
    %s170 = sphi 0, %s168
    %s171 = sphi 0, %s170
    %s185 = sphi 0, %s171
    %s189 = sphi 0, %s189
    %s191 = sphi 0, %s189
    %s192 = sphi 0, %s191
    %s206 = sphi 0, %s192
    %s210 = sphi 0, %s210
    %s212 = sphi 0, %s210
    %s213 = sphi 0, %s212
    %s227 = sphi 0, %s213
    %s231 = sphi 0, %s231
    %s233 = sphi 0, %s231
    %s234 = sphi 0, %s233
    %s248 = sphi 0, %s234
    %s252 = sphi 0, %s252
    %s254 = sphi 0, %s252
    %s255 = sphi 0, %s254
    %s269 = sphi 0, %s255
    %s273 = sphi 0, %s273
    %s275 = sphi 0, %s273
    %s276 = sphi 0, %s275
    %s290 = sphi 0, %s276
    %s294 = sphi 0, %s294
    %s296 = sphi 0, %s294
    %s297 = sphi 0, %s296
    %s311 = sphi 0, %s297
    %s317 = sphi 0, %s319
    %s320 = sphi 0, %s317
    %s321 = sphi 0, %s320
    %s337 = sphi 0, %s321
  $region4: #{motion_model_ts_forward.1} parent=0 // loop_header_branch
    %22 = sbr.rel (%p20) target = $region8
  $region5: #{motion_model_ts_forward.1} parent=0 // loop_body
    %s24 = ssub.s32 %s19, 1
    %s25 = ssub.s32 %s19, 2
    %s26 = sadd.s32 %s19, 1
    %s27 = ssub.s32 %s19, %s26
    %p28 = scmp.eq.s32.totalorder %s27, 0
    %s30 = sadd.s32 %s29, 1
    %s31 = scalar_select %p28, %s29, %s30
    %p34 = pneg %p28
    %p35 = scmp.eq.s32.totalorder %s19, 1
    %p36 = por %p34, %p35
    %p37 = scmp.ne.s32.totalorder %s29, %s32
    %p38 = scmp.eq.s32.totalorder %s19, 0
    %p39 = por %p37, %p38
    %p40 = scmp.ne.s32.totalorder %s29, %s32
    %p41 = scmp.eq.s32.totalorder %s24, 1
    %p42 = por %p40, %p41
    %p43 = scmp.ne.s32.totalorder %s32, %s33
    %p44 = scmp.eq.s32.totalorder %s24, 0
    %p45 = por %p43, %p44
    %p46 = scmp.ne.s32.totalorder %s32, %s33
    %p47 = scmp.eq.s32.totalorder %s25, 1
    %p48 = por %p46, %p47
    %p50 = scmp.ne.s32.totalorder %s33, %s49
    %p51 = scmp.eq.s32.totalorder %s25, 0
    %p52 = por %p50, %p51
    %s53 = ssub.s32 %s19, %s26
    %p54 = scmp.eq.s32.totalorder %s53, 0
    %s56 = sadd.s32 %s55, 1
    %s57 = scalar_select %p54, %s55, %s56
    %p60 = pneg %p54
    %p61 = scmp.eq.s32.totalorder %s19, 1
    %p62 = por %p60, %p61
    %p63 = scmp.ne.s32.totalorder %s55, %s58
    %p64 = scmp.eq.s32.totalorder %s19, 0
    %p65 = por %p63, %p64
    %p66 = scmp.ne.s32.totalorder %s55, %s58
    %p67 = scmp.eq.s32.totalorder %s24, 1
    %p68 = por %p66, %p67
    %p69 = scmp.ne.s32.totalorder %s58, %s59
    %p70 = scmp.eq.s32.totalorder %s24, 0
    %p71 = por %p69, %p70
    %p72 = scmp.ne.s32.totalorder %s58, %s59
    %p73 = scmp.eq.s32.totalorder %s25, 1
    %p74 = por %p72, %p73
    %p76 = scmp.ne.s32.totalorder %s59, %s75
    %p77 = scmp.eq.s32.totalorder %s25, 0
    %p78 = por %p76, %p77
    %s79 = ssub.s32 %s19, %s26
    %p80 = scmp.eq.s32.totalorder %s79, 0
    %s82 = sadd.s32 %s81, 1
    %s83 = scalar_select %p80, %s81, %s82
    %p86 = pneg %p80
    %p87 = scmp.eq.s32.totalorder %s19, 1
    %p88 = por %p86, %p87
    %p89 = scmp.ne.s32.totalorder %s81, %s84
    %p90 = scmp.eq.s32.totalorder %s19, 0
    %p91 = por %p89, %p90
    %p92 = scmp.ne.s32.totalorder %s81, %s84
    %p93 = scmp.eq.s32.totalorder %s24, 1
    %p94 = por %p92, %p93
    %p95 = scmp.ne.s32.totalorder %s84, %s85
    %p96 = scmp.eq.s32.totalorder %s24, 0
    %p97 = por %p95, %p96
    %p98 = scmp.ne.s32.totalorder %s84, %s85
    %p99 = scmp.eq.s32.totalorder %s25, 1
    %p100 = por %p98, %p99
    %p102 = scmp.ne.s32.totalorder %s85, %s101
    %p103 = scmp.eq.s32.totalorder %s25, 0
    %p104 = por %p102, %p103
    %s106 = sadd.s32 %s105, 1
    %p109 = scmp.eq.s32.totalorder %s19, 1
    %p110 = scmp.ne.s32.totalorder %s105, %s107
    %p111 = scmp.eq.s32.totalorder %s19, 0
    %p112 = por %p110, %p111
    %p113 = scmp.ne.s32.totalorder %s105, %s107
    %p114 = scmp.eq.s32.totalorder %s24, 1
    %p115 = por %p113, %p114
    %p116 = scmp.ne.s32.totalorder %s107, %s108
    %p117 = scmp.eq.s32.totalorder %s24, 0
    %p118 = por %p116, %p117
    %p119 = scmp.ne.s32.totalorder %s107, %s108
    %p120 = scmp.eq.s32.totalorder %s25, 1
    %p121 = por %p119, %p120
    %p123 = scmp.ne.s32.totalorder %s108, %s122
    %p124 = scmp.eq.s32.totalorder %s25, 0
    %p125 = por %p123, %p124
    %s127 = sadd.s32 %s126, 1
    %p130 = scmp.eq.s32.totalorder %s19, 1
    %p131 = scmp.ne.s32.totalorder %s126, %s128
    %p132 = scmp.eq.s32.totalorder %s19, 0
    %p133 = por %p131, %p132
    %p134 = scmp.ne.s32.totalorder %s126, %s128
    %p135 = scmp.eq.s32.totalorder %s24, 1
    %p136 = por %p134, %p135
    %p137 = scmp.ne.s32.totalorder %s128, %s129
    %p138 = scmp.eq.s32.totalorder %s24, 0
    %p139 = por %p137, %p138
    %p140 = scmp.ne.s32.totalorder %s128, %s129
    %p141 = scmp.eq.s32.totalorder %s25, 1
    %p142 = por %p140, %p141
    %p144 = scmp.ne.s32.totalorder %s129, %s143
    %p145 = scmp.eq.s32.totalorder %s25, 0
    %p146 = por %p144, %p145
    %s148 = sadd.s32 %s147, 1
    %p151 = scmp.eq.s32.totalorder %s19, 1
    %p152 = scmp.ne.s32.totalorder %s147, %s149
    %p153 = scmp.eq.s32.totalorder %s19, 0
    %p154 = por %p152, %p153
    %p155 = scmp.ne.s32.totalorder %s147, %s149
    %p156 = scmp.eq.s32.totalorder %s24, 1
    %p157 = por %p155, %p156
    %p158 = scmp.ne.s32.totalorder %s149, %s150
    %p159 = scmp.eq.s32.totalorder %s24, 0
    %p160 = por %p158, %p159
    %p161 = scmp.ne.s32.totalorder %s149, %s150
    %p162 = scmp.eq.s32.totalorder %s25, 1
    %p163 = por %p161, %p162
    %p165 = scmp.ne.s32.totalorder %s150, %s164
    %p166 = scmp.eq.s32.totalorder %s25, 0
    %p167 = por %p165, %p166
    %s169 = sadd.s32 %s168, 1
    %p172 = scmp.eq.s32.totalorder %s19, 1
    %p173 = scmp.ne.s32.totalorder %s168, %s170
    %p174 = scmp.eq.s32.totalorder %s19, 0
    %p175 = por %p173, %p174
    %p176 = scmp.ne.s32.totalorder %s168, %s170
    %p177 = scmp.eq.s32.totalorder %s24, 1
    %p178 = por %p176, %p177
    %p179 = scmp.ne.s32.totalorder %s170, %s171
    %p180 = scmp.eq.s32.totalorder %s24, 0
    %p181 = por %p179, %p180
    %p182 = scmp.ne.s32.totalorder %s170, %s171
    %p183 = scmp.eq.s32.totalorder %s25, 1
    %p184 = por %p182, %p183
    %p186 = scmp.ne.s32.totalorder %s171, %s185
    %p187 = scmp.eq.s32.totalorder %s25, 0
    %p188 = por %p186, %p187
    %s190 = sadd.s32 %s189, 1
    %p193 = scmp.eq.s32.totalorder %s19, 1
    %p194 = scmp.ne.s32.totalorder %s189, %s191
    %p195 = scmp.eq.s32.totalorder %s19, 0
    %p196 = por %p194, %p195
    %p197 = scmp.ne.s32.totalorder %s189, %s191
    %p198 = scmp.eq.s32.totalorder %s24, 1
    %p199 = por %p197, %p198
    %p200 = scmp.ne.s32.totalorder %s191, %s192
    %p201 = scmp.eq.s32.totalorder %s24, 0
    %p202 = por %p200, %p201
    %p203 = scmp.ne.s32.totalorder %s191, %s192
    %p204 = scmp.eq.s32.totalorder %s25, 1
    %p205 = por %p203, %p204
    %p207 = scmp.ne.s32.totalorder %s192, %s206
    %p208 = scmp.eq.s32.totalorder %s25, 0
    %p209 = por %p207, %p208
    %s211 = sadd.s32 %s210, 1
    %p214 = scmp.eq.s32.totalorder %s19, 1
    %p215 = scmp.ne.s32.totalorder %s210, %s212
    %p216 = scmp.eq.s32.totalorder %s19, 0
    %p217 = por %p215, %p216
    %p218 = scmp.ne.s32.totalorder %s210, %s212
    %p219 = scmp.eq.s32.totalorder %s24, 1
    %p220 = por %p218, %p219
    %p221 = scmp.ne.s32.totalorder %s212, %s213
    %p222 = scmp.eq.s32.totalorder %s24, 0
    %p223 = por %p221, %p222
    %p224 = scmp.ne.s32.totalorder %s212, %s213
    %p225 = scmp.eq.s32.totalorder %s25, 1
    %p226 = por %p224, %p225
    %p228 = scmp.ne.s32.totalorder %s213, %s227
    %p229 = scmp.eq.s32.totalorder %s25, 0
    %p230 = por %p228, %p229
    %s232 = sadd.s32 %s231, 1
    %p235 = scmp.eq.s32.totalorder %s19, 1
    %p236 = scmp.ne.s32.totalorder %s231, %s233
    %p237 = scmp.eq.s32.totalorder %s19, 0
    %p238 = por %p236, %p237
    %p239 = scmp.ne.s32.totalorder %s231, %s233
    %p240 = scmp.eq.s32.totalorder %s24, 1
    %p241 = por %p239, %p240
    %p242 = scmp.ne.s32.totalorder %s233, %s234
    %p243 = scmp.eq.s32.totalorder %s24, 0
    %p244 = por %p242, %p243
    %p245 = scmp.ne.s32.totalorder %s233, %s234
    %p246 = scmp.eq.s32.totalorder %s25, 1
    %p247 = por %p245, %p246
    %p249 = scmp.ne.s32.totalorder %s234, %s248
    %p250 = scmp.eq.s32.totalorder %s25, 0
    %p251 = por %p249, %p250
    %s253 = sadd.s32 %s252, 1
    %p256 = scmp.eq.s32.totalorder %s19, 1
    %p257 = scmp.ne.s32.totalorder %s252, %s254
    %p258 = scmp.eq.s32.totalorder %s19, 0
    %p259 = por %p257, %p258
    %p260 = scmp.ne.s32.totalorder %s252, %s254
    %p261 = scmp.eq.s32.totalorder %s24, 1
    %p262 = por %p260, %p261
    %p263 = scmp.ne.s32.totalorder %s254, %s255
    %p264 = scmp.eq.s32.totalorder %s24, 0
    %p265 = por %p263, %p264
    %p266 = scmp.ne.s32.totalorder %s254, %s255
    %p267 = scmp.eq.s32.totalorder %s25, 1
    %p268 = por %p266, %p267
    %p270 = scmp.ne.s32.totalorder %s255, %s269
    %p271 = scmp.eq.s32.totalorder %s25, 0
    %p272 = por %p270, %p271
    %s274 = sadd.s32 %s273, 1
    %p277 = scmp.eq.s32.totalorder %s19, 1
    %p278 = scmp.ne.s32.totalorder %s273, %s275
    %p279 = scmp.eq.s32.totalorder %s19, 0
    %p280 = por %p278, %p279
    %p281 = scmp.ne.s32.totalorder %s273, %s275
    %p282 = scmp.eq.s32.totalorder %s24, 1
    %p283 = por %p281, %p282
    %p284 = scmp.ne.s32.totalorder %s275, %s276
    %p285 = scmp.eq.s32.totalorder %s24, 0
    %p286 = por %p284, %p285
    %p287 = scmp.ne.s32.totalorder %s275, %s276
    %p288 = scmp.eq.s32.totalorder %s25, 1
    %p289 = por %p287, %p288
    %p291 = scmp.ne.s32.totalorder %s276, %s290
    %p292 = scmp.eq.s32.totalorder %s25, 0
    %p293 = por %p291, %p292
    %s295 = sadd.s32 %s294, 1
    %p298 = scmp.eq.s32.totalorder %s19, 1
    %p299 = scmp.ne.s32.totalorder %s294, %s296
    %p300 = scmp.eq.s32.totalorder %s19, 0
    %p301 = por %p299, %p300
    %p302 = scmp.ne.s32.totalorder %s294, %s296
    %p303 = scmp.eq.s32.totalorder %s24, 1
    %p304 = por %p302, %p303
    %p305 = scmp.ne.s32.totalorder %s296, %s297
    %p306 = scmp.eq.s32.totalorder %s24, 0
    %p307 = por %p305, %p306
    %p308 = scmp.ne.s32.totalorder %s296, %s297
    %p309 = scmp.eq.s32.totalorder %s25, 1
    %p310 = por %p308, %p309
    %p312 = scmp.ne.s32.totalorder %s297, %s311
    %p313 = scmp.eq.s32.totalorder %s25, 0
    %p314 = por %p312, %p313
    %s315 = ssub.s32 %s19, %s26
    %p316 = scmp.eq.s32.totalorder %s315, 0
    %s318 = sadd.s32 %s317, 1
    %s319 = scalar_select %p316, %s317, %s318
    %p322 = pneg %p316
    %p323 = scmp.eq.s32.totalorder %s19, 1
    %p324 = por %p322, %p323
    %p325 = scmp.ne.s32.totalorder %s317, %s320
    %p326 = scmp.eq.s32.totalorder %s19, 0
    %p327 = por %p325, %p326
    %p328 = scmp.ne.s32.totalorder %s317, %s320
    %p329 = scmp.eq.s32.totalorder %s24, 1
    %p330 = por %p328, %p329
    %p331 = scmp.ne.s32.totalorder %s320, %s321
    %p332 = scmp.eq.s32.totalorder %s24, 0
    %p333 = por %p331, %p332
    %p334 = scmp.ne.s32.totalorder %s320, %s321
    %p335 = scmp.eq.s32.totalorder %s25, 1
    %p336 = por %p334, %p335
    %p338 = scmp.ne.s32.totalorder %s321, %s337
    %p339 = scmp.eq.s32.totalorder %s25, 0
    %p340 = por %p338, %p339
    %p341 = scmp.le.s32.totalorder 1, %s19
    %p342 = scmp.lt.s32.totalorder %s19, 3
    %p343 = pnand %p341, %p342
    %p344 = pneg %p343
    // Predicated region
    $region9: #{motion_model_ts_forward.1} parent=5 // pred_check
      _
    $region10: #{motion_model_ts_forward.1} parent=5 // pred_check_branch
      %346 = sbr.rel (%p343) target = $region12
    $region11: #{motion_model_ts_forward.1} parent=5 // pred_region
      %s347 = ssub.s32 %s19, 1
      // Predicated region
      $region13: #{motion_model_ts_forward.1} parent=11 // pred_check
        %p348 = pneg %p118
      $region14: #{motion_model_ts_forward.1} parent=11 // pred_check_branch
        %350 = sbr.rel (%p348) target = $region16
      $region15: #{motion_model_ts_forward.1} parent=11 // pred_region
        _
      $region16: #{motion_model_ts_forward.1} parent=11 // pred_fallthru
        _
      // Predicated region
      $region17: #{motion_model_ts_forward.1} parent=11 // pred_check
        %p351 = pneg %p139
      $region18: #{motion_model_ts_forward.1} parent=11 // pred_check_branch
        %353 = sbr.rel (%p351) target = $region20
      $region19: #{motion_model_ts_forward.1} parent=11 // pred_region
        _
      $region20: #{motion_model_ts_forward.1} parent=11 // pred_fallthru
        _
      // Predicated region
      $region21: #{motion_model_ts_forward.1} parent=11 // pred_check
        %p354 = pneg %p160
      $region22: #{motion_model_ts_forward.1} parent=11 // pred_check_branch
        %356 = sbr.rel (%p354) target = $region24
      $region23: #{motion_model_ts_forward.1} parent=11 // pred_region
        _
      $region24: #{motion_model_ts_forward.1} parent=11 // pred_fallthru
        _
      // Predicated region
      $region25: #{motion_model_ts_forward.1} parent=11 // pred_check
        %p357 = pneg %p181
      $region26: #{motion_model_ts_forward.1} parent=11 // pred_check_branch
        %359 = sbr.rel (%p357) target = $region28
      $region27: #{motion_model_ts_forward.1} parent=11 // pred_region
        _
      $region28: #{motion_model_ts_forward.1} parent=11 // pred_fallthru
        _
      // Predicated region
      $region29: #{motion_model_ts_forward.1} parent=11 // pred_check
        %p360 = pneg %p202
      $region30: #{motion_model_ts_forward.1} parent=11 // pred_check_branch
        %362 = sbr.rel (%p360) target = $region32
      $region31: #{motion_model_ts_forward.1} parent=11 // pred_region
        _
      $region32: #{motion_model_ts_forward.1} parent=11 // pred_fallthru
        _
      // Predicated region
      $region33: #{motion_model_ts_forward.1} parent=11 // pred_check
        %p363 = pneg %p223
      $region34: #{motion_model_ts_forward.1} parent=11 // pred_check_branch
        %365 = sbr.rel (%p363) target = $region36
      $region35: #{motion_model_ts_forward.1} parent=11 // pred_region
        _
      $region36: #{motion_model_ts_forward.1} parent=11 // pred_fallthru
        _
      // Predicated region
      $region37: #{motion_model_ts_forward.1} parent=11 // pred_check
        %p366 = pneg %p244
      $region38: #{motion_model_ts_forward.1} parent=11 // pred_check_branch
        %368 = sbr.rel (%p366) target = $region40
      $region39: #{motion_model_ts_forward.1} parent=11 // pred_region
        _
      $region40: #{motion_model_ts_forward.1} parent=11 // pred_fallthru
        _
      // Predicated region
      $region41: #{motion_model_ts_forward.1} parent=11 // pred_check
        %p369 = pneg %p265
      $region42: #{motion_model_ts_forward.1} parent=11 // pred_check_branch
        %371 = sbr.rel (%p369) target = $region44
      $region43: #{motion_model_ts_forward.1} parent=11 // pred_region
        _
      $region44: #{motion_model_ts_forward.1} parent=11 // pred_fallthru
        _
      // Predicated region
      $region45: #{motion_model_ts_forward.1} parent=11 // pred_check
        %p372 = pneg %p286
      $region46: #{motion_model_ts_forward.1} parent=11 // pred_check_branch
        %374 = sbr.rel (%p372) target = $region48
      $region47: #{motion_model_ts_forward.1} parent=11 // pred_region
        _
      $region48: #{motion_model_ts_forward.1} parent=11 // pred_fallthru
        _
      // Predicated region
      $region49: #{motion_model_ts_forward.1} parent=11 // pred_check
        %p375 = pneg %p307
      $region50: #{motion_model_ts_forward.1} parent=11 // pred_check_branch
        %377 = sbr.rel (%p375) target = $region52
      $region51: #{motion_model_ts_forward.1} parent=11 // pred_region
        _
      $region52: #{motion_model_ts_forward.1} parent=11 // pred_fallthru
        _
    $region12: #{motion_model_ts_forward.1} parent=5 // pred_fallthru
      _
    %p378 = scmp.lt.s32.totalorder %s19, 2
    // Predicated region
    $region53: #{motion_model_ts_forward.1} parent=5 // pred_check
      %p379 = pneg %p378
    $region54: #{motion_model_ts_forward.1} parent=5 // pred_check_branch
      %381 = sbr.rel (%p379) target = $region56
    $region55: #{motion_model_ts_forward.1} parent=5 // pred_region
      // Predicated region
      $region57: #{motion_model_ts_forward.1} parent=55 // pred_check
        %p382 = pneg %p39
      $region58: #{motion_model_ts_forward.1} parent=55 // pred_check_branch
        %384 = sbr.rel (%p382) target = $region60
      $region59: #{motion_model_ts_forward.1} parent=55 // pred_region
        %p385 = scmp.lt.s32.totalorder %s19, 1
        %s386 = scalar_select %p385, %s19, 1
        %s387 = smul.addr %s386, 11
        %s388 = smul.addr %s387, 8
        %s389 = scalar_lea.vmem %s0, %s388
      $region60: #{motion_model_ts_forward.1} parent=55 // pred_fallthru
        _
      // Predicated region
      $region61: #{motion_model_ts_forward.1} parent=55 // pred_check
        %p390 = pneg %p65
      $region62: #{motion_model_ts_forward.1} parent=55 // pred_check_branch
        %392 = sbr.rel (%p390) target = $region64
      $region63: #{motion_model_ts_forward.1} parent=55 // pred_region
        %p393 = scmp.lt.s32.totalorder %s19, 1
        %s394 = scalar_select %p393, %s19, 1
        %s395 = smul.addr %s394, 10
        %s396 = scalar_lea.vmem %s1, %s395
      $region64: #{motion_model_ts_forward.1} parent=55 // pred_fallthru
        _
      // Predicated region
      $region65: #{motion_model_ts_forward.1} parent=55 // pred_check
        %p397 = pneg %p91
      $region66: #{motion_model_ts_forward.1} parent=55 // pred_check_branch
        %399 = sbr.rel (%p397) target = $region68
      $region67: #{motion_model_ts_forward.1} parent=55 // pred_region
        %p400 = scmp.lt.s32.totalorder %s19, 1
        %s401 = scalar_select %p400, %s19, 1
        %s402 = smul.addr %s401, 3
        %s403 = scalar_lea.vmem %s2, %s402
      $region68: #{motion_model_ts_forward.1} parent=55 // pred_fallthru
        _
    $region56: #{motion_model_ts_forward.1} parent=5 // pred_fallthru
      _
    %p404 = scmp.le.s32.totalorder 1, %s19
    %p405 = scmp.lt.s32.totalorder %s19, 3
    %p406 = pnand %p404, %p405
    %p407 = pneg %p406
    // Predicated region
    $region69: #{motion_model_ts_forward.1} parent=5 // pred_check
      _
    $region70: #{motion_model_ts_forward.1} parent=5 // pred_check_branch
      %409 = sbr.rel (%p406) target = $region72
    $region71: #{motion_model_ts_forward.1} parent=5 // pred_region
      %s410 = ssub.s32 %s19, 1
      %p411 = scmp.lt.s32.totalorder %s24, 1
      %s412 = scalar_select %p411, %s24, 1
      %s413 = smul.addr %s412, 11
      %s414 = smul.addr %s413, 8
      %s415 = scalar_lea.vmem %s0, %s414
      %p416 = pneg %p45
      %p417 = pneg %p42
      %p418 = scmp.lt.s32.totalorder %s24, 1
      %s419 = scalar_select %p418, %s24, 1
      %s420 = smul.addr %s419, 10
      %s421 = scalar_lea.vmem %s1, %s420
      %p422 = pneg %p71
      %p423 = pneg %p68
      %p424 = scmp.lt.s32.totalorder %s24, 1
      %s425 = scalar_select %p424, %s24, 1
      %s426 = smul.addr %s425, 3
      %s427 = scalar_lea.vmem %s2, %s426
      %p428 = pneg %p97
      %p429 = pneg %p94
      %p430 = pneg %p118
      %p431 = pneg %p115
      %p432 = pneg %p139
      %p433 = pneg %p136
      %p434 = pneg %p160
      %p435 = pneg %p157
      %p436 = pneg %p181
      %p437 = pneg %p178
      %p438 = pneg %p202
      %p439 = pneg %p199
      %p440 = pneg %p223
      %p441 = pneg %p220
      %p442 = pneg %p244
      %p443 = pneg %p241
      %p444 = pneg %p265
      %p445 = pneg %p262
      %p446 = pneg %p286
      %p447 = pneg %p283
      %p448 = pneg %p307
      %p449 = pneg %p304
      %p450 = pneg %p333
      %p451 = pneg %p330
      %p452 = scmp.lt.s32.totalorder %s24, 1
      %s453 = scalar_select %p452, %s24, 1
      %s454 = smul.addr %s453, 2
      %s455 = smul.addr %s454, 8
      %s456 = scalar_lea.vmem %s13, %s455
      %p457 = scmp.lt.s32.totalorder %s24, 1
      %s458 = scalar_select %p457, %s24, 1
      %s459 = smul.addr %s458, 11
      %s460 = smul.addr %s459, 8
      %s461 = scalar_lea.vmem %s0, %s460
      %p462 = scmp.lt.s32.totalorder %s24, 1
      %s463 = scalar_select %p462, %s24, 1
      %s464 = smul.addr %s463, 10
      %s465 = scalar_lea.vmem %s1, %s464
      %p466 = scmp.lt.s32.totalorder %s24, 1
      %s467 = scalar_select %p466, %s24, 1
      %s468 = smul.addr %s467, 3
      %s469 = scalar_lea.vmem %s2, %s468
      %p470 = scmp.lt.s32.totalorder %s24, 1
      %s471 = scalar_select %p470, %s24, 1
      %s472 = smul.addr %s471, 2
      %s473 = smul.addr %s472, 8
      %s474 = scalar_lea.vmem %s13, %s473
      %v476 = vld [vmem:[%s461] sm:$0xff]
      %v477 = vld [vmem:[%s461 + $0x8] sm:$0xff]
      %v478 = vld [vmem:[%s461 + $0x10] sm:$0xff]
      %v479 = vld [vmem:[%s461 + $0x18] sm:$0xff]
      %v480 = vld [vmem:[%s461 + $0x20] sm:$0xff]
      %v481 = vld [vmem:[%s461 + $0x28] sm:$0xff]
      %v482 = vld [vmem:[%s461 + $0x30] sm:$0xff]
      %v483 = vld [vmem:[%s461 + $0x38] sm:$0xff]
      %v484 = vld [vmem:[%s461 + $0x40] sm:$0xff]
      %v485 = vld [vmem:[%s461 + $0x48] sm:$0xff]
      %v486 = vld [vmem:[%s461 + $0x50] sm:$0xff]
      %496 = vrot.lane.b32.xlu0 %v478, 60
      %v497 = vpop.permute.xlu0 %496
      %498 = vrot.lane.b32.xlu0 %v479, 60
      %v499 = vpop.permute.xlu0 %498
      %500 = vrot.lane.b32.xlu0 %v480, 60
      %v501 = vpop.permute.xlu0 %500
      %502 = vrot.lane.b32.xlu0 %v481, 60
      %v503 = vpop.permute.xlu0 %502
      %504 = vrot.lane.b32.xlu0 %v482, 60
      %v505 = vpop.permute.xlu0 %504
      %506 = vrot.lane.b32.xlu0 %v483, 60
      %v507 = vpop.permute.xlu0 %506
      %508 = vrot.lane.b32.xlu0 %v484, 60
      %v509 = vpop.permute.xlu0 %508
      %510 = vrot.lane.b32.xlu0 %v485, 60
      %v511 = vpop.permute.xlu0 %510
      %512 = vrot.lane.b32.xlu0 %v486, 60
      %v513 = vpop.permute.xlu0 %512
      %vm514 = vcmask 490496
      %v515 = vsel %vm514, %v497, %v499
      %v516 = vsel %vm514, %v499, %v501
      %v517 = vsel %vm514, %v501, %v503
      %v518 = vsel %vm514, %v503, %v505
      %v519 = vsel %vm514, %v505, %v507
      %v520 = vsel %vm514, %v507, %v509
      %v521 = vsel %vm514, %v509, %v511
      %v522 = vsel %vm514, %v511, %v513
      %vm531 = vcmask 621568
      %v532 = vsel %vm531, %v522, 0.0
      %535 = vrot.lane.b32.xlu0 %v476, 68
      %v536 = vpop.permute.xlu0 %535
      %537 = vrot.lane.b32.xlu0 %v477, 68
      %v538 = vpop.permute.xlu0 %537
      %539 = vrot.lane.b32.xlu0 %v478, 68
      %v540 = vpop.permute.xlu0 %539
      %541 = vrot.lane.b32.xlu0 %v479, 68
      %v542 = vpop.permute.xlu0 %541
      %543 = vrot.lane.b32.xlu0 %v480, 68
      %v544 = vpop.permute.xlu0 %543
      %545 = vrot.lane.b32.xlu0 %v481, 68
      %v546 = vpop.permute.xlu0 %545
      %547 = vrot.lane.b32.xlu0 %v482, 68
      %v548 = vpop.permute.xlu0 %547
      %549 = vrot.lane.b32.xlu0 %v483, 68
      %v550 = vpop.permute.xlu0 %549
      %vm551 = vcmask 556032
      %v552 = vsel %vm551, %v536, %v538
      %v553 = vsel %vm551, %v538, %v540
      %v554 = vsel %vm551, %v540, %v542
      %v555 = vsel %vm551, %v542, %v544
      %v556 = vsel %vm551, %v544, %v546
      %v557 = vsel %vm551, %v546, %v548
      %v558 = vsel %vm551, %v548, %v550
      %v568 = vsel %vm551, 0.0, %v536
      %v569 = vlaneseq
      %v570 = vshrl.u32 %v569, 7
      %vm571 = vcmp.lt.s32.totalorder %v570, 1
      %vm572 = vcmp.lt.s32.totalorder %v570, 2
      %v573 = vsel %vm572, 0.0, %v476
      %v574 = vsel %vm572, 0.0, %v477
      %v575 = vsel %vm572, %v568, %v478
      %v576 = vsel %vm572, %v552, %v479
      %v577 = vsel %vm572, %v553, %v480
      %v578 = vsel %vm572, %v554, %v481
      %v579 = vsel %vm572, %v555, %v482
      %v580 = vsel %vm572, %v556, %v483
      %v581 = vsel %vm572, %v557, %v484
      %v582 = vsel %vm572, %v558, %v485
      %v583 = vsel %vm572, %v550, %v486
      %v584 = vsel %vm571, %v515, %v573
      %v585 = vsel %vm571, %v516, %v574
      %v586 = vsel %vm571, %v517, %v575
      %v587 = vsel %vm571, %v518, %v576
      %v588 = vsel %vm571, %v519, %v577
      %v589 = vsel %vm571, %v520, %v578
      %v590 = vsel %vm571, %v521, %v579
      %v591 = vsel %vm571, %v532, %v580
      %v592 = vsel %vm571, 0.0, %v581
      %v593 = vsel %vm571, 0.0, %v582
      %v594 = vsel %vm571, 0.0, %v583
      %605 = vrot.lane.b32.xlu0 %v584, 127
      %v606 = vpop.permute.xlu0 %605
      %607 = vrot.lane.b32.xlu0 %v585, 127
      %v608 = vpop.permute.xlu0 %607
      %609 = vrot.lane.b32.xlu0 %v586, 127
      %v610 = vpop.permute.xlu0 %609
      %611 = vrot.lane.b32.xlu0 %v587, 127
      %v612 = vpop.permute.xlu0 %611
      %613 = vrot.lane.b32.xlu0 %v588, 127
      %v614 = vpop.permute.xlu0 %613
      %615 = vrot.lane.b32.xlu0 %v589, 127
      %v616 = vpop.permute.xlu0 %615
      %617 = vrot.lane.b32.xlu0 %v590, 127
      %v618 = vpop.permute.xlu0 %617
      %619 = vrot.lane.b32.xlu0 %v591, 127
      %v620 = vpop.permute.xlu0 %619
      %621 = vrot.lane.b32.xlu0 %v592, 127
      %v622 = vpop.permute.xlu0 %621
      %623 = vrot.lane.b32.xlu0 %v593, 127
      %v624 = vpop.permute.xlu0 %623
      %vm625 = vcmask 1039360
      %v626 = vsel %vm625, %v606, %v608
      %v627 = vsel %vm625, %v608, %v610
      %v628 = vsel %vm625, %v610, %v612
      %v629 = vsel %vm625, %v612, %v614
      %v630 = vsel %vm625, %v614, %v616
      %v631 = vsel %vm625, %v616, %v618
      %v632 = vsel %vm625, %v618, %v620
      %v633 = vsel %vm625, %v620, %v622
      %v634 = vsel %vm625, %v622, %v624
      %645 = vrot.lane.b32.xlu0 %v584, 126
      %v646 = vpop.permute.xlu0 %645
      %647 = vrot.lane.b32.xlu0 %v585, 126
      %v648 = vpop.permute.xlu0 %647
      %649 = vrot.lane.b32.xlu0 %v586, 126
      %v650 = vpop.permute.xlu0 %649
      %651 = vrot.lane.b32.xlu0 %v587, 126
      %v652 = vpop.permute.xlu0 %651
      %653 = vrot.lane.b32.xlu0 %v588, 126
      %v654 = vpop.permute.xlu0 %653
      %655 = vrot.lane.b32.xlu0 %v589, 126
      %v656 = vpop.permute.xlu0 %655
      %657 = vrot.lane.b32.xlu0 %v590, 126
      %v658 = vpop.permute.xlu0 %657
      %659 = vrot.lane.b32.xlu0 %v591, 126
      %v660 = vpop.permute.xlu0 %659
      %661 = vrot.lane.b32.xlu0 %v592, 126
      %v662 = vpop.permute.xlu0 %661
      %663 = vrot.lane.b32.xlu0 %v593, 126
      %v664 = vpop.permute.xlu0 %663
      %vm665 = vcmask 1031168
      %v666 = vsel %vm665, %v646, %v648
      %v667 = vsel %vm665, %v648, %v650
      %v668 = vsel %vm665, %v650, %v652
      %v669 = vsel %vm665, %v652, %v654
      %v670 = vsel %vm665, %v654, %v656
      %v671 = vsel %vm665, %v656, %v658
      %v672 = vsel %vm665, %v658, %v660
      %v673 = vsel %vm665, %v660, %v662
      %v674 = vsel %vm665, %v662, %v664
      %685 = vrot.lane.b32.xlu0 %v584, 110
      %v686 = vpop.permute.xlu0 %685
      %687 = vrot.lane.b32.xlu0 %v585, 110
      %v688 = vpop.permute.xlu0 %687
      %689 = vrot.lane.b32.xlu0 %v586, 110
      %v690 = vpop.permute.xlu0 %689
      %691 = vrot.lane.b32.xlu0 %v587, 110
      %v692 = vpop.permute.xlu0 %691
      %693 = vrot.lane.b32.xlu0 %v588, 110
      %v694 = vpop.permute.xlu0 %693
      %695 = vrot.lane.b32.xlu0 %v589, 110
      %v696 = vpop.permute.xlu0 %695
      %697 = vrot.lane.b32.xlu0 %v590, 110
      %v698 = vpop.permute.xlu0 %697
      %699 = vrot.lane.b32.xlu0 %v591, 110
      %v700 = vpop.permute.xlu0 %699
      %701 = vrot.lane.b32.xlu0 %v592, 110
      %v702 = vpop.permute.xlu0 %701
      %703 = vrot.lane.b32.xlu0 %v593, 110
      %v704 = vpop.permute.xlu0 %703
      %vm705 = vcmask 900096
      %v706 = vsel %vm705, %v686, %v688
      %v707 = vsel %vm705, %v688, %v690
      %v708 = vsel %vm705, %v690, %v692
      %v709 = vsel %vm705, %v692, %v694
      %v710 = vsel %vm705, %v694, %v696
      %v711 = vsel %vm705, %v696, %v698
      %v712 = vsel %vm705, %v698, %v700
      %v713 = vsel %vm705, %v700, %v702
      %v714 = vsel %vm705, %v702, %v704
      %725 = vrot.lane.b32.xlu0 %v584, 109
      %v726 = vpop.permute.xlu0 %725
      %727 = vrot.lane.b32.xlu0 %v585, 109
      %v728 = vpop.permute.xlu0 %727
      %729 = vrot.lane.b32.xlu0 %v586, 109
      %v730 = vpop.permute.xlu0 %729
      %731 = vrot.lane.b32.xlu0 %v587, 109
      %v732 = vpop.permute.xlu0 %731
      %733 = vrot.lane.b32.xlu0 %v588, 109
      %v734 = vpop.permute.xlu0 %733
      %735 = vrot.lane.b32.xlu0 %v589, 109
      %v736 = vpop.permute.xlu0 %735
      %737 = vrot.lane.b32.xlu0 %v590, 109
      %v738 = vpop.permute.xlu0 %737
      %739 = vrot.lane.b32.xlu0 %v591, 109
      %v740 = vpop.permute.xlu0 %739
      %741 = vrot.lane.b32.xlu0 %v592, 109
      %v742 = vpop.permute.xlu0 %741
      %743 = vrot.lane.b32.xlu0 %v593, 109
      %v744 = vpop.permute.xlu0 %743
      %vm745 = vcmask 891904
      %v746 = vsel %vm745, %v726, %v728
      %v747 = vsel %vm745, %v728, %v730
      %v748 = vsel %vm745, %v730, %v732
      %v749 = vsel %vm745, %v732, %v734
      %v750 = vsel %vm745, %v734, %v736
      %v751 = vsel %vm745, %v736, %v738
      %v752 = vsel %vm745, %v738, %v740
      %v753 = vsel %vm745, %v740, %v742
      %v754 = vsel %vm745, %v742, %v744
      %765 = vrot.lane.b32.xlu0 %v584, 108
      %v766 = vpop.permute.xlu0 %765
      %767 = vrot.lane.b32.xlu0 %v585, 108
      %v768 = vpop.permute.xlu0 %767
      %769 = vrot.lane.b32.xlu0 %v586, 108
      %v770 = vpop.permute.xlu0 %769
      %771 = vrot.lane.b32.xlu0 %v587, 108
      %v772 = vpop.permute.xlu0 %771
      %773 = vrot.lane.b32.xlu0 %v588, 108
      %v774 = vpop.permute.xlu0 %773
      %775 = vrot.lane.b32.xlu0 %v589, 108
      %v776 = vpop.permute.xlu0 %775
      %777 = vrot.lane.b32.xlu0 %v590, 108
      %v778 = vpop.permute.xlu0 %777
      %779 = vrot.lane.b32.xlu0 %v591, 108
      %v780 = vpop.permute.xlu0 %779
      %781 = vrot.lane.b32.xlu0 %v592, 108
      %v782 = vpop.permute.xlu0 %781
      %783 = vrot.lane.b32.xlu0 %v593, 108
      %v784 = vpop.permute.xlu0 %783
      %vm785 = vcmask 883712
      %v786 = vsel %vm785, %v766, %v768
      %v787 = vsel %vm785, %v768, %v770
      %v788 = vsel %vm785, %v770, %v772
      %v789 = vsel %vm785, %v772, %v774
      %v790 = vsel %vm785, %v774, %v776
      %v791 = vsel %vm785, %v776, %v778
      %v792 = vsel %vm785, %v778, %v780
      %v793 = vsel %vm785, %v780, %v782
      %v794 = vsel %vm785, %v782, %v784
      %806 = vrot.lane.b32.xlu0 %v584, 92
      %v807 = vpop.permute.xlu0 %806
      %808 = vrot.lane.b32.xlu0 %v585, 92
      %v809 = vpop.permute.xlu0 %808
      %810 = vrot.lane.b32.xlu0 %v586, 92
      %v811 = vpop.permute.xlu0 %810
      %812 = vrot.lane.b32.xlu0 %v587, 92
      %v813 = vpop.permute.xlu0 %812
      %814 = vrot.lane.b32.xlu0 %v588, 92
      %v815 = vpop.permute.xlu0 %814
      %816 = vrot.lane.b32.xlu0 %v589, 92
      %v817 = vpop.permute.xlu0 %816
      %818 = vrot.lane.b32.xlu0 %v590, 92
      %v819 = vpop.permute.xlu0 %818
      %820 = vrot.lane.b32.xlu0 %v591, 92
      %v821 = vpop.permute.xlu0 %820
      %822 = vrot.lane.b32.xlu0 %v592, 92
      %v823 = vpop.permute.xlu0 %822
      %824 = vrot.lane.b32.xlu0 %v593, 92
      %v825 = vpop.permute.xlu0 %824
      %826 = vrot.lane.b32.xlu0 %v594, 92
      %v827 = vpop.permute.xlu0 %826
      %vm828 = vcmask 752640
      %v829 = vsel %vm828, %v807, %v809
      %v830 = vsel %vm828, %v809, %v811
      %v831 = vsel %vm828, %v811, %v813
      %v832 = vsel %vm828, %v813, %v815
      %v833 = vsel %vm828, %v815, %v817
      %v834 = vsel %vm828, %v817, %v819
      %v835 = vsel %vm828, %v819, %v821
      %v836 = vsel %vm828, %v821, %v823
      %v837 = vsel %vm828, %v823, %v825
      %v838 = vsel %vm828, %v825, %v827
      %849 = vrot.lane.b32.xlu0 %v584, 91
      %v850 = vpop.permute.xlu0 %849
      %851 = vrot.lane.b32.xlu0 %v585, 91
      %v852 = vpop.permute.xlu0 %851
      %853 = vrot.lane.b32.xlu0 %v586, 91
      %v854 = vpop.permute.xlu0 %853
      %855 = vrot.lane.b32.xlu0 %v587, 91
      %v856 = vpop.permute.xlu0 %855
      %857 = vrot.lane.b32.xlu0 %v588, 91
      %v858 = vpop.permute.xlu0 %857
      %859 = vrot.lane.b32.xlu0 %v589, 91
      %v860 = vpop.permute.xlu0 %859
      %861 = vrot.lane.b32.xlu0 %v590, 91
      %v862 = vpop.permute.xlu0 %861
      %863 = vrot.lane.b32.xlu0 %v591, 91
      %v864 = vpop.permute.xlu0 %863
      %865 = vrot.lane.b32.xlu0 %v592, 91
      %v866 = vpop.permute.xlu0 %865
      %867 = vrot.lane.b32.xlu0 %v593, 91
      %v868 = vpop.permute.xlu0 %867
      %869 = vrot.lane.b32.xlu0 %v594, 91
      %v870 = vpop.permute.xlu0 %869
      %vm871 = vcmask 744448
      %v872 = vsel %vm871, %v850, %v852
      %v873 = vsel %vm871, %v852, %v854
      %v874 = vsel %vm871, %v854, %v856
      %v875 = vsel %vm871, %v856, %v858
      %v876 = vsel %vm871, %v858, %v860
      %v877 = vsel %vm871, %v860, %v862
      %v878 = vsel %vm871, %v862, %v864
      %v879 = vsel %vm871, %v864, %v866
      %v880 = vsel %vm871, %v866, %v868
      %v881 = vsel %vm871, %v868, %v870
      %892 = vrot.lane.b32.xlu0 %v584, 90
      %v893 = vpop.permute.xlu0 %892
      %894 = vrot.lane.b32.xlu0 %v585, 90
      %v895 = vpop.permute.xlu0 %894
      %896 = vrot.lane.b32.xlu0 %v586, 90
      %v897 = vpop.permute.xlu0 %896
      %898 = vrot.lane.b32.xlu0 %v587, 90
      %v899 = vpop.permute.xlu0 %898
      %900 = vrot.lane.b32.xlu0 %v588, 90
      %v901 = vpop.permute.xlu0 %900
      %902 = vrot.lane.b32.xlu0 %v589, 90
      %v903 = vpop.permute.xlu0 %902
      %904 = vrot.lane.b32.xlu0 %v590, 90
      %v905 = vpop.permute.xlu0 %904
      %906 = vrot.lane.b32.xlu0 %v591, 90
      %v907 = vpop.permute.xlu0 %906
      %908 = vrot.lane.b32.xlu0 %v592, 90
      %v909 = vpop.permute.xlu0 %908
      %910 = vrot.lane.b32.xlu0 %v593, 90
      %v911 = vpop.permute.xlu0 %910
      %912 = vrot.lane.b32.xlu0 %v594, 90
      %v913 = vpop.permute.xlu0 %912
      %vm914 = vcmask 736256
      %v915 = vsel %vm914, %v893, %v895
      %v916 = vsel %vm914, %v895, %v897
      %v917 = vsel %vm914, %v897, %v899
      %v918 = vsel %vm914, %v899, %v901
      %v919 = vsel %vm914, %v901, %v903
      %v920 = vsel %vm914, %v903, %v905
      %v921 = vsel %vm914, %v905, %v907
      %v922 = vsel %vm914, %v907, %v909
      %v923 = vsel %vm914, %v909, %v911
      %v924 = vsel %vm914, %v911, %v913
      %v935 = vpack.c.bf16 %v626, %v584
      %v936 = vpack.c.bf16 %v627, %v585
      %v937 = vpack.c.bf16 %v628, %v586
      %v938 = vpack.c.bf16 %v629, %v587
      %v939 = vpack.c.bf16 %v630, %v588
      %v940 = vpack.c.bf16 %v631, %v589
      %v941 = vpack.c.bf16 %v632, %v590
      %v942 = vpack.c.bf16 %v633, %v591
      %v943 = vpack.c.bf16 %v634, %v592
      %v944 = vpack.c.bf16 %v624, %v593
      %v945 = vpack.c.bf16 %v706, %v666
      %v946 = vpack.c.bf16 %v707, %v667
      %v947 = vpack.c.bf16 %v708, %v668
      %v948 = vpack.c.bf16 %v709, %v669
      %v949 = vpack.c.bf16 %v710, %v670
      %v950 = vpack.c.bf16 %v711, %v671
      %v951 = vpack.c.bf16 %v712, %v672
      %v952 = vpack.c.bf16 %v713, %v673
      %v953 = vpack.c.bf16 %v714, %v674
      %v954 = vpack.c.bf16 %v704, %v664
      %v955 = vpack.c.bf16 %v786, %v746
      %v956 = vpack.c.bf16 %v787, %v747
      %v957 = vpack.c.bf16 %v788, %v748
      %v958 = vpack.c.bf16 %v789, %v749
      %v959 = vpack.c.bf16 %v790, %v750
      %v960 = vpack.c.bf16 %v791, %v751
      %v961 = vpack.c.bf16 %v792, %v752
      %v962 = vpack.c.bf16 %v793, %v753
      %v963 = vpack.c.bf16 %v794, %v754
      %v964 = vpack.c.bf16 %v784, %v744
      %v965 = vpack.c.bf16 %v872, %v829
      %v966 = vpack.c.bf16 %v873, %v830
      %v967 = vpack.c.bf16 %v874, %v831
      %v968 = vpack.c.bf16 %v875, %v832
      %v969 = vpack.c.bf16 %v876, %v833
      %v970 = vpack.c.bf16 %v877, %v834
      %v971 = vpack.c.bf16 %v878, %v835
      %v972 = vpack.c.bf16 %v879, %v836
      %v973 = vpack.c.bf16 %v880, %v837
      %v974 = vpack.c.bf16 %v881, %v838
      %v975 = vpack.c.bf16 %v915, %v915
      %v976 = vpack.c.bf16 %v916, %v916
      %v977 = vpack.c.bf16 %v917, %v917
      %v978 = vpack.c.bf16 %v918, %v918
      %v979 = vpack.c.bf16 %v919, %v919
      %v980 = vpack.c.bf16 %v920, %v920
      %v981 = vpack.c.bf16 %v921, %v921
      %v982 = vpack.c.bf16 %v922, %v922
      %v983 = vpack.c.bf16 %v923, %v923
      %v984 = vpack.c.bf16 %v924, %v924
      %v985 = vld [vmem:[%s3] sm:$0xf]
      %v986 = vld [vmem:[%s4] sm:$0xff]
      %988 = vset.pattern.permute.xlu0 0
      %989 = vperm.xlu0 %988, %v986
      %v990 = vpop.permute.xlu0 %989
      %vm992 = vcmask 588800
      %v994 = vsel %vm992, %v985, 0
      %vm996 = vcmask 1043456
      %v998 = vsel %vm996, %v975, 0
      %v1001 = vsel %vm996, %v976, 0
      %v1004 = vsel %vm996, %v977, 0
      %v1007 = vsel %vm996, %v978, 0
      %v1010 = vsel %vm996, %v979, 0
      %v1013 = vsel %vm996, %v980, 0
      %v1016 = vsel %vm996, %v981, 0
      %v1019 = vsel %vm996, %v982, 0
      %v1022 = vsel %vm996, %v983, 0
      %v1025 = vsel %vm996, %v984, 0
      %1027 = vmatprep.subr.bf16.mxu0 %v936
      %1028 = vmatpush1.bf16.msra.mxu0 %v935
      %1029 = vmatprep.subr.bf16.mxu0 %v946
      %1030 = vmatpush1.bf16.msra.mxu0 %v945
      %1031 = vmatprep.subr.bf16.mxu0 %v956
      %1032 = vmatpush1.bf16.msra.mxu0 %v955
      %1033 = vmatprep.subr.bf16.mxu0 %v966
      %1034 = vmatpush1.bf16.msra.mxu0 %v965
      %1035 = vmatprep.subr.bf16.mxu0 %v1001
      %1036 = vmatpush1.bf16.msra.mxu0 %v998
      %1037 = vmatprep.subr.bf16.mxu0 0
      %1038 = vmatpush1.bf16.msra.mxu0 0
      %1039 = vmatprep.subr.bf16.mxu0 0
      %1040 = vmatpush1.bf16.msra.mxu0 0
      %1041 = vmatprep.subr.bf16.mxu0 0
      %1042 = vmatpush1.bf16.msra.mxu0 0
      %1043 = vmatprep.subr.bf16.mxu0 0
      %1044 = vmatpush1.bf16.msra.mxu0 0
      %1045 = vmatprep.subr.bf16.mxu0 0
      %1046 = vmatpush1.bf16.msra.mxu0 0
      %1047 = vmatprep.subr.bf16.mxu0 0
      %1048 = vmatpush1.bf16.msra.mxu0 0
      %1049 = vmatprep.subr.bf16.mxu0 0
      %1050 = vmatpush1.bf16.msra.mxu0 0
      %1051 = vmatprep.subr.bf16.mxu0 0
      %1052 = vmatpush1.bf16.msra.mxu0 0
      %1053 = vmatprep.subr.bf16.mxu0 0
      %1054 = vmatpush1.bf16.msra.mxu0 0
      %1055 = vmatprep.subr.bf16.mxu0 0
      %1056 = vmatpush1.bf16.msra.mxu0 0
      %1057 = vmatprep.subr.bf16.mxu0 0
      %1058 = vmatpush1.bf16.msra.mxu0 0
      %1059 = vmatprep.mubr.bf16.mxu0 0
      %1060 = vmatmul.mubr.bf16.gmra.mrb[0].mxu0 %v994
      %v1061 = vpop.f32.mrb[0].mxu0
      %v1062 = vadd.f32 %v990, %v1061
      %v1063 = vpop.f32.mrb[0].mxu0
      %v1064 = vadd.f32 %v990, %v1063
      %v1065 = vpop.f32.mrb[0].mxu0
      %v1066 = vpop.f32.mrb[0].mxu0
      %1067 = vdwg.mxu0
      %1068 = vmatprep.subr.bf16.mxu0 %v938
      %1069 = vmatpush1.bf16.msra.mxu0 %v937
      %1070 = vmatprep.subr.bf16.mxu0 %v948
      %1071 = vmatpush1.bf16.msra.mxu0 %v947
      %1072 = vmatprep.subr.bf16.mxu0 %v958
      %1073 = vmatpush1.bf16.msra.mxu0 %v957
      %1074 = vmatprep.subr.bf16.mxu0 %v968
      %1075 = vmatpush1.bf16.msra.mxu0 %v967
      %1076 = vmatprep.subr.bf16.mxu0 %v1007
      %1077 = vmatpush1.bf16.msra.mxu0 %v1004
      %1078 = vmatprep.subr.bf16.mxu0 0
      %1079 = vmatpush1.bf16.msra.mxu0 0
      %1080 = vmatprep.subr.bf16.mxu0 0
      %1081 = vmatpush1.bf16.msra.mxu0 0
      %1082 = vmatprep.subr.bf16.mxu0 0
      %1083 = vmatpush1.bf16.msra.mxu0 0
      %1084 = vmatprep.subr.bf16.mxu0 0
      %1085 = vmatpush1.bf16.msra.mxu0 0
      %1086 = vmatprep.subr.bf16.mxu0 0
      %1087 = vmatpush1.bf16.msra.mxu0 0
      %1088 = vmatprep.subr.bf16.mxu0 0
      %1089 = vmatpush1.bf16.msra.mxu0 0
      %1090 = vmatprep.subr.bf16.mxu0 0
      %1091 = vmatpush1.bf16.msra.mxu0 0
      %1092 = vmatprep.subr.bf16.mxu0 0
      %1093 = vmatpush1.bf16.msra.mxu0 0
      %1094 = vmatprep.subr.bf16.mxu0 0
      %1095 = vmatpush1.bf16.msra.mxu0 0
      %1096 = vmatprep.subr.bf16.mxu0 0
      %1097 = vmatpush1.bf16.msra.mxu0 0
      %1098 = vmatprep.subr.bf16.mxu0 0
      %1099 = vmatpush1.bf16.msra.mxu0 0
      %1100 = vmatprep.mubr.bf16.mxu0 0
      %1101 = vmatmul.mubr.bf16.gmra.mrb[0].mxu0 %v994
      %v1102 = vpop.f32.mrb[0].mxu0
      %v1103 = vadd.f32 %v990, %v1102
      %v1104 = vpop.f32.mrb[0].mxu0
      %v1105 = vadd.f32 %v990, %v1104
      %v1106 = vpop.f32.mrb[0].mxu0
      %v1107 = vpop.f32.mrb[0].mxu0
      %1108 = vdwg.mxu0
      %1109 = vmatprep.subr.bf16.mxu0 %v940
      %1110 = vmatpush1.bf16.msra.mxu0 %v939
      %1111 = vmatprep.subr.bf16.mxu0 %v950
      %1112 = vmatpush1.bf16.msra.mxu0 %v949
      %1113 = vmatprep.subr.bf16.mxu0 %v960
      %1114 = vmatpush1.bf16.msra.mxu0 %v959
      %1115 = vmatprep.subr.bf16.mxu0 %v970
      %1116 = vmatpush1.bf16.msra.mxu0 %v969
      %1117 = vmatprep.subr.bf16.mxu0 %v1013
      %1118 = vmatpush1.bf16.msra.mxu0 %v1010
      %1119 = vmatprep.subr.bf16.mxu0 0
      %1120 = vmatpush1.bf16.msra.mxu0 0
      %1121 = vmatprep.subr.bf16.mxu0 0
      %1122 = vmatpush1.bf16.msra.mxu0 0
      %1123 = vmatprep.subr.bf16.mxu0 0
      %1124 = vmatpush1.bf16.msra.mxu0 0
      %1125 = vmatprep.subr.bf16.mxu0 0
      %1126 = vmatpush1.bf16.msra.mxu0 0
      %1127 = vmatprep.subr.bf16.mxu0 0
      %1128 = vmatpush1.bf16.msra.mxu0 0
      %1129 = vmatprep.subr.bf16.mxu0 0
      %1130 = vmatpush1.bf16.msra.mxu0 0
      %1131 = vmatprep.subr.bf16.mxu0 0
      %1132 = vmatpush1.bf16.msra.mxu0 0
      %1133 = vmatprep.subr.bf16.mxu0 0
      %1134 = vmatpush1.bf16.msra.mxu0 0
      %1135 = vmatprep.subr.bf16.mxu0 0
      %1136 = vmatpush1.bf16.msra.mxu0 0
      %1137 = vmatprep.subr.bf16.mxu0 0
      %1138 = vmatpush1.bf16.msra.mxu0 0
      %1139 = vmatprep.subr.bf16.mxu0 0
      %1140 = vmatpush1.bf16.msra.mxu0 0
      %1141 = vmatprep.mubr.bf16.mxu0 0
      %1142 = vmatmul.mubr.bf16.gmra.mrb[0].mxu0 %v994
      %v1143 = vpop.f32.mrb[0].mxu0
      %v1144 = vadd.f32 %v990, %v1143
      %v1145 = vpop.f32.mrb[0].mxu0
      %v1146 = vadd.f32 %v990, %v1145
      %v1147 = vpop.f32.mrb[0].mxu0
      %v1148 = vpop.f32.mrb[0].mxu0
      %1149 = vdwg.mxu0
      %1150 = vmatprep.subr.bf16.mxu0 %v942
      %1151 = vmatpush1.bf16.msra.mxu0 %v941
      %1152 = vmatprep.subr.bf16.mxu0 %v952
      %1153 = vmatpush1.bf16.msra.mxu0 %v951
      %1154 = vmatprep.subr.bf16.mxu0 %v962
      %1155 = vmatpush1.bf16.msra.mxu0 %v961
      %1156 = vmatprep.subr.bf16.mxu0 %v972
      %1157 = vmatpush1.bf16.msra.mxu0 %v971
      %1158 = vmatprep.subr.bf16.mxu0 %v1019
      %1159 = vmatpush1.bf16.msra.mxu0 %v1016
      %1160 = vmatprep.subr.bf16.mxu0 0
      %1161 = vmatpush1.bf16.msra.mxu0 0
      %1162 = vmatprep.subr.bf16.mxu0 0
      %1163 = vmatpush1.bf16.msra.mxu0 0
      %1164 = vmatprep.subr.bf16.mxu0 0
      %1165 = vmatpush1.bf16.msra.mxu0 0
      %1166 = vmatprep.subr.bf16.mxu0 0
      %1167 = vmatpush1.bf16.msra.mxu0 0
      %1168 = vmatprep.subr.bf16.mxu0 0
      %1169 = vmatpush1.bf16.msra.mxu0 0
      %1170 = vmatprep.subr.bf16.mxu0 0
      %1171 = vmatpush1.bf16.msra.mxu0 0
      %1172 = vmatprep.subr.bf16.mxu0 0
      %1173 = vmatpush1.bf16.msra.mxu0 0
      %1174 = vmatprep.subr.bf16.mxu0 0
      %1175 = vmatpush1.bf16.msra.mxu0 0
      %1176 = vmatprep.subr.bf16.mxu0 0
      %1177 = vmatpush1.bf16.msra.mxu0 0
      %1178 = vmatprep.subr.bf16.mxu0 0
      %1179 = vmatpush1.bf16.msra.mxu0 0
      %1180 = vmatprep.subr.bf16.mxu0 0
      %1181 = vmatpush1.bf16.msra.mxu0 0
      %1182 = vmatprep.mubr.bf16.mxu0 0
      %1183 = vmatmul.mubr.bf16.gmra.mrb[0].mxu0 %v994
      %v1184 = vpop.f32.mrb[0].mxu0
      %v1185 = vadd.f32 %v990, %v1184
      %v1186 = vpop.f32.mrb[0].mxu0
      %v1187 = vadd.f32 %v990, %v1186
      %v1188 = vpop.f32.mrb[0].mxu0
      %v1189 = vpop.f32.mrb[0].mxu0
      %1190 = vdwg.mxu0
      %1191 = vmatprep.subr.bf16.mxu0 %v944
      %1192 = vmatpush1.bf16.msra.mxu0 %v943
      %1193 = vmatprep.subr.bf16.mxu0 %v954
      %1194 = vmatpush1.bf16.msra.mxu0 %v953
      %1195 = vmatprep.subr.bf16.mxu0 %v964
      %1196 = vmatpush1.bf16.msra.mxu0 %v963
      %1197 = vmatprep.subr.bf16.mxu0 %v974
      %1198 = vmatpush1.bf16.msra.mxu0 %v973
      %1199 = vmatprep.subr.bf16.mxu0 %v1025
      %1200 = vmatpush1.bf16.msra.mxu0 %v1022
      %1201 = vmatprep.subr.bf16.mxu0 0
      %1202 = vmatpush1.bf16.msra.mxu0 0
      %1203 = vmatprep.subr.bf16.mxu0 0
      %1204 = vmatpush1.bf16.msra.mxu0 0
      %1205 = vmatprep.subr.bf16.mxu0 0
      %1206 = vmatpush1.bf16.msra.mxu0 0
      %1207 = vmatprep.subr.bf16.mxu0 0
      %1208 = vmatpush1.bf16.msra.mxu0 0
      %1209 = vmatprep.subr.bf16.mxu0 0
      %1210 = vmatpush1.bf16.msra.mxu0 0
      %1211 = vmatprep.subr.bf16.mxu0 0
      %1212 = vmatpush1.bf16.msra.mxu0 0
      %1213 = vmatprep.subr.bf16.mxu0 0
      %1214 = vmatpush1.bf16.msra.mxu0 0
      %1215 = vmatprep.subr.bf16.mxu0 0
      %1216 = vmatpush1.bf16.msra.mxu0 0
      %1217 = vmatprep.subr.bf16.mxu0 0
      %1218 = vmatpush1.bf16.msra.mxu0 0
      %1219 = vmatprep.subr.bf16.mxu0 0
      %1220 = vmatpush1.bf16.msra.mxu0 0
      %1221 = vmatprep.subr.bf16.mxu0 0
      %1222 = vmatpush1.bf16.msra.mxu0 0
      %1223 = vmatprep.mubr.bf16.mxu0 0
      %1224 = vmatmul.mubr.bf16.gmra.mrb[0].mxu0 %v994
      %v1225 = vpop.f32.mrb[0].mxu0
      %v1226 = vadd.f32 %v990, %v1225
      %v1227 = vpop.f32.mrb[0].mxu0
      %v1228 = vadd.f32 %v990, %v1227
      %v1229 = vpop.f32.mrb[0].mxu0
      %v1230 = vpop.f32.mrb[0].mxu0
      %1231 = vdwg.mxu0
      %v1232 = vtanh.pop %v1062
      %v1233 = vtanh.pop %v1064
      %v1234 = vtanh.pop %v1103
      %v1235 = vtanh.pop %v1105
      %v1236 = vtanh.pop %v1144
      %v1237 = vtanh.pop %v1146
      %v1238 = vtanh.pop %v1185
      %v1239 = vtanh.pop %v1187
      %v1240 = vtanh.pop %v1226
      %v1241 = vtanh.pop %v1228
      %1250 = vrot.lane.b32.xlu0 %v1234, 60
      %v1251 = vpop.permute.xlu0 %1250
      %1252 = vrot.lane.b32.xlu0 %v1235, 60
      %v1253 = vpop.permute.xlu0 %1252
      %1254 = vrot.lane.b32.xlu0 %v1236, 60
      %v1255 = vpop.permute.xlu0 %1254
      %1256 = vrot.lane.b32.xlu0 %v1237, 60
      %v1257 = vpop.permute.xlu0 %1256
      %1258 = vrot.lane.b32.xlu0 %v1238, 60
      %v1259 = vpop.permute.xlu0 %1258
      %1260 = vrot.lane.b32.xlu0 %v1239, 60
      %v1261 = vpop.permute.xlu0 %1260
      %1262 = vrot.lane.b32.xlu0 %v1240, 60
      %v1263 = vpop.permute.xlu0 %1262
      %1264 = vrot.lane.b32.xlu0 %v1241, 60
      %v1265 = vpop.permute.xlu0 %1264
      %v1266 = vsel %vm514, %v1251, %v1253
      %v1267 = vsel %vm514, %v1253, %v1255
      %v1268 = vsel %vm514, %v1255, %v1257
      %v1269 = vsel %vm514, %v1257, %v1259
      %v1270 = vsel %vm514, %v1259, %v1261
      %v1271 = vsel %vm514, %v1261, %v1263
      %v1272 = vsel %vm514, %v1263, %v1265
      %vm1281 = vcmask 310272
      %v1282 = vsel %vm1281, %v1265, 0.0
      %1285 = vrot.lane.b32.xlu0 %v1232, 68
      %v1286 = vpop.permute.xlu0 %1285
      %1287 = vrot.lane.b32.xlu0 %v1233, 68
      %v1288 = vpop.permute.xlu0 %1287
      %1289 = vrot.lane.b32.xlu0 %v1234, 68
      %v1290 = vpop.permute.xlu0 %1289
      %1291 = vrot.lane.b32.xlu0 %v1235, 68
      %v1292 = vpop.permute.xlu0 %1291
      %1293 = vrot.lane.b32.xlu0 %v1236, 68
      %v1294 = vpop.permute.xlu0 %1293
      %1295 = vrot.lane.b32.xlu0 %v1237, 68
      %v1296 = vpop.permute.xlu0 %1295
      %1297 = vrot.lane.b32.xlu0 %v1238, 68
      %v1298 = vpop.permute.xlu0 %1297
      %1299 = vrot.lane.b32.xlu0 %v1239, 68
      %v1300 = vpop.permute.xlu0 %1299
      %v1301 = vsel %vm551, %v1286, %v1288
      %v1302 = vsel %vm551, %v1288, %v1290
      %v1303 = vsel %vm551, %v1290, %v1292
      %v1304 = vsel %vm551, %v1292, %v1294
      %v1305 = vsel %vm551, %v1294, %v1296
      %v1306 = vsel %vm551, %v1296, %v1298
      %v1307 = vsel %vm551, %v1298, %v1300
      %v1316 = vsel %vm551, 0.0, %v1286
      %vm1317 = vcmp.lt.s32.totalorder %v570, 4
      %v1318 = vsel %vm1317, 0.0, %v1232
      %v1319 = vsel %vm1317, 0.0, %v1233
      %v1320 = vsel %vm1317, %v1316, %v1234
      %v1321 = vsel %vm1317, %v1301, %v1235
      %v1322 = vsel %vm1317, %v1302, %v1236
      %v1323 = vsel %vm1317, %v1303, %v1237
      %v1324 = vsel %vm1317, %v1304, %v1238
      %v1325 = vsel %vm1317, %v1305, %v1239
      %v1326 = vsel %vm1317, %v1306, %v1240
      %v1327 = vsel %vm1317, %v1307, %v1241
      %v1328 = vsel %vm572, %v1266, %v1318
      %v1329 = vsel %vm572, %v1267, %v1319
      %v1330 = vsel %vm572, %v1268, %v1320
      %v1331 = vsel %vm572, %v1269, %v1321
      %v1332 = vsel %vm572, %v1270, %v1322
      %v1333 = vsel %vm572, %v1271, %v1323
      %v1334 = vsel %vm572, %v1272, %v1324
      %v1335 = vsel %vm572, %v1282, %v1325
      %v1336 = vsel %vm572, 0.0, %v1326
      %v1337 = vsel %vm572, 0.0, %v1327
      %1348 = vrot.lane.b32.xlu0 %v1328, 127
      %v1349 = vpop.permute.xlu0 %1348
      %1350 = vrot.lane.b32.xlu0 %v1329, 127
      %v1351 = vpop.permute.xlu0 %1350
      %1352 = vrot.lane.b32.xlu0 %v1330, 127
      %v1353 = vpop.permute.xlu0 %1352
      %1354 = vrot.lane.b32.xlu0 %v1331, 127
      %v1355 = vpop.permute.xlu0 %1354
      %1356 = vrot.lane.b32.xlu0 %v1332, 127
      %v1357 = vpop.permute.xlu0 %1356
      %1358 = vrot.lane.b32.xlu0 %v1333, 127
      %v1359 = vpop.permute.xlu0 %1358
      %1360 = vrot.lane.b32.xlu0 %v1334, 127
      %v1361 = vpop.permute.xlu0 %1360
      %1362 = vrot.lane.b32.xlu0 %v1335, 127
      %v1363 = vpop.permute.xlu0 %1362
      %1364 = vrot.lane.b32.xlu0 %v1336, 127
      %v1365 = vpop.permute.xlu0 %1364
      %1366 = vrot.lane.b32.xlu0 %v1337, 127
      %v1367 = vpop.permute.xlu0 %1366
      %v1368 = vsel %vm625, %v1349, %v1351
      %v1369 = vsel %vm625, %v1351, %v1353
      %v1370 = vsel %vm625, %v1353, %v1355
      %v1371 = vsel %vm625, %v1355, %v1357
      %v1372 = vsel %vm625, %v1357, %v1359
      %v1373 = vsel %vm625, %v1359, %v1361
      %v1374 = vsel %vm625, %v1361, %v1363
      %v1375 = vsel %vm625, %v1363, %v1365
      %v1376 = vsel %vm625, %v1365, %v1367
      %1387 = vrot.lane.b32.xlu0 %v1328, 126
      %v1388 = vpop.permute.xlu0 %1387
      %1389 = vrot.lane.b32.xlu0 %v1329, 126
      %v1390 = vpop.permute.xlu0 %1389
      %1391 = vrot.lane.b32.xlu0 %v1330, 126
      %v1392 = vpop.permute.xlu0 %1391
      %1393 = vrot.lane.b32.xlu0 %v1331, 126
      %v1394 = vpop.permute.xlu0 %1393
      %1395 = vrot.lane.b32.xlu0 %v1332, 126
      %v1396 = vpop.permute.xlu0 %1395
      %1397 = vrot.lane.b32.xlu0 %v1333, 126
      %v1398 = vpop.permute.xlu0 %1397
      %1399 = vrot.lane.b32.xlu0 %v1334, 126
      %v1400 = vpop.permute.xlu0 %1399
      %1401 = vrot.lane.b32.xlu0 %v1335, 126
      %v1402 = vpop.permute.xlu0 %1401
      %1403 = vrot.lane.b32.xlu0 %v1336, 126
      %v1404 = vpop.permute.xlu0 %1403
      %1405 = vrot.lane.b32.xlu0 %v1337, 126
      %v1406 = vpop.permute.xlu0 %1405
      %v1407 = vsel %vm665, %v1388, %v1390
      %v1408 = vsel %vm665, %v1390, %v1392
      %v1409 = vsel %vm665, %v1392, %v1394
      %v1410 = vsel %vm665, %v1394, %v1396
      %v1411 = vsel %vm665, %v1396, %v1398
      %v1412 = vsel %vm665, %v1398, %v1400
      %v1413 = vsel %vm665, %v1400, %v1402
      %v1414 = vsel %vm665, %v1402, %v1404
      %v1415 = vsel %vm665, %v1404, %v1406
      %1426 = vrot.lane.b32.xlu0 %v1328, 110
      %v1427 = vpop.permute.xlu0 %1426
      %1428 = vrot.lane.b32.xlu0 %v1329, 110
      %v1429 = vpop.permute.xlu0 %1428
      %1430 = vrot.lane.b32.xlu0 %v1330, 110
      %v1431 = vpop.permute.xlu0 %1430
      %1432 = vrot.lane.b32.xlu0 %v1331, 110
      %v1433 = vpop.permute.xlu0 %1432
      %1434 = vrot.lane.b32.xlu0 %v1332, 110
      %v1435 = vpop.permute.xlu0 %1434
      %1436 = vrot.lane.b32.xlu0 %v1333, 110
      %v1437 = vpop.permute.xlu0 %1436
      %1438 = vrot.lane.b32.xlu0 %v1334, 110
      %v1439 = vpop.permute.xlu0 %1438
      %1440 = vrot.lane.b32.xlu0 %v1335, 110
      %v1441 = vpop.permute.xlu0 %1440
      %1442 = vrot.lane.b32.xlu0 %v1336, 110
      %v1443 = vpop.permute.xlu0 %1442
      %1444 = vrot.lane.b32.xlu0 %v1337, 110
      %v1445 = vpop.permute.xlu0 %1444
      %v1446 = vsel %vm705, %v1427, %v1429
      %v1447 = vsel %vm705, %v1429, %v1431
      %v1448 = vsel %vm705, %v1431, %v1433
      %v1449 = vsel %vm705, %v1433, %v1435
      %v1450 = vsel %vm705, %v1435, %v1437
      %v1451 = vsel %vm705, %v1437, %v1439
      %v1452 = vsel %vm705, %v1439, %v1441
      %v1453 = vsel %vm705, %v1441, %v1443
      %v1454 = vsel %vm705, %v1443, %v1445
      %1465 = vrot.lane.b32.xlu0 %v1328, 109
      %v1466 = vpop.permute.xlu0 %1465
      %1467 = vrot.lane.b32.xlu0 %v1329, 109
      %v1468 = vpop.permute.xlu0 %1467
      %1469 = vrot.lane.b32.xlu0 %v1330, 109
      %v1470 = vpop.permute.xlu0 %1469
      %1471 = vrot.lane.b32.xlu0 %v1331, 109
      %v1472 = vpop.permute.xlu0 %1471
      %1473 = vrot.lane.b32.xlu0 %v1332, 109
      %v1474 = vpop.permute.xlu0 %1473
      %1475 = vrot.lane.b32.xlu0 %v1333, 109
      %v1476 = vpop.permute.xlu0 %1475
      %1477 = vrot.lane.b32.xlu0 %v1334, 109
      %v1478 = vpop.permute.xlu0 %1477
      %1479 = vrot.lane.b32.xlu0 %v1335, 109
      %v1480 = vpop.permute.xlu0 %1479
      %1481 = vrot.lane.b32.xlu0 %v1336, 109
      %v1482 = vpop.permute.xlu0 %1481
      %1483 = vrot.lane.b32.xlu0 %v1337, 109
      %v1484 = vpop.permute.xlu0 %1483
      %v1485 = vsel %vm745, %v1466, %v1468
      %v1486 = vsel %vm745, %v1468, %v1470
      %v1487 = vsel %vm745, %v1470, %v1472
      %v1488 = vsel %vm745, %v1472, %v1474
      %v1489 = vsel %vm745, %v1474, %v1476
      %v1490 = vsel %vm745, %v1476, %v1478
      %v1491 = vsel %vm745, %v1478, %v1480
      %v1492 = vsel %vm745, %v1480, %v1482
      %v1493 = vsel %vm745, %v1482, %v1484
      %1504 = vrot.lane.b32.xlu0 %v1328, 108
      %v1505 = vpop.permute.xlu0 %1504
      %1506 = vrot.lane.b32.xlu0 %v1329, 108
      %v1507 = vpop.permute.xlu0 %1506
      %1508 = vrot.lane.b32.xlu0 %v1330, 108
      %v1509 = vpop.permute.xlu0 %1508
      %1510 = vrot.lane.b32.xlu0 %v1331, 108
      %v1511 = vpop.permute.xlu0 %1510
      %1512 = vrot.lane.b32.xlu0 %v1332, 108
      %v1513 = vpop.permute.xlu0 %1512
      %1514 = vrot.lane.b32.xlu0 %v1333, 108
      %v1515 = vpop.permute.xlu0 %1514
      %1516 = vrot.lane.b32.xlu0 %v1334, 108
      %v1517 = vpop.permute.xlu0 %1516
      %1518 = vrot.lane.b32.xlu0 %v1335, 108
      %v1519 = vpop.permute.xlu0 %1518
      %1520 = vrot.lane.b32.xlu0 %v1336, 108
      %v1521 = vpop.permute.xlu0 %1520
      %1522 = vrot.lane.b32.xlu0 %v1337, 108
      %v1523 = vpop.permute.xlu0 %1522
      %v1524 = vsel %vm785, %v1505, %v1507
      %v1525 = vsel %vm785, %v1507, %v1509
      %v1526 = vsel %vm785, %v1509, %v1511
      %v1527 = vsel %vm785, %v1511, %v1513
      %v1528 = vsel %vm785, %v1513, %v1515
      %v1529 = vsel %vm785, %v1515, %v1517
      %v1530 = vsel %vm785, %v1517, %v1519
      %v1531 = vsel %vm785, %v1519, %v1521
      %v1532 = vsel %vm785, %v1521, %v1523
      %1543 = vrot.lane.b32.xlu0 %v1328, 92
      %v1544 = vpop.permute.xlu0 %1543
      %1545 = vrot.lane.b32.xlu0 %v1329, 92
      %v1546 = vpop.permute.xlu0 %1545
      %1547 = vrot.lane.b32.xlu0 %v1330, 92
      %v1548 = vpop.permute.xlu0 %1547
      %1549 = vrot.lane.b32.xlu0 %v1331, 92
      %v1550 = vpop.permute.xlu0 %1549
      %1551 = vrot.lane.b32.xlu0 %v1332, 92
      %v1552 = vpop.permute.xlu0 %1551
      %1553 = vrot.lane.b32.xlu0 %v1333, 92
      %v1554 = vpop.permute.xlu0 %1553
      %1555 = vrot.lane.b32.xlu0 %v1334, 92
      %v1556 = vpop.permute.xlu0 %1555
      %1557 = vrot.lane.b32.xlu0 %v1335, 92
      %v1558 = vpop.permute.xlu0 %1557
      %1559 = vrot.lane.b32.xlu0 %v1336, 92
      %v1560 = vpop.permute.xlu0 %1559
      %1561 = vrot.lane.b32.xlu0 %v1337, 92
      %v1562 = vpop.permute.xlu0 %1561
      %v1563 = vsel %vm828, %v1544, %v1546
      %v1564 = vsel %vm828, %v1546, %v1548
      %v1565 = vsel %vm828, %v1548, %v1550
      %v1566 = vsel %vm828, %v1550, %v1552
      %v1567 = vsel %vm828, %v1552, %v1554
      %v1568 = vsel %vm828, %v1554, %v1556
      %v1569 = vsel %vm828, %v1556, %v1558
      %v1570 = vsel %vm828, %v1558, %v1560
      %v1571 = vsel %vm828, %v1560, %v1562
      %1582 = vrot.lane.b32.xlu0 %v1328, 91
      %v1583 = vpop.permute.xlu0 %1582
      %1584 = vrot.lane.b32.xlu0 %v1329, 91
      %v1585 = vpop.permute.xlu0 %1584
      %1586 = vrot.lane.b32.xlu0 %v1330, 91
      %v1587 = vpop.permute.xlu0 %1586
      %1588 = vrot.lane.b32.xlu0 %v1331, 91
      %v1589 = vpop.permute.xlu0 %1588
      %1590 = vrot.lane.b32.xlu0 %v1332, 91
      %v1591 = vpop.permute.xlu0 %1590
      %1592 = vrot.lane.b32.xlu0 %v1333, 91
      %v1593 = vpop.permute.xlu0 %1592
      %1594 = vrot.lane.b32.xlu0 %v1334, 91
      %v1595 = vpop.permute.xlu0 %1594
      %1596 = vrot.lane.b32.xlu0 %v1335, 91
      %v1597 = vpop.permute.xlu0 %1596
      %1598 = vrot.lane.b32.xlu0 %v1336, 91
      %v1599 = vpop.permute.xlu0 %1598
      %1600 = vrot.lane.b32.xlu0 %v1337, 91
      %v1601 = vpop.permute.xlu0 %1600
      %v1602 = vsel %vm871, %v1583, %v1585
      %v1603 = vsel %vm871, %v1585, %v1587
      %v1604 = vsel %vm871, %v1587, %v1589
      %v1605 = vsel %vm871, %v1589, %v1591
      %v1606 = vsel %vm871, %v1591, %v1593
      %v1607 = vsel %vm871, %v1593, %v1595
      %v1608 = vsel %vm871, %v1595, %v1597
      %v1609 = vsel %vm871, %v1597, %v1599
      %v1610 = vsel %vm871, %v1599, %v1601
      %1621 = vrot.lane.b32.xlu0 %v1328, 90
      %v1622 = vpop.permute.xlu0 %1621
      %1623 = vrot.lane.b32.xlu0 %v1329, 90
      %v1624 = vpop.permute.xlu0 %1623
      %1625 = vrot.lane.b32.xlu0 %v1330, 90
      %v1626 = vpop.permute.xlu0 %1625
      %1627 = vrot.lane.b32.xlu0 %v1331, 90
      %v1628 = vpop.permute.xlu0 %1627
      %1629 = vrot.lane.b32.xlu0 %v1332, 90
      %v1630 = vpop.permute.xlu0 %1629
      %1631 = vrot.lane.b32.xlu0 %v1333, 90
      %v1632 = vpop.permute.xlu0 %1631
      %1633 = vrot.lane.b32.xlu0 %v1334, 90
      %v1634 = vpop.permute.xlu0 %1633
      %1635 = vrot.lane.b32.xlu0 %v1335, 90
      %v1636 = vpop.permute.xlu0 %1635
      %1637 = vrot.lane.b32.xlu0 %v1336, 90
      %v1638 = vpop.permute.xlu0 %1637
      %1639 = vrot.lane.b32.xlu0 %v1337, 90
      %v1640 = vpop.permute.xlu0 %1639
      %v1641 = vsel %vm914, %v1622, %v1624
      %v1642 = vsel %vm914, %v1624, %v1626
      %v1643 = vsel %vm914, %v1626, %v1628
      %v1644 = vsel %vm914, %v1628, %v1630
      %v1645 = vsel %vm914, %v1630, %v1632
      %v1646 = vsel %vm914, %v1632, %v1634
      %v1647 = vsel %vm914, %v1634, %v1636
      %v1648 = vsel %vm914, %v1636, %v1638
      %v1649 = vsel %vm914, %v1638, %v1640
      %v1660 = vpack.c.bf16 %v1368, %v1328
      %v1661 = vpack.c.bf16 %v1369, %v1329
      %v1662 = vpack.c.bf16 %v1370, %v1330
      %v1663 = vpack.c.bf16 %v1371, %v1331
      %v1664 = vpack.c.bf16 %v1372, %v1332
      %v1665 = vpack.c.bf16 %v1373, %v1333
      %v1666 = vpack.c.bf16 %v1374, %v1334
      %v1667 = vpack.c.bf16 %v1375, %v1335
      %v1668 = vpack.c.bf16 %v1376, %v1336
      %v1669 = vpack.c.bf16 %v1367, %v1337
      %v1670 = vpack.c.bf16 %v1446, %v1407
      %v1671 = vpack.c.bf16 %v1447, %v1408
      %v1672 = vpack.c.bf16 %v1448, %v1409
      %v1673 = vpack.c.bf16 %v1449, %v1410
      %v1674 = vpack.c.bf16 %v1450, %v1411
      %v1675 = vpack.c.bf16 %v1451, %v1412
      %v1676 = vpack.c.bf16 %v1452, %v1413
      %v1677 = vpack.c.bf16 %v1453, %v1414
      %v1678 = vpack.c.bf16 %v1454, %v1415
      %v1679 = vpack.c.bf16 %v1445, %v1406
      %v1680 = vpack.c.bf16 %v1524, %v1485
      %v1681 = vpack.c.bf16 %v1525, %v1486
      %v1682 = vpack.c.bf16 %v1526, %v1487
      %v1683 = vpack.c.bf16 %v1527, %v1488
      %v1684 = vpack.c.bf16 %v1528, %v1489
      %v1685 = vpack.c.bf16 %v1529, %v1490
      %v1686 = vpack.c.bf16 %v1530, %v1491
      %v1687 = vpack.c.bf16 %v1531, %v1492
      %v1688 = vpack.c.bf16 %v1532, %v1493
      %v1689 = vpack.c.bf16 %v1523, %v1484
      %v1690 = vpack.c.bf16 %v1602, %v1563
      %v1691 = vpack.c.bf16 %v1603, %v1564
      %v1692 = vpack.c.bf16 %v1604, %v1565
      %v1693 = vpack.c.bf16 %v1605, %v1566
      %v1694 = vpack.c.bf16 %v1606, %v1567
      %v1695 = vpack.c.bf16 %v1607, %v1568
      %v1696 = vpack.c.bf16 %v1608, %v1569
      %v1697 = vpack.c.bf16 %v1609, %v1570
      %v1698 = vpack.c.bf16 %v1610, %v1571
      %v1699 = vpack.c.bf16 %v1601, %v1562
      %v1700 = vpack.c.bf16 %v1641, %v1641
      %v1701 = vpack.c.bf16 %v1642, %v1642
      %v1702 = vpack.c.bf16 %v1643, %v1643
      %v1703 = vpack.c.bf16 %v1644, %v1644
      %v1704 = vpack.c.bf16 %v1645, %v1645
      %v1705 = vpack.c.bf16 %v1646, %v1646
      %v1706 = vpack.c.bf16 %v1647, %v1647
      %v1707 = vpack.c.bf16 %v1648, %v1648
      %v1708 = vpack.c.bf16 %v1649, %v1649
      %v1709 = vpack.c.bf16 %v1640, %v1640
      %v1710 = vld [vmem:[%s5] sm:$0xf]
      %v1711 = vld [vmem:[%s6] sm:$0xff]
      %1713 = vset.pattern.permute.xlu0 0
      %1714 = vperm.xlu0 %1713, %v1711
      %v1715 = vpop.permute.xlu0 %1714
      %v1718 = vsel %vm992, %v1710, 0
      %v1721 = vsel %vm996, %v1700, 0
      %v1724 = vsel %vm996, %v1701, 0
      %v1727 = vsel %vm996, %v1702, 0
      %v1730 = vsel %vm996, %v1703, 0
      %v1733 = vsel %vm996, %v1704, 0
      %v1736 = vsel %vm996, %v1705, 0
      %v1739 = vsel %vm996, %v1706, 0
      %v1742 = vsel %vm996, %v1707, 0
      %v1745 = vsel %vm996, %v1708, 0
      %v1748 = vsel %vm996, %v1709, 0
      %1750 = vmatprep.subr.bf16.mxu0 %v1661
      %1751 = vmatpush1.bf16.msra.mxu0 %v1660
      %1752 = vmatprep.subr.bf16.mxu0 %v1671
      %1753 = vmatpush1.bf16.msra.mxu0 %v1670
      %1754 = vmatprep.subr.bf16.mxu0 %v1681
      %1755 = vmatpush1.bf16.msra.mxu0 %v1680
      %1756 = vmatprep.subr.bf16.mxu0 %v1691
      %1757 = vmatpush1.bf16.msra.mxu0 %v1690
      %1758 = vmatprep.subr.bf16.mxu0 %v1724
      %1759 = vmatpush1.bf16.msra.mxu0 %v1721
      %1760 = vmatprep.subr.bf16.mxu0 0
      %1761 = vmatpush1.bf16.msra.mxu0 0
      %1762 = vmatprep.subr.bf16.mxu0 0
      %1763 = vmatpush1.bf16.msra.mxu0 0
      %1764 = vmatprep.subr.bf16.mxu0 0
      %1765 = vmatpush1.bf16.msra.mxu0 0
      %1766 = vmatprep.subr.bf16.mxu0 0
      %1767 = vmatpush1.bf16.msra.mxu0 0
      %1768 = vmatprep.subr.bf16.mxu0 0
      %1769 = vmatpush1.bf16.msra.mxu0 0
      %1770 = vmatprep.subr.bf16.mxu0 0
      %1771 = vmatpush1.bf16.msra.mxu0 0
      %1772 = vmatprep.subr.bf16.mxu0 0
      %1773 = vmatpush1.bf16.msra.mxu0 0
      %1774 = vmatprep.subr.bf16.mxu0 0
      %1775 = vmatpush1.bf16.msra.mxu0 0
      %1776 = vmatprep.subr.bf16.mxu0 0
      %1777 = vmatpush1.bf16.msra.mxu0 0
      %1778 = vmatprep.subr.bf16.mxu0 0
      %1779 = vmatpush1.bf16.msra.mxu0 0
      %1780 = vmatprep.subr.bf16.mxu0 0
      %1781 = vmatpush1.bf16.msra.mxu0 0
      %1782 = vmatprep.mubr.bf16.mxu0 0
      %1783 = vmatmul.mubr.bf16.gmra.mrb[0].mxu0 %v1718
      %v1784 = vpop.f32.mrb[0].mxu0
      %v1785 = vadd.f32 %v1715, %v1784
      %v1786 = vpop.f32.mrb[0].mxu0
      %v1787 = vadd.f32 %v1715, %v1786
      %v1788 = vpop.f32.mrb[0].mxu0
      %v1789 = vpop.f32.mrb[0].mxu0
      %1790 = vdwg.mxu0
      %1791 = vmatprep.subr.bf16.mxu0 %v1663
      %1792 = vmatpush1.bf16.msra.mxu0 %v1662
      %1793 = vmatprep.subr.bf16.mxu0 %v1673
      %1794 = vmatpush1.bf16.msra.mxu0 %v1672
      %1795 = vmatprep.subr.bf16.mxu0 %v1683
      %1796 = vmatpush1.bf16.msra.mxu0 %v1682
      %1797 = vmatprep.subr.bf16.mxu0 %v1693
      %1798 = vmatpush1.bf16.msra.mxu0 %v1692
      %1799 = vmatprep.subr.bf16.mxu0 %v1730
      %1800 = vmatpush1.bf16.msra.mxu0 %v1727
      %1801 = vmatprep.subr.bf16.mxu0 0
      %1802 = vmatpush1.bf16.msra.mxu0 0
      %1803 = vmatprep.subr.bf16.mxu0 0
      %1804 = vmatpush1.bf16.msra.mxu0 0
      %1805 = vmatprep.subr.bf16.mxu0 0
      %1806 = vmatpush1.bf16.msra.mxu0 0
      %1807 = vmatprep.subr.bf16.mxu0 0
      %1808 = vmatpush1.bf16.msra.mxu0 0
      %1809 = vmatprep.subr.bf16.mxu0 0
      %1810 = vmatpush1.bf16.msra.mxu0 0
      %1811 = vmatprep.subr.bf16.mxu0 0
      %1812 = vmatpush1.bf16.msra.mxu0 0
      %1813 = vmatprep.subr.bf16.mxu0 0
      %1814 = vmatpush1.bf16.msra.mxu0 0
      %1815 = vmatprep.subr.bf16.mxu0 0
      %1816 = vmatpush1.bf16.msra.mxu0 0
      %1817 = vmatprep.subr.bf16.mxu0 0
      %1818 = vmatpush1.bf16.msra.mxu0 0
      %1819 = vmatprep.subr.bf16.mxu0 0
      %1820 = vmatpush1.bf16.msra.mxu0 0
      %1821 = vmatprep.subr.bf16.mxu0 0
      %1822 = vmatpush1.bf16.msra.mxu0 0
      %1823 = vmatprep.mubr.bf16.mxu0 0
      %1824 = vmatmul.mubr.bf16.gmra.mrb[0].mxu0 %v1718
      %v1825 = vpop.f32.mrb[0].mxu0
      %v1826 = vadd.f32 %v1715, %v1825
      %v1827 = vpop.f32.mrb[0].mxu0
      %v1828 = vadd.f32 %v1715, %v1827
      %v1829 = vpop.f32.mrb[0].mxu0
      %v1830 = vpop.f32.mrb[0].mxu0
      %1831 = vdwg.mxu0
      %1832 = vmatprep.subr.bf16.mxu0 %v1665
      %1833 = vmatpush1.bf16.msra.mxu0 %v1664
      %1834 = vmatprep.subr.bf16.mxu0 %v1675
      %1835 = vmatpush1.bf16.msra.mxu0 %v1674
      %1836 = vmatprep.subr.bf16.mxu0 %v1685
      %1837 = vmatpush1.bf16.msra.mxu0 %v1684
      %1838 = vmatprep.subr.bf16.mxu0 %v1695
      %1839 = vmatpush1.bf16.msra.mxu0 %v1694
      %1840 = vmatprep.subr.bf16.mxu0 %v1736
      %1841 = vmatpush1.bf16.msra.mxu0 %v1733
      %1842 = vmatprep.subr.bf16.mxu0 0
      %1843 = vmatpush1.bf16.msra.mxu0 0
      %1844 = vmatprep.subr.bf16.mxu0 0
      %1845 = vmatpush1.bf16.msra.mxu0 0
      %1846 = vmatprep.subr.bf16.mxu0 0
      %1847 = vmatpush1.bf16.msra.mxu0 0
      %1848 = vmatprep.subr.bf16.mxu0 0
      %1849 = vmatpush1.bf16.msra.mxu0 0
      %1850 = vmatprep.subr.bf16.mxu0 0
      %1851 = vmatpush1.bf16.msra.mxu0 0
      %1852 = vmatprep.subr.bf16.mxu0 0
      %1853 = vmatpush1.bf16.msra.mxu0 0
      %1854 = vmatprep.subr.bf16.mxu0 0
      %1855 = vmatpush1.bf16.msra.mxu0 0
      %1856 = vmatprep.subr.bf16.mxu0 0
      %1857 = vmatpush1.bf16.msra.mxu0 0
      %1858 = vmatprep.subr.bf16.mxu0 0
      %1859 = vmatpush1.bf16.msra.mxu0 0
      %1860 = vmatprep.subr.bf16.mxu0 0
      %1861 = vmatpush1.bf16.msra.mxu0 0
      %1862 = vmatprep.subr.bf16.mxu0 0
      %1863 = vmatpush1.bf16.msra.mxu0 0
      %1864 = vmatprep.mubr.bf16.mxu0 0
      %1865 = vmatmul.mubr.bf16.gmra.mrb[0].mxu0 %v1718
      %v1866 = vpop.f32.mrb[0].mxu0
      %v1867 = vadd.f32 %v1715, %v1866
      %v1868 = vpop.f32.mrb[0].mxu0
      %v1869 = vadd.f32 %v1715, %v1868
      %v1870 = vpop.f32.mrb[0].mxu0
      %v1871 = vpop.f32.mrb[0].mxu0
      %1872 = vdwg.mxu0
      %1873 = vmatprep.subr.bf16.mxu0 %v1667
      %1874 = vmatpush1.bf16.msra.mxu0 %v1666
      %1875 = vmatprep.subr.bf16.mxu0 %v1677
      %1876 = vmatpush1.bf16.msra.mxu0 %v1676
      %1877 = vmatprep.subr.bf16.mxu0 %v1687
      %1878 = vmatpush1.bf16.msra.mxu0 %v1686
      %1879 = vmatprep.subr.bf16.mxu0 %v1697
      %1880 = vmatpush1.bf16.msra.mxu0 %v1696
      %1881 = vmatprep.subr.bf16.mxu0 %v1742
      %1882 = vmatpush1.bf16.msra.mxu0 %v1739
      %1883 = vmatprep.subr.bf16.mxu0 0
      %1884 = vmatpush1.bf16.msra.mxu0 0
      %1885 = vmatprep.subr.bf16.mxu0 0
      %1886 = vmatpush1.bf16.msra.mxu0 0
      %1887 = vmatprep.subr.bf16.mxu0 0
      %1888 = vmatpush1.bf16.msra.mxu0 0
      %1889 = vmatprep.subr.bf16.mxu0 0
      %1890 = vmatpush1.bf16.msra.mxu0 0
      %1891 = vmatprep.subr.bf16.mxu0 0
      %1892 = vmatpush1.bf16.msra.mxu0 0
      %1893 = vmatprep.subr.bf16.mxu0 0
      %1894 = vmatpush1.bf16.msra.mxu0 0
      %1895 = vmatprep.subr.bf16.mxu0 0
      %1896 = vmatpush1.bf16.msra.mxu0 0
      %1897 = vmatprep.subr.bf16.mxu0 0
      %1898 = vmatpush1.bf16.msra.mxu0 0
      %1899 = vmatprep.subr.bf16.mxu0 0
      %1900 = vmatpush1.bf16.msra.mxu0 0
      %1901 = vmatprep.subr.bf16.mxu0 0
      %1902 = vmatpush1.bf16.msra.mxu0 0
      %1903 = vmatprep.subr.bf16.mxu0 0
      %1904 = vmatpush1.bf16.msra.mxu0 0
      %1905 = vmatprep.mubr.bf16.mxu0 0
      %1906 = vmatmul.mubr.bf16.gmra.mrb[0].mxu0 %v1718
      %v1907 = vpop.f32.mrb[0].mxu0
      %v1908 = vadd.f32 %v1715, %v1907
      %v1909 = vpop.f32.mrb[0].mxu0
      %v1910 = vadd.f32 %v1715, %v1909
      %v1911 = vpop.f32.mrb[0].mxu0
      %v1912 = vpop.f32.mrb[0].mxu0
      %1913 = vdwg.mxu0
      %1914 = vmatprep.subr.bf16.mxu0 %v1669
      %1915 = vmatpush1.bf16.msra.mxu0 %v1668
      %1916 = vmatprep.subr.bf16.mxu0 %v1679
      %1917 = vmatpush1.bf16.msra.mxu0 %v1678
      %1918 = vmatprep.subr.bf16.mxu0 %v1689
      %1919 = vmatpush1.bf16.msra.mxu0 %v1688
      %1920 = vmatprep.subr.bf16.mxu0 %v1699
      %1921 = vmatpush1.bf16.msra.mxu0 %v1698
      %1922 = vmatprep.subr.bf16.mxu0 %v1748
      %1923 = vmatpush1.bf16.msra.mxu0 %v1745
      %1924 = vmatprep.subr.bf16.mxu0 0
      %1925 = vmatpush1.bf16.msra.mxu0 0
      %1926 = vmatprep.subr.bf16.mxu0 0
      %1927 = vmatpush1.bf16.msra.mxu0 0
      %1928 = vmatprep.subr.bf16.mxu0 0
      %1929 = vmatpush1.bf16.msra.mxu0 0
      %1930 = vmatprep.subr.bf16.mxu0 0
      %1931 = vmatpush1.bf16.msra.mxu0 0
      %1932 = vmatprep.subr.bf16.mxu0 0
      %1933 = vmatpush1.bf16.msra.mxu0 0
      %1934 = vmatprep.subr.bf16.mxu0 0
      %1935 = vmatpush1.bf16.msra.mxu0 0
      %1936 = vmatprep.subr.bf16.mxu0 0
      %1937 = vmatpush1.bf16.msra.mxu0 0
      %1938 = vmatprep.subr.bf16.mxu0 0
      %1939 = vmatpush1.bf16.msra.mxu0 0
      %1940 = vmatprep.subr.bf16.mxu0 0
      %1941 = vmatpush1.bf16.msra.mxu0 0
      %1942 = vmatprep.subr.bf16.mxu0 0
      %1943 = vmatpush1.bf16.msra.mxu0 0
      %1944 = vmatprep.subr.bf16.mxu0 0
      %1945 = vmatpush1.bf16.msra.mxu0 0
      %1946 = vmatprep.mubr.bf16.mxu0 0
      %1947 = vmatmul.mubr.bf16.gmra.mrb[0].mxu0 %v1718
      %v1948 = vpop.f32.mrb[0].mxu0
      %v1949 = vadd.f32 %v1715, %v1948
      %v1950 = vpop.f32.mrb[0].mxu0
      %v1951 = vadd.f32 %v1715, %v1950
      %v1952 = vpop.f32.mrb[0].mxu0
      %v1953 = vpop.f32.mrb[0].mxu0
      %1954 = vdwg.mxu0
      %v1955 = vtanh.pop %v1785
      %v1956 = vtanh.pop %v1787
      %v1957 = vtanh.pop %v1826
      %v1958 = vtanh.pop %v1828
      %v1959 = vtanh.pop %v1867
      %v1960 = vtanh.pop %v1869
      %v1961 = vtanh.pop %v1908
      %v1962 = vtanh.pop %v1910
      %v1963 = vtanh.pop %v1949
      %v1964 = vtanh.pop %v1951
      %v1965 = vld [vmem:[%s465] sm:$0xff]
      %v1966 = vld [vmem:[%s465 + $0x8] sm:$0x3]
      %v1969 = vlaneseq
      %v1970 = vshrl.u32 %v1969, 7
      %v1971 = vsub.s32 0, %v1970
      %v1972 = vrot.slane %v1965, %v1971
      %v1973 = vlaneseq
      %v1974 = vshrl.u32 %v1973, 7
      %v1975 = vsub.s32 1, %v1974
      %v1976 = vrot.slane %v1965, %v1975
      %v1977 = vlaneseq
      %v1978 = vshrl.u32 %v1977, 7
      %v1979 = vsub.s32 2, %v1978
      %v1980 = vrot.slane %v1965, %v1979
      %v1981 = vlaneseq
      %v1982 = vshrl.u32 %v1981, 7
      %v1983 = vsub.s32 3, %v1982
      %v1984 = vrot.slane %v1965, %v1983
      %v1985 = vlaneseq
      %v1986 = vshrl.u32 %v1985, 7
      %v1987 = vsub.s32 4, %v1986
      %v1988 = vrot.slane %v1965, %v1987
      %v1989 = vlaneseq
      %v1990 = vshrl.u32 %v1989, 7
      %v1991 = vsub.s32 5, %v1990
      %v1992 = vrot.slane %v1965, %v1991
      %v1993 = vlaneseq
      %v1994 = vshrl.u32 %v1993, 7
      %v1995 = vsub.s32 6, %v1994
      %v1996 = vrot.slane %v1965, %v1995
      %v1997 = vlaneseq
      %v1998 = vshrl.u32 %v1997, 7
      %v1999 = vsub.s32 7, %v1998
      %v2000 = vrot.slane %v1965, %v1999
      %v2001 = vlaneseq
      %v2002 = vshrl.u32 %v2001, 7
      %v2003 = vsub.s32 0, %v2002
      %v2004 = vrot.slane %v1966, %v2003
      %v2005 = vlaneseq
      %v2006 = vshrl.u32 %v2005, 7
      %v2007 = vsub.s32 1, %v2006
      %v2008 = vrot.slane %v1966, %v2007
      %v2019 = vmul.f32 %v1972, %v1955
      %v2020 = vmul.f32 %v1976, %v1956
      %v2021 = vmul.f32 %v1980, %v1957
      %v2022 = vmul.f32 %v1984, %v1958
      %v2023 = vmul.f32 %v1988, %v1959
      %v2024 = vmul.f32 %v1992, %v1960
      %v2025 = vmul.f32 %v1996, %v1961
      %v2026 = vmul.f32 %v2000, %v1962
      %v2027 = vmul.f32 %v2004, %v1963
      %v2028 = vmul.f32 %v2008, %v1964
      %v2029 = vtanh.pop %v2019
      %v2030 = vtanh.pop %v2020
      %v2031 = vtanh.pop %v2021
      %v2032 = vtanh.pop %v2022
      %v2033 = vtanh.pop %v2023
      %v2034 = vtanh.pop %v2024
      %v2035 = vtanh.pop %v2025
      %v2036 = vtanh.pop %v2026
      %v2037 = vtanh.pop %v2027
      %v2038 = vtanh.pop %v2028
      %v2039 = vpack.c.bf16 %v2029, %v2029
      %v2040 = vpack.c.bf16 %v2030, %v2030
      %v2041 = vpack.c.bf16 %v2031, %v2031
      %v2042 = vpack.c.bf16 %v2032, %v2032
      %v2043 = vpack.c.bf16 %v2033, %v2033
      %v2044 = vpack.c.bf16 %v2034, %v2034
      %v2045 = vpack.c.bf16 %v2035, %v2035
      %v2046 = vpack.c.bf16 %v2036, %v2036
      %v2047 = vpack.c.bf16 %v2037, %v2037
      %v2048 = vpack.c.bf16 %v2038, %v2038
      %v2049 = vld [vmem:[%s11] sm:$0xff]
      %v2050 = vld [vmem:[%s11 + $0x8] sm:$0xf]
      %v2051 = vld [vmem:[%s11 + $0xc] sm:$0xff]
      %v2052 = vld [vmem:[%s11 + $0x14] sm:$0xf]
      %v2053 = vld [vmem:[%s11 + $0x18] sm:$0xff]
      %v2054 = vld [vmem:[%s11 + $0x20] sm:$0xf]
      %v2055 = vld [vmem:[%s11 + $0x24] sm:$0xff]
      %v2056 = vld [vmem:[%s11 + $0x2c] sm:$0xf]
      %v2057 = vld [vmem:[%s11 + $0x30] sm:$0xff]
      %v2058 = vld [vmem:[%s11 + $0x38] sm:$0xf]
      %v2059 = vld [vmem:[%s11 + $0x3c] sm:$0xff]
      %v2060 = vld [vmem:[%s11 + $0x44] sm:$0xf]
      %v2061 = vld [vmem:[%s11 + $0x48] sm:$0xff]
      %v2062 = vld [vmem:[%s11 + $0x50] sm:$0xf]
      %v2063 = vld [vmem:[%s11 + $0x54] sm:$0xff]
      %v2064 = vld [vmem:[%s11 + $0x5c] sm:$0xf]
      %v2065 = vld [vmem:[%s11 + $0x60] sm:$0xff]
      %v2066 = vld [vmem:[%s11 + $0x68] sm:$0xf]
      %v2067 = vld [vmem:[%s11 + $0x6c] sm:$0xff]
      %v2068 = vld [vmem:[%s11 + $0x74] sm:$0xf]
      %v2069 = vld [vmem:[%s11 + $0x78] sm:$0xff]
      %v2070 = vld [vmem:[%s11 + $0x80] sm:$0xf]
      %v2071 = vld [vmem:[%s11 + $0x84] sm:$0xff]
      %v2072 = vld [vmem:[%s11 + $0x8c] sm:$0xf]
      %v2073 = vld [vmem:[%s11 + $0x90] sm:$0xff]
      %v2074 = vld [vmem:[%s11 + $0x98] sm:$0xf]
      %v2075 = vld [vmem:[%s11 + $0x9c] sm:$0xff]
      %v2076 = vld [vmem:[%s11 + $0xa4] sm:$0xf]
      %v2077 = vld [vmem:[%s11 + $0xa8] sm:$0xff]
      %v2078 = vld [vmem:[%s11 + $0xb0] sm:$0xf]
      %v2079 = vld [vmem:[%s11 + $0xb4] sm:$0xff]
      %v2080 = vld [vmem:[%s11 + $0xbc] sm:$0xf]
      %v2081 = vld [vmem:[%s11 + $0xc0] sm:$0xff]
      %v2082 = vld [vmem:[%s11 + $0xc8] sm:$0xf]
      %v2083 = vld [vmem:[%s11 + $0xcc] sm:$0xff]
      %v2084 = vld [vmem:[%s11 + $0xd4] sm:$0xf]
      %v2085 = vld [vmem:[%s11 + $0xd8] sm:$0xff]
      %v2086 = vld [vmem:[%s11 + $0xe0] sm:$0xf]
      %v2087 = vld [vmem:[%s11 + $0xe4] sm:$0xff]
      %v2088 = vld [vmem:[%s11 + $0xec] sm:$0xf]
      %v2089 = vld [vmem:[%s11 + $0xf0] sm:$0xff]
      %v2090 = vld [vmem:[%s11 + $0xf8] sm:$0xf]
      %v2091 = vld [vmem:[%s11 + $0xfc] sm:$0xff]
      %v2092 = vld [vmem:[%s11 + $0x104] sm:$0xf]
      %v2093 = vld [vmem:[%s11 + $0x108] sm:$0xff]
      %v2094 = vld [vmem:[%s11 + $0x110] sm:$0xf]
      %v2095 = vld [vmem:[%s11 + $0x114] sm:$0xff]
      %v2096 = vld [vmem:[%s11 + $0x11c] sm:$0xf]
      %v2097 = vld [vmem:[%s11 + $0x120] sm:$0xff]
      %v2098 = vld [vmem:[%s11 + $0x128] sm:$0xf]
      %v2099 = vld [vmem:[%s11 + $0x12c] sm:$0xff]
      %v2100 = vld [vmem:[%s11 + $0x134] sm:$0xf]
      %v2101 = vld [vmem:[%s11 + $0x138] sm:$0xff]
      %v2102 = vld [vmem:[%s11 + $0x140] sm:$0xf]
      %v2103 = vld [vmem:[%s11 + $0x144] sm:$0xff]
      %v2104 = vld [vmem:[%s11 + $0x14c] sm:$0xf]
      %v2105 = vld [vmem:[%s11 + $0x150] sm:$0xff]
      %v2106 = vld [vmem:[%s11 + $0x158] sm:$0xf]
      %v2107 = vld [vmem:[%s11 + $0x15c] sm:$0xff]
      %v2108 = vld [vmem:[%s11 + $0x164] sm:$0xf]
      %v2109 = vld [vmem:[%s11 + $0x168] sm:$0xff]
      %v2110 = vld [vmem:[%s11 + $0x170] sm:$0xf]
      %v2111 = vld [vmem:[%s11 + $0x174] sm:$0xff]
      %v2112 = vld [vmem:[%s11 + $0x17c] sm:$0xf]
      %v2113 = vld [vmem:[%s11 + $0x180] sm:$0xff]
      %v2114 = vld [vmem:[%s11 + $0x188] sm:$0xf]
      %v2115 = vld [vmem:[%s11 + $0x18c] sm:$0xff]
      %v2116 = vld [vmem:[%s11 + $0x194] sm:$0xf]
      %v2117 = vld [vmem:[%s11 + $0x198] sm:$0xff]
      %v2118 = vld [vmem:[%s11 + $0x1a0] sm:$0xf]
      %v2119 = vld [vmem:[%s11 + $0x1a4] sm:$0xff]
      %v2120 = vld [vmem:[%s11 + $0x1ac] sm:$0xf]
      %v2121 = vld [vmem:[%s11 + $0x1b0] sm:$0xff]
      %v2122 = vld [vmem:[%s11 + $0x1b8] sm:$0xf]
      %v2123 = vld [vmem:[%s11 + $0x1bc] sm:$0xff]
      %v2124 = vld [vmem:[%s11 + $0x1c4] sm:$0xf]
      %v2125 = vld [vmem:[%s11 + $0x1c8] sm:$0xff]
      %v2126 = vld [vmem:[%s11 + $0x1d0] sm:$0xf]
      %v2127 = vld [vmem:[%s11 + $0x1d4] sm:$0xff]
      %v2128 = vld [vmem:[%s11 + $0x1dc] sm:$0xf]
      %v2129 = vld [vmem:[%s11 + $0x1e0] sm:$0xff]
      %v2130 = vld [vmem:[%s11 + $0x1e8] sm:$0xf]
      %v2131 = vld [vmem:[%s11 + $0x1ec] sm:$0xff]
      %v2132 = vld [vmem:[%s11 + $0x1f4] sm:$0xf]
      %v2133 = vld [vmem:[%s11 + $0x1f8] sm:$0xff]
      %v2134 = vld [vmem:[%s11 + $0x200] sm:$0xf]
      %v2135 = vld [vmem:[%s11 + $0x204] sm:$0xff]
      %v2136 = vld [vmem:[%s11 + $0x20c] sm:$0xf]
      %v2137 = vld [vmem:[%s11 + $0x210] sm:$0xff]
      %v2138 = vld [vmem:[%s11 + $0x218] sm:$0xf]
      %v2139 = vld [vmem:[%s11 + $0x21c] sm:$0xff]
      %v2140 = vld [vmem:[%s11 + $0x224] sm:$0xf]
      %v2141 = vld [vmem:[%s11 + $0x228] sm:$0xff]
      %v2142 = vld [vmem:[%s11 + $0x230] sm:$0xf]
      %v2143 = vld [vmem:[%s11 + $0x234] sm:$0xff]
      %v2144 = vld [vmem:[%s11 + $0x23c] sm:$0xf]
      %v2145 = vld [vmem:[%s11 + $0x240] sm:$0xff]
      %v2146 = vld [vmem:[%s11 + $0x248] sm:$0xf]
      %v2147 = vld [vmem:[%s11 + $0x24c] sm:$0xff]
      %v2148 = vld [vmem:[%s11 + $0x254] sm:$0xf]
      %v2149 = vld [vmem:[%s11 + $0x258] sm:$0xff]
      %v2150 = vld [vmem:[%s11 + $0x260] sm:$0xf]
      %v2151 = vld [vmem:[%s11 + $0x264] sm:$0xff]
      %v2152 = vld [vmem:[%s11 + $0x26c] sm:$0xf]
      %v2153 = vld [vmem:[%s11 + $0x270] sm:$0xff]
      %v2154 = vld [vmem:[%s11 + $0x278] sm:$0xf]
      %v2155 = vld [vmem:[%s11 + $0x27c] sm:$0xff]
      %v2156 = vld [vmem:[%s11 + $0x284] sm:$0xf]
      %v2157 = vld [vmem:[%s11 + $0x288] sm:$0xff]
      %v2158 = vld [vmem:[%s11 + $0x290] sm:$0xf]
      %v2159 = vld [vmem:[%s11 + $0x294] sm:$0xff]
      %v2160 = vld [vmem:[%s11 + $0x29c] sm:$0xf]
      %v2161 = vld [vmem:[%s11 + $0x2a0] sm:$0xff]
      %v2162 = vld [vmem:[%s11 + $0x2a8] sm:$0xf]
      %v2163 = vld [vmem:[%s11 + $0x2ac] sm:$0xff]
      %v2164 = vld [vmem:[%s11 + $0x2b4] sm:$0xf]
      %v2165 = vld [vmem:[%s11 + $0x2b8] sm:$0xff]
      %v2166 = vld [vmem:[%s11 + $0x2c0] sm:$0xf]
      %v2167 = vld [vmem:[%s11 + $0x2c4] sm:$0xff]
      %v2168 = vld [vmem:[%s11 + $0x2cc] sm:$0xf]
      %v2169 = vld [vmem:[%s11 + $0x2d0] sm:$0xff]
      %v2170 = vld [vmem:[%s11 + $0x2d8] sm:$0xf]
      %v2171 = vld [vmem:[%s11 + $0x2dc] sm:$0xff]
      %v2172 = vld [vmem:[%s11 + $0x2e4] sm:$0xf]
      %v2173 = vld [vmem:[%s11 + $0x2e8] sm:$0xff]
      %v2174 = vld [vmem:[%s11 + $0x2f0] sm:$0xf]
      %v2175 = vld [vmem:[%s11 + $0x2f4] sm:$0xff]
      %v2176 = vld [vmem:[%s11 + $0x2fc] sm:$0xf]
      %v2177 = vld [vmem:[%s11 + $0x300] sm:$0xff]
      %v2178 = vld [vmem:[%s11 + $0x308] sm:$0xf]
      %v2179 = vld [vmem:[%s11 + $0x30c] sm:$0xff]
      %v2180 = vld [vmem:[%s11 + $0x314] sm:$0xf]
      %v2181 = vld [vmem:[%s11 + $0x318] sm:$0xff]
      %v2182 = vld [vmem:[%s11 + $0x320] sm:$0xf]
      %v2183 = vld [vmem:[%s11 + $0x324] sm:$0xff]
      %v2184 = vld [vmem:[%s11 + $0x32c] sm:$0xf]
      %v2185 = vld [vmem:[%s11 + $0x330] sm:$0xff]
      %v2186 = vld [vmem:[%s11 + $0x338] sm:$0xf]
      %v2187 = vld [vmem:[%s11 + $0x33c] sm:$0xff]
      %v2188 = vld [vmem:[%s11 + $0x344] sm:$0xf]
      %v2189 = vld [vmem:[%s11 + $0x348] sm:$0xff]
      %v2190 = vld [vmem:[%s11 + $0x350] sm:$0xf]
      %v2191 = vld [vmem:[%s11 + $0x354] sm:$0xff]
      %v2192 = vld [vmem:[%s11 + $0x35c] sm:$0xf]
      %v2193 = vld [vmem:[%s11 + $0x360] sm:$0xff]
      %v2194 = vld [vmem:[%s11 + $0x368] sm:$0xf]
      %v2195 = vld [vmem:[%s11 + $0x36c] sm:$0xff]
      %v2196 = vld [vmem:[%s11 + $0x374] sm:$0xf]
      %v2197 = vld [vmem:[%s11 + $0x378] sm:$0xff]
      %v2198 = vld [vmem:[%s11 + $0x380] sm:$0xf]
      %v2199 = vld [vmem:[%s11 + $0x384] sm:$0xff]
      %v2200 = vld [vmem:[%s11 + $0x38c] sm:$0xf]
      %v2201 = vld [vmem:[%s11 + $0x390] sm:$0xff]
      %v2202 = vld [vmem:[%s11 + $0x398] sm:$0xf]
      %v2203 = vld [vmem:[%s11 + $0x39c] sm:$0xff]
      %v2204 = vld [vmem:[%s11 + $0x3a4] sm:$0xf]
      %v2205 = vld [vmem:[%s11 + $0x3a8] sm:$0xff]
      %v2206 = vld [vmem:[%s11 + $0x3b0] sm:$0xf]
      %v2207 = vld [vmem:[%s11 + $0x3b4] sm:$0xff]
      %v2208 = vld [vmem:[%s11 + $0x3bc] sm:$0xf]
      %v2209 = vld [vmem:[%s11 + $0x3c0] sm:$0xff]
      %v2210 = vld [vmem:[%s11 + $0x3c8] sm:$0xf]
      %v2211 = vld [vmem:[%s11 + $0x3cc] sm:$0xff]
      %v2212 = vld [vmem:[%s11 + $0x3d4] sm:$0xf]
      %v2213 = vld [vmem:[%s11 + $0x3d8] sm:$0xff]
      %v2214 = vld [vmem:[%s11 + $0x3e0] sm:$0xf]
      %v2215 = vld [vmem:[%s11 + $0x3e4] sm:$0xff]
      %v2216 = vld [vmem:[%s11 + $0x3ec] sm:$0xf]
      %v2217 = vld [vmem:[%s11 + $0x3f0] sm:$0xff]
      %v2218 = vld [vmem:[%s11 + $0x3f8] sm:$0xf]
      %v2219 = vld [vmem:[%s11 + $0x3fc] sm:$0xff]
      %v2220 = vld [vmem:[%s11 + $0x404] sm:$0xf]
      %v2221 = vld [vmem:[%s11 + $0x408] sm:$0xff]
      %v2222 = vld [vmem:[%s11 + $0x410] sm:$0xf]
      %v2223 = vld [vmem:[%s11 + $0x414] sm:$0xff]
      %v2224 = vld [vmem:[%s11 + $0x41c] sm:$0xf]
      %v2225 = vld [vmem:[%s11 + $0x420] sm:$0xff]
      %v2226 = vld [vmem:[%s11 + $0x428] sm:$0xf]
      %v2227 = vld [vmem:[%s11 + $0x42c] sm:$0xff]
      %v2228 = vld [vmem:[%s11 + $0x434] sm:$0xf]
      %v2229 = vld [vmem:[%s11 + $0x438] sm:$0xff]
      %v2230 = vld [vmem:[%s11 + $0x440] sm:$0xf]
      %v2231 = vld [vmem:[%s11 + $0x444] sm:$0xff]
      %v2232 = vld [vmem:[%s11 + $0x44c] sm:$0xf]
      %v2233 = vld [vmem:[%s11 + $0x450] sm:$0xff]
      %v2234 = vld [vmem:[%s11 + $0x458] sm:$0xf]
      %v2235 = vld [vmem:[%s11 + $0x45c] sm:$0xff]
      %v2236 = vld [vmem:[%s11 + $0x464] sm:$0xf]
      %v2237 = vld [vmem:[%s11 + $0x468] sm:$0xff]
      %v2238 = vld [vmem:[%s11 + $0x470] sm:$0xf]
      %v2239 = vld [vmem:[%s11 + $0x474] sm:$0xff]
      %v2240 = vld [vmem:[%s11 + $0x47c] sm:$0xf]
      %v2241 = vld [vmem:[%s11 + $0x480] sm:$0xff]
      %v2242 = vld [vmem:[%s11 + $0x488] sm:$0xf]
      %v2243 = vld [vmem:[%s11 + $0x48c] sm:$0xff]
      %v2244 = vld [vmem:[%s11 + $0x494] sm:$0xf]
      %v2245 = vld [vmem:[%s11 + $0x498] sm:$0xff]
      %v2246 = vld [vmem:[%s11 + $0x4a0] sm:$0xf]
      %v2247 = vld [vmem:[%s11 + $0x4a4] sm:$0xff]
      %v2248 = vld [vmem:[%s11 + $0x4ac] sm:$0xf]
      %v2249 = vld [vmem:[%s11 + $0x4b0] sm:$0xff]
      %v2250 = vld [vmem:[%s11 + $0x4b8] sm:$0xf]
      %v2251 = vld [vmem:[%s11 + $0x4bc] sm:$0xff]
      %v2252 = vld [vmem:[%s11 + $0x4c4] sm:$0xf]
      %v2253 = vld [vmem:[%s11 + $0x4c8] sm:$0xff]
      %v2254 = vld [vmem:[%s11 + $0x4d0] sm:$0xf]
      %v2255 = vld [vmem:[%s11 + $0x4d4] sm:$0xff]
      %v2256 = vld [vmem:[%s11 + $0x4dc] sm:$0xf]
      %v2257 = vld [vmem:[%s11 + $0x4e0] sm:$0xff]
      %v2258 = vld [vmem:[%s11 + $0x4e8] sm:$0xf]
      %v2259 = vld [vmem:[%s11 + $0x4ec] sm:$0xff]
      %v2260 = vld [vmem:[%s11 + $0x4f4] sm:$0xf]
      %v2261 = vld [vmem:[%s11 + $0x4f8] sm:$0xff]
      %v2262 = vld [vmem:[%s11 + $0x500] sm:$0xf]
      %v2263 = vld [vmem:[%s11 + $0x504] sm:$0xff]
      %v2264 = vld [vmem:[%s11 + $0x50c] sm:$0xf]
      %v2265 = vld [vmem:[%s11 + $0x510] sm:$0xff]
      %v2266 = vld [vmem:[%s11 + $0x518] sm:$0xf]
      %v2267 = vld [vmem:[%s11 + $0x51c] sm:$0xff]
      %v2268 = vld [vmem:[%s11 + $0x524] sm:$0xf]
      %v2269 = vld [vmem:[%s11 + $0x528] sm:$0xff]
      %v2270 = vld [vmem:[%s11 + $0x530] sm:$0xf]
      %v2271 = vld [vmem:[%s11 + $0x534] sm:$0xff]
      %v2272 = vld [vmem:[%s11 + $0x53c] sm:$0xf]
      %v2273 = vld [vmem:[%s11 + $0x540] sm:$0xff]
      %v2274 = vld [vmem:[%s11 + $0x548] sm:$0xf]
      %v2275 = vld [vmem:[%s11 + $0x54c] sm:$0xff]
      %v2276 = vld [vmem:[%s11 + $0x554] sm:$0xf]
      %v2277 = vld [vmem:[%s11 + $0x558] sm:$0xff]
      %v2278 = vld [vmem:[%s11 + $0x560] sm:$0xf]
      %v2279 = vld [vmem:[%s11 + $0x564] sm:$0xff]
      %v2280 = vld [vmem:[%s11 + $0x56c] sm:$0xf]
      %v2281 = vld [vmem:[%s11 + $0x570] sm:$0xff]
      %v2282 = vld [vmem:[%s11 + $0x578] sm:$0xf]
      %v2283 = vld [vmem:[%s11 + $0x57c] sm:$0xff]
      %v2284 = vld [vmem:[%s11 + $0x584] sm:$0xf]
      %v2285 = vld [vmem:[%s11 + $0x588] sm:$0xff]
      %v2286 = vld [vmem:[%s11 + $0x590] sm:$0xf]
      %v2287 = vld [vmem:[%s11 + $0x594] sm:$0xff]
      %v2288 = vld [vmem:[%s11 + $0x59c] sm:$0xf]
      %v2289 = vld [vmem:[%s11 + $0x5a0] sm:$0xff]
      %v2290 = vld [vmem:[%s11 + $0x5a8] sm:$0xf]
      %v2291 = vld [vmem:[%s11 + $0x5ac] sm:$0xff]
      %v2292 = vld [vmem:[%s11 + $0x5b4] sm:$0xf]
      %v2293 = vld [vmem:[%s11 + $0x5b8] sm:$0xff]
      %v2294 = vld [vmem:[%s11 + $0x5c0] sm:$0xf]
      %v2295 = vld [vmem:[%s11 + $0x5c4] sm:$0xff]
      %v2296 = vld [vmem:[%s11 + $0x5cc] sm:$0xf]
      %v2297 = vld [vmem:[%s11 + $0x5d0] sm:$0xff]
      %v2298 = vld [vmem:[%s11 + $0x5d8] sm:$0xf]
      %v2299 = vld [vmem:[%s11 + $0x5dc] sm:$0xff]
      %v2300 = vld [vmem:[%s11 + $0x5e4] sm:$0xf]
      %v2301 = vld [vmem:[%s11 + $0x5e8] sm:$0xff]
      %v2302 = vld [vmem:[%s11 + $0x5f0] sm:$0xf]
      %v2303 = vld [vmem:[%s11 + $0x5f4] sm:$0xff]
      %v2304 = vld [vmem:[%s11 + $0x5fc] sm:$0xf]
      %v2305 = vld [vmem:[%s11 + $0x600] sm:$0xff]
      %v2306 = vld [vmem:[%s11 + $0x608] sm:$0xf]
      %v2307 = vld [vmem:[%s11 + $0x60c] sm:$0xff]
      %v2308 = vld [vmem:[%s11 + $0x614] sm:$0xf]
      %v2309 = vld [vmem:[%s11 + $0x618] sm:$0xff]
      %v2310 = vld [vmem:[%s11 + $0x620] sm:$0xf]
      %v2311 = vld [vmem:[%s11 + $0x624] sm:$0xff]
      %v2312 = vld [vmem:[%s11 + $0x62c] sm:$0xf]
      %v2313 = vld [vmem:[%s11 + $0x630] sm:$0xff]
      %v2314 = vld [vmem:[%s11 + $0x638] sm:$0xf]
      %v2315 = vld [vmem:[%s11 + $0x63c] sm:$0xff]
      %v2316 = vld [vmem:[%s11 + $0x644] sm:$0xf]
      %v2317 = vld [vmem:[%s11 + $0x648] sm:$0xff]
      %v2318 = vld [vmem:[%s11 + $0x650] sm:$0xf]
      %v2319 = vld [vmem:[%s11 + $0x654] sm:$0xff]
      %v2320 = vld [vmem:[%s11 + $0x65c] sm:$0xf]
      %v2321 = vld [vmem:[%s11 + $0x660] sm:$0xff]
      %v2322 = vld [vmem:[%s11 + $0x668] sm:$0xf]
      %v2323 = vld [vmem:[%s11 + $0x66c] sm:$0xff]
      %v2324 = vld [vmem:[%s11 + $0x674] sm:$0xf]
      %v2325 = vld [vmem:[%s11 + $0x678] sm:$0xff]
      %v2326 = vld [vmem:[%s11 + $0x680] sm:$0xf]
      %v2327 = vld [vmem:[%s11 + $0x684] sm:$0xff]
      %v2328 = vld [vmem:[%s11 + $0x68c] sm:$0xf]
      %v2329 = vld [vmem:[%s11 + $0x690] sm:$0xff]
      %v2330 = vld [vmem:[%s11 + $0x698] sm:$0xf]
      %v2331 = vld [vmem:[%s11 + $0x69c] sm:$0xff]
      %v2332 = vld [vmem:[%s11 + $0x6a4] sm:$0xf]
      %v2333 = vld [vmem:[%s11 + $0x6a8] sm:$0xff]
      %v2334 = vld [vmem:[%s11 + $0x6b0] sm:$0xf]
      %v2335 = vld [vmem:[%s11 + $0x6b4] sm:$0xff]
      %v2336 = vld [vmem:[%s11 + $0x6bc] sm:$0xf]
      %v2337 = vld [vmem:[%s11 + $0x6c0] sm:$0xff]
      %v2338 = vld [vmem:[%s11 + $0x6c8] sm:$0xf]
      %v2339 = vld [vmem:[%s11 + $0x6cc] sm:$0xff]
      %v2340 = vld [vmem:[%s11 + $0x6d4] sm:$0xf]
      %v2341 = vld [vmem:[%s11 + $0x6d8] sm:$0xff]
      %v2342 = vld [vmem:[%s11 + $0x6e0] sm:$0xf]
      %v2343 = vld [vmem:[%s11 + $0x6e4] sm:$0xff]
      %v2344 = vld [vmem:[%s11 + $0x6ec] sm:$0xf]
      %v2345 = vld [vmem:[%s11 + $0x6f0] sm:$0xff]
      %v2346 = vld [vmem:[%s11 + $0x6f8] sm:$0xf]
      %v2347 = vld [vmem:[%s11 + $0x6fc] sm:$0xff]
      %v2348 = vld [vmem:[%s11 + $0x704] sm:$0xf]
      %v2349 = vld [vmem:[%s11 + $0x708] sm:$0xff]
      %v2350 = vld [vmem:[%s11 + $0x710] sm:$0xf]
      %v2351 = vld [vmem:[%s11 + $0x714] sm:$0xff]
      %v2352 = vld [vmem:[%s11 + $0x71c] sm:$0xf]
      %v2353 = vld [vmem:[%s11 + $0x720] sm:$0x33]
      %v2354 = vld [vmem:[%s11 + $0x728] sm:$0x3]
      %v2661 = vunpack.c.l.b16 %v2049
      %v2662 = vunpack.c.h.b16 %v2049
      %v2663 = vunpack.c.l.b16 %v2050
      %v2664 = vunpack.c.l.b16 %v2051
      %v2665 = vunpack.c.h.b16 %v2051
      %v2666 = vunpack.c.l.b16 %v2052
      %v2667 = vunpack.c.l.b16 %v2053
      %v2668 = vunpack.c.h.b16 %v2053
      %v2669 = vunpack.c.l.b16 %v2054
      %v2670 = vunpack.c.l.b16 %v2055
      %v2671 = vunpack.c.h.b16 %v2055
      %v2672 = vunpack.c.l.b16 %v2056
      %v2673 = vunpack.c.l.b16 %v2057
      %v2674 = vunpack.c.h.b16 %v2057
      %v2675 = vunpack.c.l.b16 %v2058
      %v2676 = vunpack.c.l.b16 %v2059
      %v2677 = vunpack.c.h.b16 %v2059
      %v2678 = vunpack.c.l.b16 %v2060
      %v2679 = vunpack.c.l.b16 %v2061
      %v2680 = vunpack.c.h.b16 %v2061
      %v2681 = vunpack.c.l.b16 %v2062
      %v2682 = vunpack.c.l.b16 %v2063
      %v2683 = vunpack.c.h.b16 %v2063
      %v2684 = vunpack.c.l.b16 %v2064
      %v2685 = vunpack.c.l.b16 %v2065
      %v2686 = vunpack.c.h.b16 %v2065
      %v2687 = vunpack.c.l.b16 %v2066
      %v2688 = vunpack.c.l.b16 %v2067
      %v2689 = vunpack.c.h.b16 %v2067
      %v2690 = vunpack.c.l.b16 %v2068
      %v2691 = vunpack.c.l.b16 %v2069
      %v2692 = vunpack.c.h.b16 %v2069
      %v2693 = vunpack.c.l.b16 %v2070
      %v2694 = vunpack.c.l.b16 %v2071
      %v2695 = vunpack.c.h.b16 %v2071
      %v2696 = vunpack.c.l.b16 %v2072
      %v2697 = vunpack.c.l.b16 %v2073
      %v2698 = vunpack.c.h.b16 %v2073
      %v2699 = vunpack.c.l.b16 %v2074
      %v2700 = vunpack.c.l.b16 %v2075
      %v2701 = vunpack.c.h.b16 %v2075
      %v2702 = vunpack.c.l.b16 %v2076
      %v2703 = vunpack.c.l.b16 %v2077
      %v2704 = vunpack.c.h.b16 %v2077
      %v2705 = vunpack.c.l.b16 %v2078
      %v2706 = vunpack.c.l.b16 %v2079
      %v2707 = vunpack.c.h.b16 %v2079
      %v2708 = vunpack.c.l.b16 %v2080
      %v2709 = vunpack.c.l.b16 %v2081
      %v2710 = vunpack.c.h.b16 %v2081
      %v2711 = vunpack.c.l.b16 %v2082
      %v2712 = vunpack.c.l.b16 %v2083
      %v2713 = vunpack.c.h.b16 %v2083
      %v2714 = vunpack.c.l.b16 %v2084
      %v2715 = vunpack.c.l.b16 %v2085
      %v2716 = vunpack.c.h.b16 %v2085
      %v2717 = vunpack.c.l.b16 %v2086
      %v2718 = vunpack.c.l.b16 %v2087
      %v2719 = vunpack.c.h.b16 %v2087
      %v2720 = vunpack.c.l.b16 %v2088
      %v2721 = vunpack.c.l.b16 %v2089
      %v2722 = vunpack.c.h.b16 %v2089
      %v2723 = vunpack.c.l.b16 %v2090
      %v2724 = vunpack.c.l.b16 %v2091
      %v2725 = vunpack.c.h.b16 %v2091
      %v2726 = vunpack.c.l.b16 %v2092
      %v2727 = vunpack.c.l.b16 %v2093
      %v2728 = vunpack.c.h.b16 %v2093
      %v2729 = vunpack.c.l.b16 %v2094
      %v2730 = vunpack.c.l.b16 %v2095
      %v2731 = vunpack.c.h.b16 %v2095
      %v2732 = vunpack.c.l.b16 %v2096
      %v2733 = vunpack.c.l.b16 %v2097
      %v2734 = vunpack.c.h.b16 %v2097
      %v2735 = vunpack.c.l.b16 %v2098
      %v2736 = vunpack.c.l.b16 %v2099
      %v2737 = vunpack.c.h.b16 %v2099
      %v2738 = vunpack.c.l.b16 %v2100
      %v2739 = vunpack.c.l.b16 %v2101
      %v2740 = vunpack.c.h.b16 %v2101
      %v2741 = vunpack.c.l.b16 %v2102
      %v2742 = vunpack.c.l.b16 %v2103
      %v2743 = vunpack.c.h.b16 %v2103
      %v2744 = vunpack.c.l.b16 %v2104
      %v2745 = vunpack.c.l.b16 %v2105
      %v2746 = vunpack.c.h.b16 %v2105
      %v2747 = vunpack.c.l.b16 %v2106
      %v2748 = vunpack.c.l.b16 %v2107
      %v2749 = vunpack.c.h.b16 %v2107
      %v2750 = vunpack.c.l.b16 %v2108
      %v2751 = vunpack.c.l.b16 %v2109
      %v2752 = vunpack.c.h.b16 %v2109
      %v2753 = vunpack.c.l.b16 %v2110
      %v2754 = vunpack.c.l.b16 %v2111
      %v2755 = vunpack.c.h.b16 %v2111
      %v2756 = vunpack.c.l.b16 %v2112
      %v2757 = vunpack.c.l.b16 %v2113
      %v2758 = vunpack.c.h.b16 %v2113
      %v2759 = vunpack.c.l.b16 %v2114
      %v2760 = vunpack.c.l.b16 %v2115
      %v2761 = vunpack.c.h.b16 %v2115
      %v2762 = vunpack.c.l.b16 %v2116
      %v2763 = vunpack.c.l.b16 %v2117
      %v2764 = vunpack.c.h.b16 %v2117
      %v2765 = vunpack.c.l.b16 %v2118
      %v2766 = vunpack.c.l.b16 %v2119
      %v2767 = vunpack.c.h.b16 %v2119
      %v2768 = vunpack.c.l.b16 %v2120
      %v2769 = vunpack.c.l.b16 %v2121
      %v2770 = vunpack.c.h.b16 %v2121
      %v2771 = vunpack.c.l.b16 %v2122
      %v2772 = vunpack.c.l.b16 %v2123
      %v2773 = vunpack.c.h.b16 %v2123
      %v2774 = vunpack.c.l.b16 %v2124
      %v2775 = vunpack.c.l.b16 %v2125
      %v2776 = vunpack.c.h.b16 %v2125
      %v2777 = vunpack.c.l.b16 %v2126
      %v2778 = vunpack.c.l.b16 %v2127
      %v2779 = vunpack.c.h.b16 %v2127
      %v2780 = vunpack.c.l.b16 %v2128
      %v2781 = vunpack.c.l.b16 %v2129
      %v2782 = vunpack.c.h.b16 %v2129
      %v2783 = vunpack.c.l.b16 %v2130
      %v2784 = vunpack.c.l.b16 %v2131
      %v2785 = vunpack.c.h.b16 %v2131
      %v2786 = vunpack.c.l.b16 %v2132
      %v2787 = vunpack.c.l.b16 %v2133
      %v2788 = vunpack.c.h.b16 %v2133
      %v2789 = vunpack.c.l.b16 %v2134
      %v2790 = vunpack.c.l.b16 %v2135
      %v2791 = vunpack.c.h.b16 %v2135
      %v2792 = vunpack.c.l.b16 %v2136
      %v2793 = vunpack.c.l.b16 %v2137
      %v2794 = vunpack.c.h.b16 %v2137
      %v2795 = vunpack.c.l.b16 %v2138
      %v2796 = vunpack.c.l.b16 %v2139
      %v2797 = vunpack.c.h.b16 %v2139
      %v2798 = vunpack.c.l.b16 %v2140
      %v2799 = vunpack.c.l.b16 %v2141
      %v2800 = vunpack.c.h.b16 %v2141
      %v2801 = vunpack.c.l.b16 %v2142
      %v2802 = vunpack.c.l.b16 %v2143
      %v2803 = vunpack.c.h.b16 %v2143
      %v2804 = vunpack.c.l.b16 %v2144
      %v2805 = vunpack.c.l.b16 %v2145
      %v2806 = vunpack.c.h.b16 %v2145
      %v2807 = vunpack.c.l.b16 %v2146
      %v2808 = vunpack.c.l.b16 %v2147
      %v2809 = vunpack.c.h.b16 %v2147
      %v2810 = vunpack.c.l.b16 %v2148
      %v2811 = vunpack.c.l.b16 %v2149
      %v2812 = vunpack.c.h.b16 %v2149
      %v2813 = vunpack.c.l.b16 %v2150
      %v2814 = vunpack.c.l.b16 %v2151
      %v2815 = vunpack.c.h.b16 %v2151
      %v2816 = vunpack.c.l.b16 %v2152
      %v2817 = vunpack.c.l.b16 %v2153
      %v2818 = vunpack.c.h.b16 %v2153
      %v2819 = vunpack.c.l.b16 %v2154
      %v2820 = vunpack.c.l.b16 %v2155
      %v2821 = vunpack.c.h.b16 %v2155
      %v2822 = vunpack.c.l.b16 %v2156
      %v2823 = vunpack.c.l.b16 %v2157
      %v2824 = vunpack.c.h.b16 %v2157
      %v2825 = vunpack.c.l.b16 %v2158
      %v2826 = vunpack.c.l.b16 %v2159
      %v2827 = vunpack.c.h.b16 %v2159
      %v2828 = vunpack.c.l.b16 %v2160
      %v2829 = vunpack.c.l.b16 %v2161
      %v2830 = vunpack.c.h.b16 %v2161
      %v2831 = vunpack.c.l.b16 %v2162
      %v2832 = vunpack.c.l.b16 %v2163
      %v2833 = vunpack.c.h.b16 %v2163
      %v2834 = vunpack.c.l.b16 %v2164
      %v2835 = vunpack.c.l.b16 %v2165
      %v2836 = vunpack.c.h.b16 %v2165
      %v2837 = vunpack.c.l.b16 %v2166
      %v2838 = vunpack.c.l.b16 %v2167
      %v2839 = vunpack.c.h.b16 %v2167
      %v2840 = vunpack.c.l.b16 %v2168
      %v2841 = vunpack.c.l.b16 %v2169
      %v2842 = vunpack.c.h.b16 %v2169
      %v2843 = vunpack.c.l.b16 %v2170
      %v2844 = vunpack.c.l.b16 %v2171
      %v2845 = vunpack.c.h.b16 %v2171
      %v2846 = vunpack.c.l.b16 %v2172
      %v2847 = vunpack.c.l.b16 %v2173
      %v2848 = vunpack.c.h.b16 %v2173
      %v2849 = vunpack.c.l.b16 %v2174
      %v2850 = vunpack.c.l.b16 %v2175
      %v2851 = vunpack.c.h.b16 %v2175
      %v2852 = vunpack.c.l.b16 %v2176
      %v2853 = vunpack.c.l.b16 %v2177
      %v2854 = vunpack.c.h.b16 %v2177
      %v2855 = vunpack.c.l.b16 %v2178
      %v2856 = vunpack.c.l.b16 %v2179
      %v2857 = vunpack.c.h.b16 %v2179
      %v2858 = vunpack.c.l.b16 %v2180
      %v2859 = vunpack.c.l.b16 %v2181
      %v2860 = vunpack.c.h.b16 %v2181
      %v2861 = vunpack.c.l.b16 %v2182
      %v2862 = vunpack.c.l.b16 %v2183
      %v2863 = vunpack.c.h.b16 %v2183
      %v2864 = vunpack.c.l.b16 %v2184
      %v2865 = vunpack.c.l.b16 %v2185
      %v2866 = vunpack.c.h.b16 %v2185
      %v2867 = vunpack.c.l.b16 %v2186
      %v2868 = vunpack.c.l.b16 %v2187
      %v2869 = vunpack.c.h.b16 %v2187
      %v2870 = vunpack.c.l.b16 %v2188
      %v2871 = vunpack.c.l.b16 %v2189
      %v2872 = vunpack.c.h.b16 %v2189
      %v2873 = vunpack.c.l.b16 %v2190
      %v2874 = vunpack.c.l.b16 %v2191
      %v2875 = vunpack.c.h.b16 %v2191
      %v2876 = vunpack.c.l.b16 %v2192
      %v2877 = vunpack.c.l.b16 %v2193
      %v2878 = vunpack.c.h.b16 %v2193
      %v2879 = vunpack.c.l.b16 %v2194
      %v2880 = vunpack.c.l.b16 %v2195
      %v2881 = vunpack.c.h.b16 %v2195
      %v2882 = vunpack.c.l.b16 %v2196
      %v2883 = vunpack.c.l.b16 %v2197
      %v2884 = vunpack.c.h.b16 %v2197
      %v2885 = vunpack.c.l.b16 %v2198
      %v2886 = vunpack.c.l.b16 %v2199
      %v2887 = vunpack.c.h.b16 %v2199
      %v2888 = vunpack.c.l.b16 %v2200
      %v2889 = vunpack.c.l.b16 %v2201
      %v2890 = vunpack.c.h.b16 %v2201
      %v2891 = vunpack.c.l.b16 %v2202
      %v2892 = vunpack.c.l.b16 %v2203
      %v2893 = vunpack.c.h.b16 %v2203
      %v2894 = vunpack.c.l.b16 %v2204
      %v2895 = vunpack.c.l.b16 %v2205
      %v2896 = vunpack.c.h.b16 %v2205
      %v2897 = vunpack.c.l.b16 %v2206
      %v2898 = vunpack.c.l.b16 %v2207
      %v2899 = vunpack.c.h.b16 %v2207
      %v2900 = vunpack.c.l.b16 %v2208
      %v2901 = vunpack.c.l.b16 %v2209
      %v2902 = vunpack.c.h.b16 %v2209
      %v2903 = vunpack.c.l.b16 %v2210
      %v2904 = vunpack.c.l.b16 %v2211
      %v2905 = vunpack.c.h.b16 %v2211
      %v2906 = vunpack.c.l.b16 %v2212
      %v2907 = vunpack.c.l.b16 %v2213
      %v2908 = vunpack.c.h.b16 %v2213
      %v2909 = vunpack.c.l.b16 %v2214
      %v2910 = vunpack.c.l.b16 %v2215
      %v2911 = vunpack.c.h.b16 %v2215
      %v2912 = vunpack.c.l.b16 %v2216
      %v2913 = vunpack.c.l.b16 %v2217
      %v2914 = vunpack.c.h.b16 %v2217
      %v2915 = vunpack.c.l.b16 %v2218
      %v2916 = vunpack.c.l.b16 %v2219
      %v2917 = vunpack.c.h.b16 %v2219
      %v2918 = vunpack.c.l.b16 %v2220
      %v2919 = vunpack.c.l.b16 %v2221
      %v2920 = vunpack.c.h.b16 %v2221
      %v2921 = vunpack.c.l.b16 %v2222
      %v2922 = vunpack.c.l.b16 %v2223
      %v2923 = vunpack.c.h.b16 %v2223
      %v2924 = vunpack.c.l.b16 %v2224
      %v2925 = vunpack.c.l.b16 %v2225
      %v2926 = vunpack.c.h.b16 %v2225
      %v2927 = vunpack.c.l.b16 %v2226
      %v2928 = vunpack.c.l.b16 %v2227
      %v2929 = vunpack.c.h.b16 %v2227
      %v2930 = vunpack.c.l.b16 %v2228
      %v2931 = vunpack.c.l.b16 %v2229
      %v2932 = vunpack.c.h.b16 %v2229
      %v2933 = vunpack.c.l.b16 %v2230
      %v2934 = vunpack.c.l.b16 %v2231
      %v2935 = vunpack.c.h.b16 %v2231
      %v2936 = vunpack.c.l.b16 %v2232
      %v2937 = vunpack.c.l.b16 %v2233
      %v2938 = vunpack.c.h.b16 %v2233
      %v2939 = vunpack.c.l.b16 %v2234
      %v2940 = vunpack.c.l.b16 %v2235
      %v2941 = vunpack.c.h.b16 %v2235
      %v2942 = vunpack.c.l.b16 %v2236
      %v2943 = vunpack.c.l.b16 %v2237
      %v2944 = vunpack.c.h.b16 %v2237
      %v2945 = vunpack.c.l.b16 %v2238
      %v2946 = vunpack.c.l.b16 %v2239
      %v2947 = vunpack.c.h.b16 %v2239
      %v2948 = vunpack.c.l.b16 %v2240
      %v2949 = vunpack.c.l.b16 %v2241
      %v2950 = vunpack.c.h.b16 %v2241
      %v2951 = vunpack.c.l.b16 %v2242
      %v2952 = vunpack.c.l.b16 %v2243
      %v2953 = vunpack.c.h.b16 %v2243
      %v2954 = vunpack.c.l.b16 %v2244
      %v2955 = vunpack.c.l.b16 %v2245
      %v2956 = vunpack.c.h.b16 %v2245
      %v2957 = vunpack.c.l.b16 %v2246
      %v2958 = vunpack.c.l.b16 %v2247
      %v2959 = vunpack.c.h.b16 %v2247
      %v2960 = vunpack.c.l.b16 %v2248
      %v2961 = vunpack.c.l.b16 %v2249
      %v2962 = vunpack.c.h.b16 %v2249
      %v2963 = vunpack.c.l.b16 %v2250
      %v2964 = vunpack.c.l.b16 %v2251
      %v2965 = vunpack.c.h.b16 %v2251
      %v2966 = vunpack.c.l.b16 %v2252
      %v2967 = vunpack.c.l.b16 %v2253
      %v2968 = vunpack.c.h.b16 %v2253
      %v2969 = vunpack.c.l.b16 %v2254
      %v2970 = vunpack.c.l.b16 %v2255
      %v2971 = vunpack.c.h.b16 %v2255
      %v2972 = vunpack.c.l.b16 %v2256
      %v2973 = vunpack.c.l.b16 %v2257
      %v2974 = vunpack.c.h.b16 %v2257
      %v2975 = vunpack.c.l.b16 %v2258
      %v2976 = vunpack.c.l.b16 %v2259
      %v2977 = vunpack.c.h.b16 %v2259
      %v2978 = vunpack.c.l.b16 %v2260
      %v2979 = vunpack.c.l.b16 %v2261
      %v2980 = vunpack.c.h.b16 %v2261
      %v2981 = vunpack.c.l.b16 %v2262
      %v2982 = vunpack.c.l.b16 %v2263
      %v2983 = vunpack.c.h.b16 %v2263
      %v2984 = vunpack.c.l.b16 %v2264
      %v2985 = vunpack.c.l.b16 %v2265
      %v2986 = vunpack.c.h.b16 %v2265
      %v2987 = vunpack.c.l.b16 %v2266
      %v2988 = vunpack.c.l.b16 %v2267
      %v2989 = vunpack.c.h.b16 %v2267
      %v2990 = vunpack.c.l.b16 %v2268
      %v2991 = vunpack.c.l.b16 %v2269
      %v2992 = vunpack.c.h.b16 %v2269
      %v2993 = vunpack.c.l.b16 %v2270
      %v2994 = vunpack.c.l.b16 %v2271
      %v2995 = vunpack.c.h.b16 %v2271
      %v2996 = vunpack.c.l.b16 %v2272
      %v2997 = vunpack.c.l.b16 %v2273
      %v2998 = vunpack.c.h.b16 %v2273
      %v2999 = vunpack.c.l.b16 %v2274
      %v3000 = vunpack.c.l.b16 %v2275
      %v3001 = vunpack.c.h.b16 %v2275
      %v3002 = vunpack.c.l.b16 %v2276
      %v3003 = vunpack.c.l.b16 %v2277
      %v3004 = vunpack.c.h.b16 %v2277
      %v3005 = vunpack.c.l.b16 %v2278
      %v3006 = vunpack.c.l.b16 %v2279
      %v3007 = vunpack.c.h.b16 %v2279
      %v3008 = vunpack.c.l.b16 %v2280
      %v3009 = vunpack.c.l.b16 %v2281
      %v3010 = vunpack.c.h.b16 %v2281
      %v3011 = vunpack.c.l.b16 %v2282
      %v3012 = vunpack.c.l.b16 %v2283
      %v3013 = vunpack.c.h.b16 %v2283
      %v3014 = vunpack.c.l.b16 %v2284
      %v3015 = vunpack.c.l.b16 %v2285
      %v3016 = vunpack.c.h.b16 %v2285
      %v3017 = vunpack.c.l.b16 %v2286
      %v3018 = vunpack.c.l.b16 %v2287
      %v3019 = vunpack.c.h.b16 %v2287
      %v3020 = vunpack.c.l.b16 %v2288
      %v3021 = vunpack.c.l.b16 %v2289
      %v3022 = vunpack.c.h.b16 %v2289
      %v3023 = vunpack.c.l.b16 %v2290
      %v3024 = vunpack.c.l.b16 %v2291
      %v3025 = vunpack.c.h.b16 %v2291
      %v3026 = vunpack.c.l.b16 %v2292
      %v3027 = vunpack.c.l.b16 %v2293
      %v3028 = vunpack.c.h.b16 %v2293
      %v3029 = vunpack.c.l.b16 %v2294
      %v3030 = vunpack.c.l.b16 %v2295
      %v3031 = vunpack.c.h.b16 %v2295
      %v3032 = vunpack.c.l.b16 %v2296
      %v3033 = vunpack.c.l.b16 %v2297
      %v3034 = vunpack.c.h.b16 %v2297
      %v3035 = vunpack.c.l.b16 %v2298
      %v3036 = vunpack.c.l.b16 %v2299
      %v3037 = vunpack.c.h.b16 %v2299
      %v3038 = vunpack.c.l.b16 %v2300
      %v3039 = vunpack.c.l.b16 %v2301
      %v3040 = vunpack.c.h.b16 %v2301
      %v3041 = vunpack.c.l.b16 %v2302
      %v3042 = vunpack.c.l.b16 %v2303
      %v3043 = vunpack.c.h.b16 %v2303
      %v3044 = vunpack.c.l.b16 %v2304
      %v3045 = vunpack.c.l.b16 %v2305
      %v3046 = vunpack.c.h.b16 %v2305
      %v3047 = vunpack.c.l.b16 %v2306
      %v3048 = vunpack.c.l.b16 %v2307
      %v3049 = vunpack.c.h.b16 %v2307
      %v3050 = vunpack.c.l.b16 %v2308
      %v3051 = vunpack.c.l.b16 %v2309
      %v3052 = vunpack.c.h.b16 %v2309
      %v3053 = vunpack.c.l.b16 %v2310
      %v3054 = vunpack.c.l.b16 %v2311
      %v3055 = vunpack.c.h.b16 %v2311
      %v3056 = vunpack.c.l.b16 %v2312
      %v3057 = vunpack.c.l.b16 %v2313
      %v3058 = vunpack.c.h.b16 %v2313
      %v3059 = vunpack.c.l.b16 %v2314
      %v3060 = vunpack.c.l.b16 %v2315
      %v3061 = vunpack.c.h.b16 %v2315
      %v3062 = vunpack.c.l.b16 %v2316
      %v3063 = vunpack.c.l.b16 %v2317
      %v3064 = vunpack.c.h.b16 %v2317
      %v3065 = vunpack.c.l.b16 %v2318
      %v3066 = vunpack.c.l.b16 %v2319
      %v3067 = vunpack.c.h.b16 %v2319
      %v3068 = vunpack.c.l.b16 %v2320
      %v3069 = vunpack.c.l.b16 %v2321
      %v3070 = vunpack.c.h.b16 %v2321
      %v3071 = vunpack.c.l.b16 %v2322
      %v3072 = vunpack.c.l.b16 %v2323
      %v3073 = vunpack.c.h.b16 %v2323
      %v3074 = vunpack.c.l.b16 %v2324
      %v3075 = vunpack.c.l.b16 %v2325
      %v3076 = vunpack.c.h.b16 %v2325
      %v3077 = vunpack.c.l.b16 %v2326
      %v3078 = vunpack.c.l.b16 %v2327
      %v3079 = vunpack.c.h.b16 %v2327
      %v3080 = vunpack.c.l.b16 %v2328
      %v3081 = vunpack.c.l.b16 %v2329
      %v3082 = vunpack.c.h.b16 %v2329
      %v3083 = vunpack.c.l.b16 %v2330
      %v3084 = vunpack.c.l.b16 %v2331
      %v3085 = vunpack.c.h.b16 %v2331
      %v3086 = vunpack.c.l.b16 %v2332
      %v3087 = vunpack.c.l.b16 %v2333
      %v3088 = vunpack.c.h.b16 %v2333
      %v3089 = vunpack.c.l.b16 %v2334
      %v3090 = vunpack.c.l.b16 %v2335
      %v3091 = vunpack.c.h.b16 %v2335
      %v3092 = vunpack.c.l.b16 %v2336
      %v3093 = vunpack.c.l.b16 %v2337
      %v3094 = vunpack.c.h.b16 %v2337
      %v3095 = vunpack.c.l.b16 %v2338
      %v3096 = vunpack.c.l.b16 %v2339
      %v3097 = vunpack.c.h.b16 %v2339
      %v3098 = vunpack.c.l.b16 %v2340
      %v3099 = vunpack.c.l.b16 %v2341
      %v3100 = vunpack.c.h.b16 %v2341
      %v3101 = vunpack.c.l.b16 %v2342
      %v3102 = vunpack.c.l.b16 %v2343
      %v3103 = vunpack.c.h.b16 %v2343
      %v3104 = vunpack.c.l.b16 %v2344
      %v3105 = vunpack.c.l.b16 %v2345
      %v3106 = vunpack.c.h.b16 %v2345
      %v3107 = vunpack.c.l.b16 %v2346
      %v3108 = vunpack.c.l.b16 %v2347
      %v3109 = vunpack.c.h.b16 %v2347
      %v3110 = vunpack.c.l.b16 %v2348
      %v3111 = vunpack.c.l.b16 %v2349
      %v3112 = vunpack.c.h.b16 %v2349
      %v3113 = vunpack.c.l.b16 %v2350
      %v3114 = vunpack.c.l.b16 %v2351
      %v3115 = vunpack.c.h.b16 %v2351
      %v3116 = vunpack.c.l.b16 %v2352
      %v3117 = vunpack.c.l.b16 %v2353
      %v3118 = vunpack.c.h.b16 %v2353
      %v3119 = vunpack.c.l.b16 %v2354
      %v3120 = vpack.c.b16 %v2664, %v2661
      %v3121 = vpack.c.b16 %v2665, %v2662
      %v3122 = vpack.c.b16 %v2666, %v2663
      %v3123 = vpack.c.b16 %v2670, %v2667
      %v3124 = vpack.c.b16 %v2671, %v2668
      %v3125 = vpack.c.b16 %v2672, %v2669
      %v3126 = vpack.c.b16 %v2676, %v2673
      %v3127 = vpack.c.b16 %v2677, %v2674
      %v3128 = vpack.c.b16 %v2678, %v2675
      %v3129 = vpack.c.b16 %v2682, %v2679
      %v3130 = vpack.c.b16 %v2683, %v2680
      %v3131 = vpack.c.b16 %v2684, %v2681
      %v3132 = vpack.c.b16 %v2688, %v2685
      %v3133 = vpack.c.b16 %v2689, %v2686
      %v3134 = vpack.c.b16 %v2690, %v2687
      %v3135 = vpack.c.b16 %v2694, %v2691
      %v3136 = vpack.c.b16 %v2695, %v2692
      %v3137 = vpack.c.b16 %v2696, %v2693
      %v3138 = vpack.c.b16 %v2700, %v2697
      %v3139 = vpack.c.b16 %v2701, %v2698
      %v3140 = vpack.c.b16 %v2702, %v2699
      %v3141 = vpack.c.b16 %v2706, %v2703
      %v3142 = vpack.c.b16 %v2707, %v2704
      %v3143 = vpack.c.b16 %v2708, %v2705
      %v3144 = vpack.c.b16 %v2712, %v2709
      %v3145 = vpack.c.b16 %v2713, %v2710
      %v3146 = vpack.c.b16 %v2714, %v2711
      %v3147 = vpack.c.b16 %v2718, %v2715
      %v3148 = vpack.c.b16 %v2719, %v2716
      %v3149 = vpack.c.b16 %v2720, %v2717
      %v3150 = vpack.c.b16 %v2724, %v2721
      %v3151 = vpack.c.b16 %v2725, %v2722
      %v3152 = vpack.c.b16 %v2726, %v2723
      %v3153 = vpack.c.b16 %v2730, %v2727
      %v3154 = vpack.c.b16 %v2731, %v2728
      %v3155 = vpack.c.b16 %v2732, %v2729
      %v3156 = vpack.c.b16 %v2736, %v2733
      %v3157 = vpack.c.b16 %v2737, %v2734
      %v3158 = vpack.c.b16 %v2738, %v2735
      %v3159 = vpack.c.b16 %v2742, %v2739
      %v3160 = vpack.c.b16 %v2743, %v2740
      %v3161 = vpack.c.b16 %v2744, %v2741
      %v3162 = vpack.c.b16 %v2748, %v2745
      %v3163 = vpack.c.b16 %v2749, %v2746
      %v3164 = vpack.c.b16 %v2750, %v2747
      %v3165 = vpack.c.b16 %v2754, %v2751
      %v3166 = vpack.c.b16 %v2755, %v2752
      %v3167 = vpack.c.b16 %v2756, %v2753
      %v3168 = vpack.c.b16 %v2760, %v2757
      %v3169 = vpack.c.b16 %v2761, %v2758
      %v3170 = vpack.c.b16 %v2762, %v2759
      %v3171 = vpack.c.b16 %v2766, %v2763
      %v3172 = vpack.c.b16 %v2767, %v2764
      %v3173 = vpack.c.b16 %v2768, %v2765
      %v3174 = vpack.c.b16 %v2772, %v2769
      %v3175 = vpack.c.b16 %v2773, %v2770
      %v3176 = vpack.c.b16 %v2774, %v2771
      %v3177 = vpack.c.b16 %v2778, %v2775
      %v3178 = vpack.c.b16 %v2779, %v2776
      %v3179 = vpack.c.b16 %v2780, %v2777
      %v3180 = vpack.c.b16 %v2784, %v2781
      %v3181 = vpack.c.b16 %v2785, %v2782
      %v3182 = vpack.c.b16 %v2786, %v2783
      %v3183 = vpack.c.b16 %v2790, %v2787
      %v3184 = vpack.c.b16 %v2791, %v2788
      %v3185 = vpack.c.b16 %v2792, %v2789
      %v3186 = vpack.c.b16 %v2796, %v2793
      %v3187 = vpack.c.b16 %v2797, %v2794
      %v3188 = vpack.c.b16 %v2798, %v2795
      %v3189 = vpack.c.b16 %v2802, %v2799
      %v3190 = vpack.c.b16 %v2803, %v2800
      %v3191 = vpack.c.b16 %v2804, %v2801
      %v3192 = vpack.c.b16 %v2808, %v2805
      %v3193 = vpack.c.b16 %v2809, %v2806
      %v3194 = vpack.c.b16 %v2810, %v2807
      %v3195 = vpack.c.b16 %v2814, %v2811
      %v3196 = vpack.c.b16 %v2815, %v2812
      %v3197 = vpack.c.b16 %v2816, %v2813
      %v3198 = vpack.c.b16 %v2820, %v2817
      %v3199 = vpack.c.b16 %v2821, %v2818
      %v3200 = vpack.c.b16 %v2822, %v2819
      %v3201 = vpack.c.b16 %v2826, %v2823
      %v3202 = vpack.c.b16 %v2827, %v2824
      %v3203 = vpack.c.b16 %v2828, %v2825
      %v3204 = vpack.c.b16 %v2832, %v2829
      %v3205 = vpack.c.b16 %v2833, %v2830
      %v3206 = vpack.c.b16 %v2834, %v2831
      %v3207 = vpack.c.b16 %v2838, %v2835
      %v3208 = vpack.c.b16 %v2839, %v2836
      %v3209 = vpack.c.b16 %v2840, %v2837
      %v3210 = vpack.c.b16 %v2844, %v2841
      %v3211 = vpack.c.b16 %v2845, %v2842
      %v3212 = vpack.c.b16 %v2846, %v2843
      %v3213 = vpack.c.b16 %v2850, %v2847
      %v3214 = vpack.c.b16 %v2851, %v2848
      %v3215 = vpack.c.b16 %v2852, %v2849
      %v3216 = vpack.c.b16 %v2856, %v2853
      %v3217 = vpack.c.b16 %v2857, %v2854
      %v3218 = vpack.c.b16 %v2858, %v2855
      %v3219 = vpack.c.b16 %v2862, %v2859
      %v3220 = vpack.c.b16 %v2863, %v2860
      %v3221 = vpack.c.b16 %v2864, %v2861
      %v3222 = vpack.c.b16 %v2868, %v2865
      %v3223 = vpack.c.b16 %v2869, %v2866
      %v3224 = vpack.c.b16 %v2870, %v2867
      %v3225 = vpack.c.b16 %v2874, %v2871
      %v3226 = vpack.c.b16 %v2875, %v2872
      %v3227 = vpack.c.b16 %v2876, %v2873
      %v3228 = vpack.c.b16 %v2880, %v2877
      %v3229 = vpack.c.b16 %v2881, %v2878
      %v3230 = vpack.c.b16 %v2882, %v2879
      %v3231 = vpack.c.b16 %v2886, %v2883
      %v3232 = vpack.c.b16 %v2887, %v2884
      %v3233 = vpack.c.b16 %v2888, %v2885
      %v3234 = vpack.c.b16 %v2892, %v2889
      %v3235 = vpack.c.b16 %v2893, %v2890
      %v3236 = vpack.c.b16 %v2894, %v2891
      %v3237 = vpack.c.b16 %v2898, %v2895
      %v3238 = vpack.c.b16 %v2899, %v2896
      %v3239 = vpack.c.b16 %v2900, %v2897
      %v3240 = vpack.c.b16 %v2904, %v2901
      %v3241 = vpack.c.b16 %v2905, %v2902
      %v3242 = vpack.c.b16 %v2906, %v2903
      %v3243 = vpack.c.b16 %v2910, %v2907
      %v3244 = vpack.c.b16 %v2911, %v2908
      %v3245 = vpack.c.b16 %v2912, %v2909
      %v3246 = vpack.c.b16 %v2916, %v2913
      %v3247 = vpack.c.b16 %v2917, %v2914
      %v3248 = vpack.c.b16 %v2918, %v2915
      %v3249 = vpack.c.b16 %v2922, %v2919
      %v3250 = vpack.c.b16 %v2923, %v2920
      %v3251 = vpack.c.b16 %v2924, %v2921
      %v3252 = vpack.c.b16 %v2928, %v2925
      %v3253 = vpack.c.b16 %v2929, %v2926
      %v3254 = vpack.c.b16 %v2930, %v2927
      %v3255 = vpack.c.b16 %v2934, %v2931
      %v3256 = vpack.c.b16 %v2935, %v2932
      %v3257 = vpack.c.b16 %v2936, %v2933
      %v3258 = vpack.c.b16 %v2940, %v2937
      %v3259 = vpack.c.b16 %v2941, %v2938
      %v3260 = vpack.c.b16 %v2942, %v2939
      %v3261 = vpack.c.b16 %v2946, %v2943
      %v3262 = vpack.c.b16 %v2947, %v2944
      %v3263 = vpack.c.b16 %v2948, %v2945
      %v3264 = vpack.c.b16 %v2952, %v2949
      %v3265 = vpack.c.b16 %v2953, %v2950
      %v3266 = vpack.c.b16 %v2954, %v2951
      %v3267 = vpack.c.b16 %v2958, %v2955
      %v3268 = vpack.c.b16 %v2959, %v2956
      %v3269 = vpack.c.b16 %v2960, %v2957
      %v3270 = vpack.c.b16 %v2964, %v2961
      %v3271 = vpack.c.b16 %v2965, %v2962
      %v3272 = vpack.c.b16 %v2966, %v2963
      %v3273 = vpack.c.b16 %v2970, %v2967
      %v3274 = vpack.c.b16 %v2971, %v2968
      %v3275 = vpack.c.b16 %v2972, %v2969
      %v3276 = vpack.c.b16 %v2976, %v2973
      %v3277 = vpack.c.b16 %v2977, %v2974
      %v3278 = vpack.c.b16 %v2978, %v2975
      %v3279 = vpack.c.b16 %v2982, %v2979
      %v3280 = vpack.c.b16 %v2983, %v2980
      %v3281 = vpack.c.b16 %v2984, %v2981
      %v3282 = vpack.c.b16 %v2988, %v2985
      %v3283 = vpack.c.b16 %v2989, %v2986
      %v3284 = vpack.c.b16 %v2990, %v2987
      %v3285 = vpack.c.b16 %v2994, %v2991
      %v3286 = vpack.c.b16 %v2995, %v2992
      %v3287 = vpack.c.b16 %v2996, %v2993
      %v3288 = vpack.c.b16 %v3000, %v2997
      %v3289 = vpack.c.b16 %v3001, %v2998
      %v3290 = vpack.c.b16 %v3002, %v2999
      %v3291 = vpack.c.b16 %v3006, %v3003
      %v3292 = vpack.c.b16 %v3007, %v3004
      %v3293 = vpack.c.b16 %v3008, %v3005
      %v3294 = vpack.c.b16 %v3012, %v3009
      %v3295 = vpack.c.b16 %v3013, %v3010
      %v3296 = vpack.c.b16 %v3014, %v3011
      %v3297 = vpack.c.b16 %v3018, %v3015
      %v3298 = vpack.c.b16 %v3019, %v3016
      %v3299 = vpack.c.b16 %v3020, %v3017
      %v3300 = vpack.c.b16 %v3024, %v3021
      %v3301 = vpack.c.b16 %v3025, %v3022
      %v3302 = vpack.c.b16 %v3026, %v3023
      %v3303 = vpack.c.b16 %v3030, %v3027
      %v3304 = vpack.c.b16 %v3031, %v3028
      %v3305 = vpack.c.b16 %v3032, %v3029
      %v3306 = vpack.c.b16 %v3036, %v3033
      %v3307 = vpack.c.b16 %v3037, %v3034
      %v3308 = vpack.c.b16 %v3038, %v3035
      %v3309 = vpack.c.b16 %v3042, %v3039
      %v3310 = vpack.c.b16 %v3043, %v3040
      %v3311 = vpack.c.b16 %v3044, %v3041
      %v3312 = vpack.c.b16 %v3048, %v3045
      %v3313 = vpack.c.b16 %v3049, %v3046
      %v3314 = vpack.c.b16 %v3050, %v3047
      %v3315 = vpack.c.b16 %v3054, %v3051
      %v3316 = vpack.c.b16 %v3055, %v3052
      %v3317 = vpack.c.b16 %v3056, %v3053
      %v3318 = vpack.c.b16 %v3060, %v3057
      %v3319 = vpack.c.b16 %v3061, %v3058
      %v3320 = vpack.c.b16 %v3062, %v3059
      %v3321 = vpack.c.b16 %v3066, %v3063
      %v3322 = vpack.c.b16 %v3067, %v3064
      %v3323 = vpack.c.b16 %v3068, %v3065
      %v3324 = vpack.c.b16 %v3072, %v3069
      %v3325 = vpack.c.b16 %v3073, %v3070
      %v3326 = vpack.c.b16 %v3074, %v3071
      %v3327 = vpack.c.b16 %v3078, %v3075
      %v3328 = vpack.c.b16 %v3079, %v3076
      %v3329 = vpack.c.b16 %v3080, %v3077
      %v3330 = vpack.c.b16 %v3084, %v3081
      %v3331 = vpack.c.b16 %v3085, %v3082
      %v3332 = vpack.c.b16 %v3086, %v3083
      %v3333 = vpack.c.b16 %v3090, %v3087
      %v3334 = vpack.c.b16 %v3091, %v3088
      %v3335 = vpack.c.b16 %v3092, %v3089
      %v3336 = vpack.c.b16 %v3096, %v3093
      %v3337 = vpack.c.b16 %v3097, %v3094
      %v3338 = vpack.c.b16 %v3098, %v3095
      %v3339 = vpack.c.b16 %v3102, %v3099
      %v3340 = vpack.c.b16 %v3103, %v3100
      %v3341 = vpack.c.b16 %v3104, %v3101
      %v3342 = vpack.c.b16 %v3108, %v3105
      %v3343 = vpack.c.b16 %v3109, %v3106
      %v3344 = vpack.c.b16 %v3110, %v3107
      %v3345 = vpack.c.b16 %v3114, %v3111
      %v3346 = vpack.c.b16 %v3115, %v3112
      %v3347 = vpack.c.b16 %v3116, %v3113
      %v3348 = vpack.c.b16 %v3117, %v3117
      %v3349 = vpack.c.b16 %v3118, %v3118
      %v3350 = vpack.c.b16 %v3119, %v3119
      %v3580 = vsel %vm551, %v2048, 0
      %vm3582 = vcmask 1041408
      %v3584 = vsel %vm3582, %v3348, 0
      %v3587 = vsel %vm3582, %v3349, 0
      %v3590 = vsel %vm3582, %v3350, 0
      %3592 = vmatprep.subr.bf16.mxu0 %v3121
      %3593 = vmatpush1.bf16.msra.mxu0 %v3120
      %3594 = vmatprep.subr.bf16.mxu0 %v3124
      %3595 = vmatpush1.bf16.msra.mxu0 %v3123
      %3596 = vmatprep.subr.bf16.mxu0 %v3127
      %3597 = vmatpush1.bf16.msra.mxu0 %v3126
      %3598 = vmatprep.subr.bf16.mxu0 %v3130
      %3599 = vmatpush1.bf16.msra.mxu0 %v3129
      %3600 = vmatprep.subr.bf16.mxu0 %v3133
      %3601 = vmatpush1.bf16.msra.mxu0 %v3132
      %3602 = vmatprep.subr.bf16.mxu0 %v3136
      %3603 = vmatpush1.bf16.msra.mxu0 %v3135
      %3604 = vmatprep.subr.bf16.mxu0 %v3139
      %3605 = vmatpush1.bf16.msra.mxu0 %v3138
      %3606 = vmatprep.subr.bf16.mxu0 %v3142
      %3607 = vmatpush1.bf16.msra.mxu0 %v3141
      %3608 = vmatprep.subr.bf16.mxu0 %v3145
      %3609 = vmatpush1.bf16.msra.mxu0 %v3144
      %3610 = vmatprep.subr.bf16.mxu0 %v3148
      %3611 = vmatpush1.bf16.msra.mxu0 %v3147
      %3612 = vmatprep.subr.bf16.mxu0 %v3151
      %3613 = vmatpush1.bf16.msra.mxu0 %v3150
      %3614 = vmatprep.subr.bf16.mxu0 %v3154
      %3615 = vmatpush1.bf16.msra.mxu0 %v3153
      %3616 = vmatprep.subr.bf16.mxu0 %v3157
      %3617 = vmatpush1.bf16.msra.mxu0 %v3156
      %3618 = vmatprep.subr.bf16.mxu0 %v3160
      %3619 = vmatpush1.bf16.msra.mxu0 %v3159
      %3620 = vmatprep.subr.bf16.mxu0 %v3163
      %3621 = vmatpush1.bf16.msra.mxu0 %v3162
      %3622 = vmatprep.subr.bf16.mxu0 %v3166
      %3623 = vmatpush1.bf16.msra.mxu0 %v3165
      %3624 = vmatprep.mubr.bf16.mxu0 %v2040
      %3625 = vmatmul.mubr.bf16.gmra.mrb[0].mxu0 %v2039
      %v3626 = vpop.f32.mrb[0].mxu0
      %v3627 = vadd.f32 0.0, %v3626
      %v3628 = vpop.f32.mrb[0].mxu0
      %v3629 = vadd.f32 0.0, %v3628
      %v3630 = vpop.f32.mrb[0].mxu0
      %v3631 = vpop.f32.mrb[0].mxu0
      %3632 = vdwg.mxu0
      %3633 = vmatprep.subr.bf16.mxu0 %v3169
      %3634 = vmatpush1.bf16.msra.mxu0 %v3168
      %3635 = vmatprep.subr.bf16.mxu0 %v3172
      %3636 = vmatpush1.bf16.msra.mxu0 %v3171
      %3637 = vmatprep.subr.bf16.mxu0 %v3175
      %3638 = vmatpush1.bf16.msra.mxu0 %v3174
      %3639 = vmatprep.subr.bf16.mxu0 %v3178
      %3640 = vmatpush1.bf16.msra.mxu0 %v3177
      %3641 = vmatprep.subr.bf16.mxu0 %v3181
      %3642 = vmatpush1.bf16.msra.mxu0 %v3180
      %3643 = vmatprep.subr.bf16.mxu0 %v3184
      %3644 = vmatpush1.bf16.msra.mxu0 %v3183
      %3645 = vmatprep.subr.bf16.mxu0 %v3187
      %3646 = vmatpush1.bf16.msra.mxu0 %v3186
      %3647 = vmatprep.subr.bf16.mxu0 %v3190
      %3648 = vmatpush1.bf16.msra.mxu0 %v3189
      %3649 = vmatprep.subr.bf16.mxu0 %v3193
      %3650 = vmatpush1.bf16.msra.mxu0 %v3192
      %3651 = vmatprep.subr.bf16.mxu0 %v3196
      %3652 = vmatpush1.bf16.msra.mxu0 %v3195
      %3653 = vmatprep.subr.bf16.mxu0 %v3199
      %3654 = vmatpush1.bf16.msra.mxu0 %v3198
      %3655 = vmatprep.subr.bf16.mxu0 %v3202
      %3656 = vmatpush1.bf16.msra.mxu0 %v3201
      %3657 = vmatprep.subr.bf16.mxu0 %v3205
      %3658 = vmatpush1.bf16.msra.mxu0 %v3204
      %3659 = vmatprep.subr.bf16.mxu0 %v3208
      %3660 = vmatpush1.bf16.msra.mxu0 %v3207
      %3661 = vmatprep.subr.bf16.mxu0 %v3211
      %3662 = vmatpush1.bf16.msra.mxu0 %v3210
      %3663 = vmatprep.subr.bf16.mxu0 %v3214
      %3664 = vmatpush1.bf16.msra.mxu0 %v3213
      %3665 = vmatprep.mubr.bf16.mxu0 %v2042
      %3666 = vmatmul.mubr.bf16.gmra.mrb[0].mxu0 %v2041
      %v3667 = vpop.f32.mrb[0].mxu0
      %v3668 = vadd.f32 %v3627, %v3667
      %v3669 = vpop.f32.mrb[0].mxu0
      %v3670 = vadd.f32 %v3629, %v3669
      %v3671 = vpop.f32.mrb[0].mxu0
      %v3672 = vpop.f32.mrb[0].mxu0
      %3673 = vdwg.mxu0
      %3674 = vmatprep.subr.bf16.mxu0 %v3217
      %3675 = vmatpush1.bf16.msra.mxu0 %v3216
      %3676 = vmatprep.subr.bf16.mxu0 %v3220
      %3677 = vmatpush1.bf16.msra.mxu0 %v3219
      %3678 = vmatprep.subr.bf16.mxu0 %v3223
      %3679 = vmatpush1.bf16.msra.mxu0 %v3222
      %3680 = vmatprep.subr.bf16.mxu0 %v3226
      %3681 = vmatpush1.bf16.msra.mxu0 %v3225
      %3682 = vmatprep.subr.bf16.mxu0 %v3229
      %3683 = vmatpush1.bf16.msra.mxu0 %v3228
      %3684 = vmatprep.subr.bf16.mxu0 %v3232
      %3685 = vmatpush1.bf16.msra.mxu0 %v3231
      %3686 = vmatprep.subr.bf16.mxu0 %v3235
      %3687 = vmatpush1.bf16.msra.mxu0 %v3234
      %3688 = vmatprep.subr.bf16.mxu0 %v3238
      %3689 = vmatpush1.bf16.msra.mxu0 %v3237
      %3690 = vmatprep.subr.bf16.mxu0 %v3241
      %3691 = vmatpush1.bf16.msra.mxu0 %v3240
      %3692 = vmatprep.subr.bf16.mxu0 %v3244
      %3693 = vmatpush1.bf16.msra.mxu0 %v3243
      %3694 = vmatprep.subr.bf16.mxu0 %v3247
      %3695 = vmatpush1.bf16.msra.mxu0 %v3246
      %3696 = vmatprep.subr.bf16.mxu0 %v3250
      %3697 = vmatpush1.bf16.msra.mxu0 %v3249
      %3698 = vmatprep.subr.bf16.mxu0 %v3253
      %3699 = vmatpush1.bf16.msra.mxu0 %v3252
      %3700 = vmatprep.subr.bf16.mxu0 %v3256
      %3701 = vmatpush1.bf16.msra.mxu0 %v3255
      %3702 = vmatprep.subr.bf16.mxu0 %v3259
      %3703 = vmatpush1.bf16.msra.mxu0 %v3258
      %3704 = vmatprep.subr.bf16.mxu0 %v3262
      %3705 = vmatpush1.bf16.msra.mxu0 %v3261
      %3706 = vmatprep.mubr.bf16.mxu0 %v2044
      %3707 = vmatmul.mubr.bf16.gmra.mrb[0].mxu0 %v2043
      %v3708 = vpop.f32.mrb[0].mxu0
      %v3709 = vadd.f32 %v3668, %v3708
      %v3710 = vpop.f32.mrb[0].mxu0
      %v3711 = vadd.f32 %v3670, %v3710
      %v3712 = vpop.f32.mrb[0].mxu0
      %v3713 = vpop.f32.mrb[0].mxu0
      %3714 = vdwg.mxu0
      %3715 = vmatprep.subr.bf16.mxu0 %v3265
      %3716 = vmatpush1.bf16.msra.mxu0 %v3264
      %3717 = vmatprep.subr.bf16.mxu0 %v3268
      %3718 = vmatpush1.bf16.msra.mxu0 %v3267
      %3719 = vmatprep.subr.bf16.mxu0 %v3271
      %3720 = vmatpush1.bf16.msra.mxu0 %v3270
      %3721 = vmatprep.subr.bf16.mxu0 %v3274
      %3722 = vmatpush1.bf16.msra.mxu0 %v3273
      %3723 = vmatprep.subr.bf16.mxu0 %v3277
      %3724 = vmatpush1.bf16.msra.mxu0 %v3276
      %3725 = vmatprep.subr.bf16.mxu0 %v3280
      %3726 = vmatpush1.bf16.msra.mxu0 %v3279
      %3727 = vmatprep.subr.bf16.mxu0 %v3283
      %3728 = vmatpush1.bf16.msra.mxu0 %v3282
      %3729 = vmatprep.subr.bf16.mxu0 %v3286
      %3730 = vmatpush1.bf16.msra.mxu0 %v3285
      %3731 = vmatprep.subr.bf16.mxu0 %v3289
      %3732 = vmatpush1.bf16.msra.mxu0 %v3288
      %3733 = vmatprep.subr.bf16.mxu0 %v3292
      %3734 = vmatpush1.bf16.msra.mxu0 %v3291
      %3735 = vmatprep.subr.bf16.mxu0 %v3295
      %3736 = vmatpush1.bf16.msra.mxu0 %v3294
      %3737 = vmatprep.subr.bf16.mxu0 %v3298
      %3738 = vmatpush1.bf16.msra.mxu0 %v3297
      %3739 = vmatprep.subr.bf16.mxu0 %v3301
      %3740 = vmatpush1.bf16.msra.mxu0 %v3300
      %3741 = vmatprep.subr.bf16.mxu0 %v3304
      %3742 = vmatpush1.bf16.msra.mxu0 %v3303
      %3743 = vmatprep.subr.bf16.mxu0 %v3307
      %3744 = vmatpush1.bf16.msra.mxu0 %v3306
      %3745 = vmatprep.subr.bf16.mxu0 %v3310
      %3746 = vmatpush1.bf16.msra.mxu0 %v3309
      %3747 = vmatprep.mubr.bf16.mxu0 %v2046
      %3748 = vmatmul.mubr.bf16.gmra.mrb[0].mxu0 %v2045
      %v3749 = vpop.f32.mrb[0].mxu0
      %v3750 = vadd.f32 %v3709, %v3749
      %v3751 = vpop.f32.mrb[0].mxu0
      %v3752 = vadd.f32 %v3711, %v3751
      %v3753 = vpop.f32.mrb[0].mxu0
      %v3754 = vpop.f32.mrb[0].mxu0
      %3755 = vdwg.mxu0
      %3756 = vmatprep.subr.bf16.mxu0 %v3313
      %3757 = vmatpush1.bf16.msra.mxu0 %v3312
      %3758 = vmatprep.subr.bf16.mxu0 %v3316
      %3759 = vmatpush1.bf16.msra.mxu0 %v3315
      %3760 = vmatprep.subr.bf16.mxu0 %v3319
      %3761 = vmatpush1.bf16.msra.mxu0 %v3318
      %3762 = vmatprep.subr.bf16.mxu0 %v3322
      %3763 = vmatpush1.bf16.msra.mxu0 %v3321
      %3764 = vmatprep.subr.bf16.mxu0 %v3325
      %3765 = vmatpush1.bf16.msra.mxu0 %v3324
      %3766 = vmatprep.subr.bf16.mxu0 %v3328
      %3767 = vmatpush1.bf16.msra.mxu0 %v3327
      %3768 = vmatprep.subr.bf16.mxu0 %v3331
      %3769 = vmatpush1.bf16.msra.mxu0 %v3330
      %3770 = vmatprep.subr.bf16.mxu0 %v3334
      %3771 = vmatpush1.bf16.msra.mxu0 %v3333
      %3772 = vmatprep.subr.bf16.mxu0 %v3337
      %3773 = vmatpush1.bf16.msra.mxu0 %v3336
      %3774 = vmatprep.subr.bf16.mxu0 %v3340
      %3775 = vmatpush1.bf16.msra.mxu0 %v3339
      %3776 = vmatprep.subr.bf16.mxu0 %v3343
      %3777 = vmatpush1.bf16.msra.mxu0 %v3342
      %3778 = vmatprep.subr.bf16.mxu0 %v3346
      %3779 = vmatpush1.bf16.msra.mxu0 %v3345
      %3780 = vmatprep.subr.bf16.mxu0 %v3587
      %3781 = vmatpush1.bf16.msra.mxu0 %v3584
      %3782 = vmatprep.subr.bf16.mxu0 0
      %3783 = vmatpush1.bf16.msra.mxu0 0
      %3784 = vmatprep.subr.bf16.mxu0 0
      %3785 = vmatpush1.bf16.msra.mxu0 0
      %3786 = vmatprep.subr.bf16.mxu0 0
      %3787 = vmatpush1.bf16.msra.mxu0 0
      %3788 = vmatprep.mubr.bf16.mxu0 %v3580
      %3789 = vmatmul.mubr.bf16.gmra.mrb[0].mxu0 %v2047
      %v3790 = vpop.f32.mrb[0].mxu0
      %v3791 = vadd.f32 %v3750, %v3790
      %v3792 = vpop.f32.mrb[0].mxu0
      %v3793 = vadd.f32 %v3752, %v3792
      %v3794 = vpop.f32.mrb[0].mxu0
      %v3795 = vpop.f32.mrb[0].mxu0
      %3796 = vdwg.mxu0
      %3797 = vmatprep.subr.bf16.mxu0 0
      %3798 = vmatpush1.bf16.msra.mxu0 %v3122
      %3799 = vmatprep.subr.bf16.mxu0 0
      %3800 = vmatpush1.bf16.msra.mxu0 %v3125
      %3801 = vmatprep.subr.bf16.mxu0 0
      %3802 = vmatpush1.bf16.msra.mxu0 %v3128
      %3803 = vmatprep.subr.bf16.mxu0 0
      %3804 = vmatpush1.bf16.msra.mxu0 %v3131
      %3805 = vmatprep.subr.bf16.mxu0 0
      %3806 = vmatpush1.bf16.msra.mxu0 %v3134
      %3807 = vmatprep.subr.bf16.mxu0 0
      %3808 = vmatpush1.bf16.msra.mxu0 %v3137
      %3809 = vmatprep.subr.bf16.mxu0 0
      %3810 = vmatpush1.bf16.msra.mxu0 %v3140
      %3811 = vmatprep.subr.bf16.mxu0 0
      %3812 = vmatpush1.bf16.msra.mxu0 %v3143
      %3813 = vmatprep.subr.bf16.mxu0 0
      %3814 = vmatpush1.bf16.msra.mxu0 %v3146
      %3815 = vmatprep.subr.bf16.mxu0 0
      %3816 = vmatpush1.bf16.msra.mxu0 %v3149
      %3817 = vmatprep.subr.bf16.mxu0 0
      %3818 = vmatpush1.bf16.msra.mxu0 %v3152
      %3819 = vmatprep.subr.bf16.mxu0 0
      %3820 = vmatpush1.bf16.msra.mxu0 %v3155
      %3821 = vmatprep.subr.bf16.mxu0 0
      %3822 = vmatpush1.bf16.msra.mxu0 %v3158
      %3823 = vmatprep.subr.bf16.mxu0 0
      %3824 = vmatpush1.bf16.msra.mxu0 %v3161
      %3825 = vmatprep.subr.bf16.mxu0 0
      %3826 = vmatpush1.bf16.msra.mxu0 %v3164
      %3827 = vmatprep.subr.bf16.mxu0 0
      %3828 = vmatpush1.bf16.msra.mxu0 %v3167
      %3829 = vmatprep.mubr.bf16.mxu0 %v2040
      %3830 = vmatmul.mubr.bf16.gmra.mrb[0].mxu0 %v2039
      %v3831 = vpop.f32.mrb[0].mxu0
      %v3832 = vadd.f32 0.0, %v3831
      %v3833 = vpop.f32.mrb[0].mxu0
      %v3834 = vpop.f32.mrb[0].mxu0
      %v3835 = vpop.f32.mrb[0].mxu0
      %3836 = vdwg.mxu0
      %3837 = vmatprep.subr.bf16.mxu0 0
      %3838 = vmatpush1.bf16.msra.mxu0 %v3170
      %3839 = vmatprep.subr.bf16.mxu0 0
      %3840 = vmatpush1.bf16.msra.mxu0 %v3173
      %3841 = vmatprep.subr.bf16.mxu0 0
      %3842 = vmatpush1.bf16.msra.mxu0 %v3176
      %3843 = vmatprep.subr.bf16.mxu0 0
      %3844 = vmatpush1.bf16.msra.mxu0 %v3179
      %3845 = vmatprep.subr.bf16.mxu0 0
      %3846 = vmatpush1.bf16.msra.mxu0 %v3182
      %3847 = vmatprep.subr.bf16.mxu0 0
      %3848 = vmatpush1.bf16.msra.mxu0 %v3185
      %3849 = vmatprep.subr.bf16.mxu0 0
      %3850 = vmatpush1.bf16.msra.mxu0 %v3188
      %3851 = vmatprep.subr.bf16.mxu0 0
      %3852 = vmatpush1.bf16.msra.mxu0 %v3191
      %3853 = vmatprep.subr.bf16.mxu0 0
      %3854 = vmatpush1.bf16.msra.mxu0 %v3194
      %3855 = vmatprep.subr.bf16.mxu0 0
      %3856 = vmatpush1.bf16.msra.mxu0 %v3197
      %3857 = vmatprep.subr.bf16.mxu0 0
      %3858 = vmatpush1.bf16.msra.mxu0 %v3200
      %3859 = vmatprep.subr.bf16.mxu0 0
      %3860 = vmatpush1.bf16.msra.mxu0 %v3203
      %3861 = vmatprep.subr.bf16.mxu0 0
      %3862 = vmatpush1.bf16.msra.mxu0 %v3206
      %3863 = vmatprep.subr.bf16.mxu0 0
      %3864 = vmatpush1.bf16.msra.mxu0 %v3209
      %3865 = vmatprep.subr.bf16.mxu0 0
      %3866 = vmatpush1.bf16.msra.mxu0 %v3212
      %3867 = vmatprep.subr.bf16.mxu0 0
      %3868 = vmatpush1.bf16.msra.mxu0 %v3215
      %3869 = vmatprep.mubr.bf16.mxu0 %v2042
      %3870 = vmatmul.mubr.bf16.gmra.mrb[0].mxu0 %v2041
      %v3871 = vpop.f32.mrb[0].mxu0
      %v3872 = vadd.f32 %v3832, %v3871
      %v3873 = vpop.f32.mrb[0].mxu0
      %v3874 = vpop.f32.mrb[0].mxu0
      %v3875 = vpop.f32.mrb[0].mxu0
      %3876 = vdwg.mxu0
      %3877 = vmatprep.subr.bf16.mxu0 0
      %3878 = vmatpush1.bf16.msra.mxu0 %v3218
      %3879 = vmatprep.subr.bf16.mxu0 0
      %3880 = vmatpush1.bf16.msra.mxu0 %v3221
      %3881 = vmatprep.subr.bf16.mxu0 0
      %3882 = vmatpush1.bf16.msra.mxu0 %v3224
      %3883 = vmatprep.subr.bf16.mxu0 0
      %3884 = vmatpush1.bf16.msra.mxu0 %v3227
      %3885 = vmatprep.subr.bf16.mxu0 0
      %3886 = vmatpush1.bf16.msra.mxu0 %v3230
      %3887 = vmatprep.subr.bf16.mxu0 0
      %3888 = vmatpush1.bf16.msra.mxu0 %v3233
      %3889 = vmatprep.subr.bf16.mxu0 0
      %3890 = vmatpush1.bf16.msra.mxu0 %v3236
      %3891 = vmatprep.subr.bf16.mxu0 0
      %3892 = vmatpush1.bf16.msra.mxu0 %v3239
      %3893 = vmatprep.subr.bf16.mxu0 0
      %3894 = vmatpush1.bf16.msra.mxu0 %v3242
      %3895 = vmatprep.subr.bf16.mxu0 0
      %3896 = vmatpush1.bf16.msra.mxu0 %v3245
      %3897 = vmatprep.subr.bf16.mxu0 0
      %3898 = vmatpush1.bf16.msra.mxu0 %v3248
      %3899 = vmatprep.subr.bf16.mxu0 0
      %3900 = vmatpush1.bf16.msra.mxu0 %v3251
      %3901 = vmatprep.subr.bf16.mxu0 0
      %3902 = vmatpush1.bf16.msra.mxu0 %v3254
      %3903 = vmatprep.subr.bf16.mxu0 0
      %3904 = vmatpush1.bf16.msra.mxu0 %v3257
      %3905 = vmatprep.subr.bf16.mxu0 0
      %3906 = vmatpush1.bf16.msra.mxu0 %v3260
      %3907 = vmatprep.subr.bf16.mxu0 0
      %3908 = vmatpush1.bf16.msra.mxu0 %v3263
      %3909 = vmatprep.mubr.bf16.mxu0 %v2044
      %3910 = vmatmul.mubr.bf16.gmra.mrb[0].mxu0 %v2043
      %v3911 = vpop.f32.mrb[0].mxu0
      %v3912 = vadd.f32 %v3872, %v3911
      %v3913 = vpop.f32.mrb[0].mxu0
      %v3914 = vpop.f32.mrb[0].mxu0
      %v3915 = vpop.f32.mrb[0].mxu0
      %3916 = vdwg.mxu0
      %3917 = vmatprep.subr.bf16.mxu0 0
      %3918 = vmatpush1.bf16.msra.mxu0 %v3266
      %3919 = vmatprep.subr.bf16.mxu0 0
      %3920 = vmatpush1.bf16.msra.mxu0 %v3269
      %3921 = vmatprep.subr.bf16.mxu0 0
      %3922 = vmatpush1.bf16.msra.mxu0 %v3272
      %3923 = vmatprep.subr.bf16.mxu0 0
      %3924 = vmatpush1.bf16.msra.mxu0 %v3275
      %3925 = vmatprep.subr.bf16.mxu0 0
      %3926 = vmatpush1.bf16.msra.mxu0 %v3278
      %3927 = vmatprep.subr.bf16.mxu0 0
      %3928 = vmatpush1.bf16.msra.mxu0 %v3281
      %3929 = vmatprep.subr.bf16.mxu0 0
      %3930 = vmatpush1.bf16.msra.mxu0 %v3284
      %3931 = vmatprep.subr.bf16.mxu0 0
      %3932 = vmatpush1.bf16.msra.mxu0 %v3287
      %3933 = vmatprep.subr.bf16.mxu0 0
      %3934 = vmatpush1.bf16.msra.mxu0 %v3290
      %3935 = vmatprep.subr.bf16.mxu0 0
      %3936 = vmatpush1.bf16.msra.mxu0 %v3293
      %3937 = vmatprep.subr.bf16.mxu0 0
      %3938 = vmatpush1.bf16.msra.mxu0 %v3296
      %3939 = vmatprep.subr.bf16.mxu0 0
      %3940 = vmatpush1.bf16.msra.mxu0 %v3299
      %3941 = vmatprep.subr.bf16.mxu0 0
      %3942 = vmatpush1.bf16.msra.mxu0 %v3302
      %3943 = vmatprep.subr.bf16.mxu0 0
      %3944 = vmatpush1.bf16.msra.mxu0 %v3305
      %3945 = vmatprep.subr.bf16.mxu0 0
      %3946 = vmatpush1.bf16.msra.mxu0 %v3308
      %3947 = vmatprep.subr.bf16.mxu0 0
      %3948 = vmatpush1.bf16.msra.mxu0 %v3311
      %3949 = vmatprep.mubr.bf16.mxu0 %v2046
      %3950 = vmatmul.mubr.bf16.gmra.mrb[0].mxu0 %v2045
      %v3951 = vpop.f32.mrb[0].mxu0
      %v3952 = vadd.f32 %v3912, %v3951
      %v3953 = vpop.f32.mrb[0].mxu0
      %v3954 = vpop.f32.mrb[0].mxu0
      %v3955 = vpop.f32.mrb[0].mxu0
      %3956 = vdwg.mxu0
      %3957 = vmatprep.subr.bf16.mxu0 0
      %3958 = vmatpush1.bf16.msra.mxu0 %v3314
      %3959 = vmatprep.subr.bf16.mxu0 0
      %3960 = vmatpush1.bf16.msra.mxu0 %v3317
      %3961 = vmatprep.subr.bf16.mxu0 0
      %3962 = vmatpush1.bf16.msra.mxu0 %v3320
      %3963 = vmatprep.subr.bf16.mxu0 0
      %3964 = vmatpush1.bf16.msra.mxu0 %v3323
      %3965 = vmatprep.subr.bf16.mxu0 0
      %3966 = vmatpush1.bf16.msra.mxu0 %v3326
      %3967 = vmatprep.subr.bf16.mxu0 0
      %3968 = vmatpush1.bf16.msra.mxu0 %v3329
      %3969 = vmatprep.subr.bf16.mxu0 0
      %3970 = vmatpush1.bf16.msra.mxu0 %v3332
      %3971 = vmatprep.subr.bf16.mxu0 0
      %3972 = vmatpush1.bf16.msra.mxu0 %v3335
      %3973 = vmatprep.subr.bf16.mxu0 0
      %3974 = vmatpush1.bf16.msra.mxu0 %v3338
      %3975 = vmatprep.subr.bf16.mxu0 0
      %3976 = vmatpush1.bf16.msra.mxu0 %v3341
      %3977 = vmatprep.subr.bf16.mxu0 0
      %3978 = vmatpush1.bf16.msra.mxu0 %v3344
      %3979 = vmatprep.subr.bf16.mxu0 0
      %3980 = vmatpush1.bf16.msra.mxu0 %v3347
      %3981 = vmatprep.subr.bf16.mxu0 0
      %3982 = vmatpush1.bf16.msra.mxu0 %v3590
      %3983 = vmatprep.subr.bf16.mxu0 0
      %3984 = vmatpush1.bf16.msra.mxu0 0
      %3985 = vmatprep.subr.bf16.mxu0 0
      %3986 = vmatpush1.bf16.msra.mxu0 0
      %3987 = vmatprep.subr.bf16.mxu0 0
      %3988 = vmatpush1.bf16.msra.mxu0 0
      %3989 = vmatprep.mubr.bf16.mxu0 %v3580
      %3990 = vmatmul.mubr.bf16.gmra.mrb[0].mxu0 %v2047
      %v3991 = vpop.f32.mrb[0].mxu0
      %v3992 = vadd.f32 %v3952, %v3991
      %v3993 = vpop.f32.mrb[0].mxu0
      %v3994 = vpop.f32.mrb[0].mxu0
      %v3995 = vpop.f32.mrb[0].mxu0
      %3996 = vdwg.mxu0
      %4000 = vrot.lane.b32.xlu0 %v3791, 47
      %v4001 = vpop.permute.xlu0 %4000
      %4002 = vrot.lane.b32.xlu0 %v3793, 47
      %v4003 = vpop.permute.xlu0 %4002
      %4004 = vrot.lane.b32.xlu0 %v3992, 47
      %v4005 = vpop.permute.xlu0 %4004
      %vm4006 = vcmask 384000
      %v4007 = vsel %vm4006, %v4001, %v4003
      %v4008 = vsel %vm4006, %v4003, %v4005
      %vm4011 = vcmask 941056
      %v4012 = vsel %vm4011, %v4008, 0.0
      %4013 = vrot.lane.b32.xlu0 %v3791, 81
      %v4014 = vpop.permute.xlu0 %4013
      %4015 = vrot.lane.b32.xlu0 %v3793, 81
      %v4016 = vpop.permute.xlu0 %4015
      %vm4017 = vcmask 662528
      %v4018 = vsel %vm4017, %v4014, %v4016
      %v4022 = vsel %vm4017, 0.0, %v4014
      %v4023 = vsel %vm1317, %v4022, %v3791
      %v4024 = vsel %vm1317, %v4018, %v3793
      %v4025 = vsel %vm1317, %v4016, %v3992
      %v4026 = vsel %vm572, %v4007, %v4023
      %v4027 = vsel %vm572, %v4012, %v4024
      %v4028 = vsel %vm572, 0.0, %v4025
      %4032 = vrot.lane.b32.xlu0 %v4026, 127
      %v4033 = vpop.permute.xlu0 %4032
      %4034 = vrot.lane.b32.xlu0 %v4027, 127
      %v4035 = vpop.permute.xlu0 %4034
      %4036 = vrot.lane.b32.xlu0 %v4028, 127
      %v4037 = vpop.permute.xlu0 %4036
      %v4038 = vsel %vm625, %v4033, %v4035
      %v4039 = vsel %vm625, %v4035, %v4037
      %4043 = vrot.lane.b32.xlu0 %v4026, 126
      %v4044 = vpop.permute.xlu0 %4043
      %4045 = vrot.lane.b32.xlu0 %v4027, 126
      %v4046 = vpop.permute.xlu0 %4045
      %4047 = vrot.lane.b32.xlu0 %v4028, 126
      %v4048 = vpop.permute.xlu0 %4047
      %v4049 = vsel %vm665, %v4044, %v4046
      %v4050 = vsel %vm665, %v4046, %v4048
      %4054 = vrot.lane.b32.xlu0 %v4026, 119
      %v4055 = vpop.permute.xlu0 %4054
      %4056 = vrot.lane.b32.xlu0 %v4027, 119
      %v4057 = vpop.permute.xlu0 %4056
      %4058 = vrot.lane.b32.xlu0 %v4028, 119
      %v4059 = vpop.permute.xlu0 %4058
      %vm4060 = vcmask 973824
      %v4061 = vsel %vm4060, %v4055, %v4057
      %v4062 = vsel %vm4060, %v4057, %v4059
      %4066 = vrot.lane.b32.xlu0 %v4026, 118
      %v4067 = vpop.permute.xlu0 %4066
      %4068 = vrot.lane.b32.xlu0 %v4027, 118
      %v4069 = vpop.permute.xlu0 %4068
      %4070 = vrot.lane.b32.xlu0 %v4028, 118
      %v4071 = vpop.permute.xlu0 %4070
      %vm4072 = vcmask 965632
      %v4073 = vsel %vm4072, %v4067, %v4069
      %v4074 = vsel %vm4072, %v4069, %v4071
      %4078 = vrot.lane.b32.xlu0 %v4026, 117
      %v4079 = vpop.permute.xlu0 %4078
      %4080 = vrot.lane.b32.xlu0 %v4027, 117
      %v4081 = vpop.permute.xlu0 %4080
      %4082 = vrot.lane.b32.xlu0 %v4028, 117
      %v4083 = vpop.permute.xlu0 %4082
      %vm4084 = vcmask 957440
      %v4085 = vsel %vm4084, %v4079, %v4081
      %v4086 = vsel %vm4084, %v4081, %v4083
      %4090 = vrot.lane.b32.xlu0 %v4026, 110
      %v4091 = vpop.permute.xlu0 %4090
      %4092 = vrot.lane.b32.xlu0 %v4027, 110
      %v4093 = vpop.permute.xlu0 %4092
      %4094 = vrot.lane.b32.xlu0 %v4028, 110
      %v4095 = vpop.permute.xlu0 %4094
      %v4096 = vsel %vm705, %v4091, %v4093
      %v4097 = vsel %vm705, %v4093, %v4095
      %4101 = vrot.lane.b32.xlu0 %v4026, 109
      %v4102 = vpop.permute.xlu0 %4101
      %4103 = vrot.lane.b32.xlu0 %v4027, 109
      %v4104 = vpop.permute.xlu0 %4103
      %4105 = vrot.lane.b32.xlu0 %v4028, 109
      %v4106 = vpop.permute.xlu0 %4105
      %v4107 = vsel %vm745, %v4102, %v4104
      %v4108 = vsel %vm745, %v4104, %v4106
      %4112 = vrot.lane.b32.xlu0 %v4026, 108
      %v4113 = vpop.permute.xlu0 %4112
      %4114 = vrot.lane.b32.xlu0 %v4027, 108
      %v4115 = vpop.permute.xlu0 %4114
      %4116 = vrot.lane.b32.xlu0 %v4028, 108
      %v4117 = vpop.permute.xlu0 %4116
      %v4118 = vsel %vm785, %v4113, %v4115
      %v4119 = vsel %vm785, %v4115, %v4117
      %v4123 = vpack.c.bf16 %v4038, %v4026
      %v4124 = vpack.c.bf16 %v4039, %v4027
      %v4125 = vpack.c.bf16 %v4037, %v4028
      %v4126 = vpack.c.bf16 %v4061, %v4049
      %v4127 = vpack.c.bf16 %v4062, %v4050
      %v4128 = vpack.c.bf16 %v4059, %v4048
      %v4129 = vpack.c.bf16 %v4085, %v4073
      %v4130 = vpack.c.bf16 %v4086, %v4074
      %v4131 = vpack.c.bf16 %v4083, %v4071
      %v4132 = vpack.c.bf16 %v4107, %v4096
      %v4133 = vpack.c.bf16 %v4108, %v4097
      %v4134 = vpack.c.bf16 %v4106, %v4095
      %v4135 = vpack.c.bf16 %v4118, %v4118
      %v4136 = vpack.c.bf16 %v4119, %v4119
      %v4137 = vpack.c.bf16 %v4117, %v4117
      %v4138 = vld [vmem:[%s7] sm:$0xf]
      %v4139 = vld [vmem:[%s7 + $0x4] sm:$0xf]
      %v4140 = vld [vmem:[%s8] sm:$0xff]
      %v4141 = vld [vmem:[%s8 + $0x8] sm:$0xff]
      %4143 = vset.pattern.permute.xlu0 0
      %4144 = vperm.xlu0 %4143, %v4140
      %v4145 = vpop.permute.xlu0 %4144
      %4148 = vset.pattern.permute.xlu0 0
      %4149 = vperm.xlu0 %4148, %v4141
      %v4150 = vpop.permute.xlu0 %4149
      %v4154 = vunpack.c.l.b16 %v4138
      %v4155 = vunpack.c.l.b16 %v4139
      %v4156 = vpack.c.b16 %v4155, %v4154
      %v4158 = vsel %vm992, %v4156, 0
      %v4161 = vsel %vm996, %v4135, 0
      %v4164 = vsel %vm996, %v4136, 0
      %v4167 = vsel %vm996, %v4137, 0
      %4169 = vmatprep.subr.bf16.mxu0 %v4124
      %4170 = vmatpush1.bf16.msra.mxu0 %v4123
      %4171 = vmatprep.subr.bf16.mxu0 %v4127
      %4172 = vmatpush1.bf16.msra.mxu0 %v4126
      %4173 = vmatprep.subr.bf16.mxu0 %v4130
      %4174 = vmatpush1.bf16.msra.mxu0 %v4129
      %4175 = vmatprep.subr.bf16.mxu0 %v4133
      %4176 = vmatpush1.bf16.msra.mxu0 %v4132
      %4177 = vmatprep.subr.bf16.mxu0 %v4164
      %4178 = vmatpush1.bf16.msra.mxu0 %v4161
      %4179 = vmatprep.subr.bf16.mxu0 0
      %4180 = vmatpush1.bf16.msra.mxu0 0
      %4181 = vmatprep.subr.bf16.mxu0 0
      %4182 = vmatpush1.bf16.msra.mxu0 0
      %4183 = vmatprep.subr.bf16.mxu0 0
      %4184 = vmatpush1.bf16.msra.mxu0 0
      %4185 = vmatprep.subr.bf16.mxu0 0
      %4186 = vmatpush1.bf16.msra.mxu0 0
      %4187 = vmatprep.subr.bf16.mxu0 0
      %4188 = vmatpush1.bf16.msra.mxu0 0
      %4189 = vmatprep.subr.bf16.mxu0 0
      %4190 = vmatpush1.bf16.msra.mxu0 0
      %4191 = vmatprep.subr.bf16.mxu0 0
      %4192 = vmatpush1.bf16.msra.mxu0 0
      %4193 = vmatprep.subr.bf16.mxu0 0
      %4194 = vmatpush1.bf16.msra.mxu0 0
      %4195 = vmatprep.subr.bf16.mxu0 0
      %4196 = vmatpush1.bf16.msra.mxu0 0
      %4197 = vmatprep.subr.bf16.mxu0 0
      %4198 = vmatpush1.bf16.msra.mxu0 0
      %4199 = vmatprep.subr.bf16.mxu0 0
      %4200 = vmatpush1.bf16.msra.mxu0 0
      %4201 = vmatprep.mubr.bf16.mxu0 0
      %4202 = vmatmul.mubr.bf16.gmra.mrb[0].mxu0 %v4158
      %v4203 = vpop.f32.mrb[0].mxu0
      %v4204 = vadd.f32 %v4145, %v4203
      %v4205 = vpop.f32.mrb[0].mxu0
      %v4206 = vadd.f32 %v4145, %v4205
      %v4207 = vpop.f32.mrb[0].mxu0
      %v4208 = vadd.f32 %v4150, %v4207
      %v4209 = vpop.f32.mrb[0].mxu0
      %v4210 = vadd.f32 %v4150, %v4209
      %4211 = vdwg.mxu0
      %4212 = vmatprep.subr.bf16.mxu0 0
      %4213 = vmatpush1.bf16.msra.mxu0 %v4125
      %4214 = vmatprep.subr.bf16.mxu0 0
      %4215 = vmatpush1.bf16.msra.mxu0 %v4128
      %4216 = vmatprep.subr.bf16.mxu0 0
      %4217 = vmatpush1.bf16.msra.mxu0 %v4131
      %4218 = vmatprep.subr.bf16.mxu0 0
      %4219 = vmatpush1.bf16.msra.mxu0 %v4134
      %4220 = vmatprep.subr.bf16.mxu0 0
      %4221 = vmatpush1.bf16.msra.mxu0 %v4167
      %4222 = vmatprep.subr.bf16.mxu0 0
      %4223 = vmatpush1.bf16.msra.mxu0 0
      %4224 = vmatprep.subr.bf16.mxu0 0
      %4225 = vmatpush1.bf16.msra.mxu0 0
      %4226 = vmatprep.subr.bf16.mxu0 0
      %4227 = vmatpush1.bf16.msra.mxu0 0
      %4228 = vmatprep.subr.bf16.mxu0 0
      %4229 = vmatpush1.bf16.msra.mxu0 0
      %4230 = vmatprep.subr.bf16.mxu0 0
      %4231 = vmatpush1.bf16.msra.mxu0 0
      %4232 = vmatprep.subr.bf16.mxu0 0
      %4233 = vmatpush1.bf16.msra.mxu0 0
      %4234 = vmatprep.subr.bf16.mxu0 0
      %4235 = vmatpush1.bf16.msra.mxu0 0
      %4236 = vmatprep.subr.bf16.mxu0 0
      %4237 = vmatpush1.bf16.msra.mxu0 0
      %4238 = vmatprep.subr.bf16.mxu0 0
      %4239 = vmatpush1.bf16.msra.mxu0 0
      %4240 = vmatprep.subr.bf16.mxu0 0
      %4241 = vmatpush1.bf16.msra.mxu0 0
      %4242 = vmatprep.subr.bf16.mxu0 0
      %4243 = vmatpush1.bf16.msra.mxu0 0
      %4244 = vmatprep.mubr.bf16.mxu0 0
      %4245 = vmatmul.mubr.bf16.gmra.mrb[0].mxu0 %v4158
      %v4246 = vpop.f32.mrb[0].mxu0
      %v4247 = vadd.f32 %v4145, %v4246
      %v4248 = vpop.f32.mrb[0].mxu0
      %v4249 = vpop.f32.mrb[0].mxu0
      %v4250 = vadd.f32 %v4150, %v4249
      %v4251 = vpop.f32.mrb[0].mxu0
      %4252 = vdwg.mxu0
      %v4253 = vtanh.pop %v4204
      %v4254 = vtanh.pop %v4206
      %v4255 = vtanh.pop %v4247
      %v4256 = vtanh.pop %v4208
      %v4257 = vtanh.pop %v4210
      %v4258 = vtanh.pop %v4250
      %4265 = vrot.lane.b32.xlu0 %v4253, 47
      %v4266 = vpop.permute.xlu0 %4265
      %4267 = vrot.lane.b32.xlu0 %v4254, 47
      %v4268 = vpop.permute.xlu0 %4267
      %4269 = vrot.lane.b32.xlu0 %v4255, 47
      %v4270 = vpop.permute.xlu0 %4269
      %4271 = vrot.lane.b32.xlu0 %v4256, 47
      %v4272 = vpop.permute.xlu0 %4271
      %4273 = vrot.lane.b32.xlu0 %v4257, 47
      %v4274 = vpop.permute.xlu0 %4273
      %4275 = vrot.lane.b32.xlu0 %v4258, 47
      %v4276 = vpop.permute.xlu0 %4275
      %v4277 = vsel %vm4006, %v4266, %v4268
      %v4278 = vsel %vm4006, %v4268, %v4270
      %v4279 = vsel %vm4006, %v4272, %v4274
      %v4280 = vsel %vm4006, %v4274, %v4276
      %vm4285 = vcmask 777216
      %v4286 = vsel %vm4285, %v4278, 0.0
      %v4287 = vsel %vm4285, %v4280, 0.0
      %4288 = vrot.lane.b32.xlu0 %v4253, 81
      %v4289 = vpop.permute.xlu0 %4288
      %4290 = vrot.lane.b32.xlu0 %v4254, 81
      %v4291 = vpop.permute.xlu0 %4290
      %4292 = vrot.lane.b32.xlu0 %v4256, 81
      %v4293 = vpop.permute.xlu0 %4292
      %4294 = vrot.lane.b32.xlu0 %v4257, 81
      %v4295 = vpop.permute.xlu0 %4294
      %v4296 = vsel %vm4017, %v4289, %v4291
      %v4297 = vsel %vm4017, %v4293, %v4295
      %v4304 = vsel %vm4017, 0.0, %v4289
      %v4305 = vsel %vm4017, 0.0, %v4293
      %v4306 = vadd.s32 %v570, 8
      %vm4307 = vcmp.lt.s32.totalorder %v570, 5
      %vm4308 = vcmp.lt.s32.totalorder %v4306, 5
      %vm4309 = vcmp.lt.s32.totalorder %v570, 10
      %vm4310 = vcmp.lt.s32.totalorder %v4306, 10
      %v4311 = vsel %vm4309, %v4304, %v4253
      %v4312 = vsel %vm4309, %v4296, %v4254
      %v4313 = vsel %vm4309, %v4291, %v4255
      %v4314 = vsel %vm4310, %v4305, %v4256
      %v4315 = vsel %vm4310, %v4297, %v4257
      %v4316 = vsel %vm4310, %v4295, %v4258
      %v4317 = vsel %vm4307, %v4277, %v4311
      %v4318 = vsel %vm4307, %v4286, %v4312
      %v4319 = vsel %vm4307, 0.0, %v4313
      %v4320 = vsel %vm4308, %v4279, %v4314
      %v4321 = vsel %vm4308, %v4287, %v4315
      %v4322 = vsel %vm4308, 0.0, %v4316
      %4329 = vrot.lane.b32.xlu0 %v4317, 127
      %v4330 = vpop.permute.xlu0 %4329
      %4331 = vrot.lane.b32.xlu0 %v4318, 127
      %v4332 = vpop.permute.xlu0 %4331
      %4333 = vrot.lane.b32.xlu0 %v4319, 127
      %v4334 = vpop.permute.xlu0 %4333
      %4335 = vrot.lane.b32.xlu0 %v4320, 127
      %v4336 = vpop.permute.xlu0 %4335
      %4337 = vrot.lane.b32.xlu0 %v4321, 127
      %v4338 = vpop.permute.xlu0 %4337
      %4339 = vrot.lane.b32.xlu0 %v4322, 127
      %v4340 = vpop.permute.xlu0 %4339
      %v4341 = vsel %vm625, %v4330, %v4332
      %v4342 = vsel %vm625, %v4332, %v4334
      %v4343 = vsel %vm625, %v4336, %v4338
      %v4344 = vsel %vm625, %v4338, %v4340
      %4351 = vrot.lane.b32.xlu0 %v4317, 126
      %v4352 = vpop.permute.xlu0 %4351
      %4353 = vrot.lane.b32.xlu0 %v4318, 126
      %v4354 = vpop.permute.xlu0 %4353
      %4355 = vrot.lane.b32.xlu0 %v4319, 126
      %v4356 = vpop.permute.xlu0 %4355
      %4357 = vrot.lane.b32.xlu0 %v4320, 126
      %v4358 = vpop.permute.xlu0 %4357
      %4359 = vrot.lane.b32.xlu0 %v4321, 126
      %v4360 = vpop.permute.xlu0 %4359
      %4361 = vrot.lane.b32.xlu0 %v4322, 126
      %v4362 = vpop.permute.xlu0 %4361
      %v4363 = vsel %vm665, %v4352, %v4354
      %v4364 = vsel %vm665, %v4354, %v4356
      %v4365 = vsel %vm665, %v4358, %v4360
      %v4366 = vsel %vm665, %v4360, %v4362
      %4373 = vrot.lane.b32.xlu0 %v4317, 119
      %v4374 = vpop.permute.xlu0 %4373
      %4375 = vrot.lane.b32.xlu0 %v4318, 119
      %v4376 = vpop.permute.xlu0 %4375
      %4377 = vrot.lane.b32.xlu0 %v4319, 119
      %v4378 = vpop.permute.xlu0 %4377
      %4379 = vrot.lane.b32.xlu0 %v4320, 119
      %v4380 = vpop.permute.xlu0 %4379
      %4381 = vrot.lane.b32.xlu0 %v4321, 119
      %v4382 = vpop.permute.xlu0 %4381
      %4383 = vrot.lane.b32.xlu0 %v4322, 119
      %v4384 = vpop.permute.xlu0 %4383
      %v4385 = vsel %vm4060, %v4374, %v4376
      %v4386 = vsel %vm4060, %v4376, %v4378
      %v4387 = vsel %vm4060, %v4380, %v4382
      %v4388 = vsel %vm4060, %v4382, %v4384
      %4395 = vrot.lane.b32.xlu0 %v4317, 118
      %v4396 = vpop.permute.xlu0 %4395
      %4397 = vrot.lane.b32.xlu0 %v4318, 118
      %v4398 = vpop.permute.xlu0 %4397
      %4399 = vrot.lane.b32.xlu0 %v4319, 118
      %v4400 = vpop.permute.xlu0 %4399
      %4401 = vrot.lane.b32.xlu0 %v4320, 118
      %v4402 = vpop.permute.xlu0 %4401
      %4403 = vrot.lane.b32.xlu0 %v4321, 118
      %v4404 = vpop.permute.xlu0 %4403
      %4405 = vrot.lane.b32.xlu0 %v4322, 118
      %v4406 = vpop.permute.xlu0 %4405
      %v4407 = vsel %vm4072, %v4396, %v4398
      %v4408 = vsel %vm4072, %v4398, %v4400
      %v4409 = vsel %vm4072, %v4402, %v4404
      %v4410 = vsel %vm4072, %v4404, %v4406
      %4417 = vrot.lane.b32.xlu0 %v4317, 117
      %v4418 = vpop.permute.xlu0 %4417
      %4419 = vrot.lane.b32.xlu0 %v4318, 117
      %v4420 = vpop.permute.xlu0 %4419
      %4421 = vrot.lane.b32.xlu0 %v4319, 117
      %v4422 = vpop.permute.xlu0 %4421
      %4423 = vrot.lane.b32.xlu0 %v4320, 117
      %v4424 = vpop.permute.xlu0 %4423
      %4425 = vrot.lane.b32.xlu0 %v4321, 117
      %v4426 = vpop.permute.xlu0 %4425
      %4427 = vrot.lane.b32.xlu0 %v4322, 117
      %v4428 = vpop.permute.xlu0 %4427
      %v4429 = vsel %vm4084, %v4418, %v4420
      %v4430 = vsel %vm4084, %v4420, %v4422
      %v4431 = vsel %vm4084, %v4424, %v4426
      %v4432 = vsel %vm4084, %v4426, %v4428
      %4439 = vrot.lane.b32.xlu0 %v4317, 110
      %v4440 = vpop.permute.xlu0 %4439
      %4441 = vrot.lane.b32.xlu0 %v4318, 110
      %v4442 = vpop.permute.xlu0 %4441
      %4443 = vrot.lane.b32.xlu0 %v4319, 110
      %v4444 = vpop.permute.xlu0 %4443
      %4445 = vrot.lane.b32.xlu0 %v4320, 110
      %v4446 = vpop.permute.xlu0 %4445
      %4447 = vrot.lane.b32.xlu0 %v4321, 110
      %v4448 = vpop.permute.xlu0 %4447
      %4449 = vrot.lane.b32.xlu0 %v4322, 110
      %v4450 = vpop.permute.xlu0 %4449
      %v4451 = vsel %vm705, %v4440, %v4442
      %v4452 = vsel %vm705, %v4442, %v4444
      %v4453 = vsel %vm705, %v4446, %v4448
      %v4454 = vsel %vm705, %v4448, %v4450
      %4461 = vrot.lane.b32.xlu0 %v4317, 109
      %v4462 = vpop.permute.xlu0 %4461
      %4463 = vrot.lane.b32.xlu0 %v4318, 109
      %v4464 = vpop.permute.xlu0 %4463
      %4465 = vrot.lane.b32.xlu0 %v4319, 109
      %v4466 = vpop.permute.xlu0 %4465
      %4467 = vrot.lane.b32.xlu0 %v4320, 109
      %v4468 = vpop.permute.xlu0 %4467
      %4469 = vrot.lane.b32.xlu0 %v4321, 109
      %v4470 = vpop.permute.xlu0 %4469
      %4471 = vrot.lane.b32.xlu0 %v4322, 109
      %v4472 = vpop.permute.xlu0 %4471
      %v4473 = vsel %vm745, %v4462, %v4464
      %v4474 = vsel %vm745, %v4464, %v4466
      %v4475 = vsel %vm745, %v4468, %v4470
      %v4476 = vsel %vm745, %v4470, %v4472
      %4483 = vrot.lane.b32.xlu0 %v4317, 108
      %v4484 = vpop.permute.xlu0 %4483
      %4485 = vrot.lane.b32.xlu0 %v4318, 108
      %v4486 = vpop.permute.xlu0 %4485
      %4487 = vrot.lane.b32.xlu0 %v4319, 108
      %v4488 = vpop.permute.xlu0 %4487
      %4489 = vrot.lane.b32.xlu0 %v4320, 108
      %v4490 = vpop.permute.xlu0 %4489
      %4491 = vrot.lane.b32.xlu0 %v4321, 108
      %v4492 = vpop.permute.xlu0 %4491
      %4493 = vrot.lane.b32.xlu0 %v4322, 108
      %v4494 = vpop.permute.xlu0 %4493
      %v4495 = vsel %vm785, %v4484, %v4486
      %v4496 = vsel %vm785, %v4486, %v4488
      %v4497 = vsel %vm785, %v4490, %v4492
      %v4498 = vsel %vm785, %v4492, %v4494
      %v4505 = vpack.c.bf16 %v4320, %v4317
      %v4506 = vpack.c.bf16 %v4321, %v4318
      %v4507 = vpack.c.bf16 %v4322, %v4319
      %v4508 = vpack.c.bf16 %v4343, %v4341
      %v4509 = vpack.c.bf16 %v4344, %v4342
      %v4510 = vpack.c.bf16 %v4340, %v4334
      %v4511 = vpack.c.bf16 %v4365, %v4363
      %v4512 = vpack.c.bf16 %v4366, %v4364
      %v4513 = vpack.c.bf16 %v4362, %v4356
      %v4514 = vpack.c.bf16 %v4387, %v4385
      %v4515 = vpack.c.bf16 %v4388, %v4386
      %v4516 = vpack.c.bf16 %v4384, %v4378
      %v4517 = vpack.c.bf16 %v4409, %v4407
      %v4518 = vpack.c.bf16 %v4410, %v4408
      %v4519 = vpack.c.bf16 %v4406, %v4400
      %v4520 = vpack.c.bf16 %v4431, %v4429
      %v4521 = vpack.c.bf16 %v4432, %v4430
      %v4522 = vpack.c.bf16 %v4428, %v4422
      %v4523 = vpack.c.bf16 %v4453, %v4451
      %v4524 = vpack.c.bf16 %v4454, %v4452
      %v4525 = vpack.c.bf16 %v4450, %v4444
      %v4526 = vpack.c.bf16 %v4475, %v4473
      %v4527 = vpack.c.bf16 %v4476, %v4474
      %v4528 = vpack.c.bf16 %v4472, %v4466
      %v4529 = vpack.c.bf16 %v4497, %v4495
      %v4530 = vpack.c.bf16 %v4498, %v4496
      %v4531 = vpack.c.bf16 %v4494, %v4488
      %v4532 = vld [vmem:[%s9] sm:$0xff]
      %v4533 = vld [vmem:[%s9 + $0x8] sm:$0xff]
      %v4534 = vld [vmem:[%s10] sm:$0xff]
      %v4535 = vld [vmem:[%s10 + $0x8] sm:$0xff]
      %4537 = vset.pattern.permute.xlu0 0
      %4538 = vperm.xlu0 %4537, %v4534
      %v4539 = vpop.permute.xlu0 %4538
      %4542 = vset.pattern.permute.xlu0 0
      %4543 = vperm.xlu0 %4542, %v4535
      %v4544 = vpop.permute.xlu0 %4543
      %v4548 = vunpack.c.l.b16 %v4532
      %v4549 = vunpack.c.h.b16 %v4532
      %v4550 = vunpack.c.l.b16 %v4533
      %v4551 = vunpack.c.h.b16 %v4533
      %v4552 = vpack.c.b16 %v4550, %v4548
      %v4553 = vpack.c.b16 %v4551, %v4549
      %vm4555 = vcmask 130048
      %v4557 = vsel %vm4555, %v4553, 0
      %4559 = vmatprep.subr.bf16.mxu0 %v4506
      %4560 = vmatpush1.bf16.msra.mxu0 %v4505
      %4561 = vmatprep.subr.bf16.mxu0 %v4509
      %4562 = vmatpush1.bf16.msra.mxu0 %v4508
      %4563 = vmatprep.subr.bf16.mxu0 %v4512
      %4564 = vmatpush1.bf16.msra.mxu0 %v4511
      %4565 = vmatprep.subr.bf16.mxu0 %v4515
      %4566 = vmatpush1.bf16.msra.mxu0 %v4514
      %4567 = vmatprep.subr.bf16.mxu0 %v4518
      %4568 = vmatpush1.bf16.msra.mxu0 %v4517
      %4569 = vmatprep.subr.bf16.mxu0 %v4521
      %4570 = vmatpush1.bf16.msra.mxu0 %v4520
      %4571 = vmatprep.subr.bf16.mxu0 %v4524
      %4572 = vmatpush1.bf16.msra.mxu0 %v4523
      %4573 = vmatprep.subr.bf16.mxu0 %v4527
      %4574 = vmatpush1.bf16.msra.mxu0 %v4526
      %4575 = vmatprep.subr.bf16.mxu0 %v4530
      %4576 = vmatpush1.bf16.msra.mxu0 %v4529
      %4577 = vmatprep.subr.bf16.mxu0 0
      %4578 = vmatpush1.bf16.msra.mxu0 0
      %4579 = vmatprep.subr.bf16.mxu0 0
      %4580 = vmatpush1.bf16.msra.mxu0 0
      %4581 = vmatprep.subr.bf16.mxu0 0
      %4582 = vmatpush1.bf16.msra.mxu0 0
      %4583 = vmatprep.subr.bf16.mxu0 0
      %4584 = vmatpush1.bf16.msra.mxu0 0
      %4585 = vmatprep.subr.bf16.mxu0 0
      %4586 = vmatpush1.bf16.msra.mxu0 0
      %4587 = vmatprep.subr.bf16.mxu0 0
      %4588 = vmatpush1.bf16.msra.mxu0 0
      %4589 = vmatprep.subr.bf16.mxu0 0
      %4590 = vmatpush1.bf16.msra.mxu0 0
      %4591 = vmatprep.mubr.bf16.mxu0 %v4557
      %4592 = vmatmul.mubr.bf16.gmra.mrb[0].mxu0 %v4552
      %v4593 = vpop.f32.mrb[0].mxu0
      %v4594 = vadd.f32 %v4539, %v4593
      %v4595 = vpop.f32.mrb[0].mxu0
      %v4596 = vadd.f32 %v4539, %v4595
      %v4597 = vpop.f32.mrb[0].mxu0
      %v4598 = vadd.f32 %v4544, %v4597
      %v4599 = vpop.f32.mrb[0].mxu0
      %v4600 = vadd.f32 %v4544, %v4599
      %4601 = vdwg.mxu0
      %4602 = vmatprep.subr.bf16.mxu0 0
      %4603 = vmatpush1.bf16.msra.mxu0 %v4507
      %4604 = vmatprep.subr.bf16.mxu0 0
      %4605 = vmatpush1.bf16.msra.mxu0 %v4510
      %4606 = vmatprep.subr.bf16.mxu0 0
      %4607 = vmatpush1.bf16.msra.mxu0 %v4513
      %4608 = vmatprep.subr.bf16.mxu0 0
      %4609 = vmatpush1.bf16.msra.mxu0 %v4516
      %4610 = vmatprep.subr.bf16.mxu0 0
      %4611 = vmatpush1.bf16.msra.mxu0 %v4519
      %4612 = vmatprep.subr.bf16.mxu0 0
      %4613 = vmatpush1.bf16.msra.mxu0 %v4522
      %4614 = vmatprep.subr.bf16.mxu0 0
      %4615 = vmatpush1.bf16.msra.mxu0 %v4525
      %4616 = vmatprep.subr.bf16.mxu0 0
      %4617 = vmatpush1.bf16.msra.mxu0 %v4528
      %4618 = vmatprep.subr.bf16.mxu0 0
      %4619 = vmatpush1.bf16.msra.mxu0 %v4531
      %4620 = vmatprep.subr.bf16.mxu0 0
      %4621 = vmatpush1.bf16.msra.mxu0 0
      %4622 = vmatprep.subr.bf16.mxu0 0
      %4623 = vmatpush1.bf16.msra.mxu0 0
      %4624 = vmatprep.subr.bf16.mxu0 0
      %4625 = vmatpush1.bf16.msra.mxu0 0
      %4626 = vmatprep.subr.bf16.mxu0 0
      %4627 = vmatpush1.bf16.msra.mxu0 0
      %4628 = vmatprep.subr.bf16.mxu0 0
      %4629 = vmatpush1.bf16.msra.mxu0 0
      %4630 = vmatprep.subr.bf16.mxu0 0
      %4631 = vmatpush1.bf16.msra.mxu0 0
      %4632 = vmatprep.subr.bf16.mxu0 0
      %4633 = vmatpush1.bf16.msra.mxu0 0
      %4634 = vmatprep.mubr.bf16.mxu0 %v4557
      %4635 = vmatmul.mubr.bf16.gmra.mrb[0].mxu0 %v4552
      %v4636 = vpop.f32.mrb[0].mxu0
      %v4637 = vadd.f32 %v4539, %v4636
      %v4638 = vpop.f32.mrb[0].mxu0
      %v4639 = vpop.f32.mrb[0].mxu0
      %v4640 = vadd.f32 %v4544, %v4639
      %v4641 = vpop.f32.mrb[0].mxu0
      %4642 = vdwg.mxu0
      %v4643 = vtanh.pop %v4594
      %v4644 = vtanh.pop %v4596
      %v4645 = vtanh.pop %v4637
      %v4646 = vtanh.pop %v4598
      %v4647 = vtanh.pop %v4600
      %v4648 = vtanh.pop %v4640
      %v4649 = vld [vmem:[%s469] sm:$0x7]
      %v4651 = vlaneseq
      %v4652 = vshrl.u32 %v4651, 7
      %v4653 = vsub.s32 0, %v4652
      %v4654 = vrot.slane %v4649, %v4653
      %v4655 = vlaneseq
      %v4656 = vshrl.u32 %v4655, 7
      %v4657 = vsub.s32 1, %v4656
      %v4658 = vrot.slane %v4649, %v4657
      %v4659 = vlaneseq
      %v4660 = vshrl.u32 %v4659, 7
      %v4661 = vsub.s32 2, %v4660
      %v4662 = vrot.slane %v4649, %v4661
      %v4666 = vmul.f32 %v4654, %v4643
      %v4667 = vmul.f32 %v4658, %v4644
      %v4668 = vmul.f32 %v4662, %v4645
      %v4669 = vmul.f32 %v4654, %v4646
      %v4670 = vmul.f32 %v4658, %v4647
      %v4671 = vmul.f32 %v4662, %v4648
      %v4672 = vtanh.pop %v4666
      %v4673 = vtanh.pop %v4667
      %v4674 = vtanh.pop %v4668
      %v4675 = vtanh.pop %v4669
      %v4676 = vtanh.pop %v4670
      %v4677 = vtanh.pop %v4671
      %v4678 = vpack.c.bf16 %v4675, %v4672
      %v4679 = vpack.c.bf16 %v4676, %v4673
      %v4680 = vpack.c.bf16 %v4677, %v4674
      %v4681 = vld [vmem:[%s12] sm:$0xf]
      %v4682 = vld [vmem:[%s12 + $0x4] sm:$0xf]
      %v4683 = vld [vmem:[%s12 + $0x8] sm:$0xf]
      %v4684 = vld [vmem:[%s12 + $0xc] sm:$0xf]
      %v4685 = vld [vmem:[%s12 + $0x10] sm:$0xf]
      %v4686 = vld [vmem:[%s12 + $0x14] sm:$0xf]
      %v4687 = vld [vmem:[%s12 + $0x18] sm:$0xf]
      %v4688 = vld [vmem:[%s12 + $0x1c] sm:$0xf]
      %v4689 = vld [vmem:[%s12 + $0x20] sm:$0xf]
      %v4690 = vld [vmem:[%s12 + $0x24] sm:$0xf]
      %v4691 = vld [vmem:[%s12 + $0x28] sm:$0xf]
      %v4692 = vld [vmem:[%s12 + $0x2c] sm:$0xf]
      %v4693 = vld [vmem:[%s12 + $0x30] sm:$0xf]
      %v4694 = vld [vmem:[%s12 + $0x34] sm:$0xf]
      %v4695 = vld [vmem:[%s12 + $0x38] sm:$0xf]
      %v4696 = vld [vmem:[%s12 + $0x3c] sm:$0xf]
      %v4697 = vld [vmem:[%s12 + $0x40] sm:$0xf]
      %v4698 = vld [vmem:[%s12 + $0x44] sm:$0xf]
      %v4699 = vld [vmem:[%s12 + $0x48] sm:$0xf]
      %v4700 = vld [vmem:[%s12 + $0x4c] sm:$0xf]
      %v4701 = vld [vmem:[%s12 + $0x50] sm:$0xf]
      %v4702 = vld [vmem:[%s12 + $0x54] sm:$0xf]
      %v4703 = vld [vmem:[%s12 + $0x58] sm:$0xf]
      %v4704 = vld [vmem:[%s12 + $0x5c] sm:$0xf]
      %v4705 = vld [vmem:[%s12 + $0x60] sm:$0xf]
      %v4706 = vld [vmem:[%s12 + $0x64] sm:$0xf]
      %v4707 = vld [vmem:[%s12 + $0x68] sm:$0xf]
      %v4708 = vld [vmem:[%s12 + $0x6c] sm:$0xf]
      %v4709 = vld [vmem:[%s12 + $0x70] sm:$0xf]
      %v4710 = vld [vmem:[%s12 + $0x74] sm:$0xf]
      %v4711 = vld [vmem:[%s12 + $0x78] sm:$0xf]
      %v4712 = vld [vmem:[%s12 + $0x7c] sm:$0xf]
      %v4713 = vld [vmem:[%s12 + $0x80] sm:$0xf]
      %v4714 = vld [vmem:[%s12 + $0x84] sm:$0xf]
      %v4715 = vld [vmem:[%s12 + $0x88] sm:$0xf]
      %v4716 = vld [vmem:[%s12 + $0x8c] sm:$0x3]
      %v4753 = vunpack.c.l.b16 %v4681
      %v4754 = vunpack.c.l.b16 %v4682
      %v4755 = vunpack.c.l.b16 %v4683
      %v4756 = vunpack.c.l.b16 %v4684
      %v4757 = vunpack.c.l.b16 %v4685
      %v4758 = vunpack.c.l.b16 %v4686
      %v4759 = vunpack.c.l.b16 %v4687
      %v4760 = vunpack.c.l.b16 %v4688
      %v4761 = vunpack.c.l.b16 %v4689
      %v4762 = vunpack.c.l.b16 %v4690
      %v4763 = vunpack.c.l.b16 %v4691
      %v4764 = vunpack.c.l.b16 %v4692
      %v4765 = vunpack.c.l.b16 %v4693
      %v4766 = vunpack.c.l.b16 %v4694
      %v4767 = vunpack.c.l.b16 %v4695
      %v4768 = vunpack.c.l.b16 %v4696
      %v4769 = vunpack.c.l.b16 %v4697
      %v4770 = vunpack.c.l.b16 %v4698
      %v4771 = vunpack.c.l.b16 %v4699
      %v4772 = vunpack.c.l.b16 %v4700
      %v4773 = vunpack.c.l.b16 %v4701
      %v4774 = vunpack.c.l.b16 %v4702
      %v4775 = vunpack.c.l.b16 %v4703
      %v4776 = vunpack.c.l.b16 %v4704
      %v4777 = vunpack.c.l.b16 %v4705
      %v4778 = vunpack.c.l.b16 %v4706
      %v4779 = vunpack.c.l.b16 %v4707
      %v4780 = vunpack.c.l.b16 %v4708
      %v4781 = vunpack.c.l.b16 %v4709
      %v4782 = vunpack.c.l.b16 %v4710
      %v4783 = vunpack.c.l.b16 %v4711
      %v4784 = vunpack.c.l.b16 %v4712
      %v4785 = vunpack.c.l.b16 %v4713
      %v4786 = vunpack.c.l.b16 %v4714
      %v4787 = vunpack.c.l.b16 %v4715
      %v4788 = vunpack.c.l.b16 %v4716
      %v4789 = vpack.c.b16 %v4754, %v4753
      %v4790 = vpack.c.b16 %v4756, %v4755
      %v4791 = vpack.c.b16 %v4758, %v4757
      %v4792 = vpack.c.b16 %v4760, %v4759
      %v4793 = vpack.c.b16 %v4762, %v4761
      %v4794 = vpack.c.b16 %v4764, %v4763
      %v4795 = vpack.c.b16 %v4766, %v4765
      %v4796 = vpack.c.b16 %v4768, %v4767
      %v4797 = vpack.c.b16 %v4770, %v4769
      %v4798 = vpack.c.b16 %v4772, %v4771
      %v4799 = vpack.c.b16 %v4774, %v4773
      %v4800 = vpack.c.b16 %v4776, %v4775
      %v4801 = vpack.c.b16 %v4778, %v4777
      %v4802 = vpack.c.b16 %v4780, %v4779
      %v4803 = vpack.c.b16 %v4782, %v4781
      %v4804 = vpack.c.b16 %v4784, %v4783
      %v4805 = vpack.c.b16 %v4786, %v4785
      %v4806 = vpack.c.b16 %v4788, %v4787
      %vm4824 = vcmask 228352
      %v4826 = vsel %vm4824, %v4680, 0
      %vm4828 = vcmask 1045504
      %v4830 = vsel %vm4828, %v4806, 0
      %4832 = vmatprep.subr.bf16.mxu0 0
      %4833 = vmatpush1.bf16.msra.mxu0 %v4789
      %4834 = vmatprep.subr.bf16.mxu0 0
      %4835 = vmatpush1.bf16.msra.mxu0 %v4790
      %4836 = vmatprep.subr.bf16.mxu0 0
      %4837 = vmatpush1.bf16.msra.mxu0 %v4791
      %4838 = vmatprep.subr.bf16.mxu0 0
      %4839 = vmatpush1.bf16.msra.mxu0 %v4792
      %4840 = vmatprep.subr.bf16.mxu0 0
      %4841 = vmatpush1.bf16.msra.mxu0 %v4793
      %4842 = vmatprep.subr.bf16.mxu0 0
      %4843 = vmatpush1.bf16.msra.mxu0 %v4794
      %4844 = vmatprep.subr.bf16.mxu0 0
      %4845 = vmatpush1.bf16.msra.mxu0 %v4795
      %4846 = vmatprep.subr.bf16.mxu0 0
      %4847 = vmatpush1.bf16.msra.mxu0 %v4796
      %4848 = vmatprep.subr.bf16.mxu0 0
      %4849 = vmatpush1.bf16.msra.mxu0 %v4797
      %4850 = vmatprep.subr.bf16.mxu0 0
      %4851 = vmatpush1.bf16.msra.mxu0 %v4798
      %4852 = vmatprep.subr.bf16.mxu0 0
      %4853 = vmatpush1.bf16.msra.mxu0 %v4799
      %4854 = vmatprep.subr.bf16.mxu0 0
      %4855 = vmatpush1.bf16.msra.mxu0 %v4800
      %4856 = vmatprep.subr.bf16.mxu0 0
      %4857 = vmatpush1.bf16.msra.mxu0 %v4801
      %4858 = vmatprep.subr.bf16.mxu0 0
      %4859 = vmatpush1.bf16.msra.mxu0 %v4802
      %4860 = vmatprep.subr.bf16.mxu0 0
      %4861 = vmatpush1.bf16.msra.mxu0 %v4803
      %4862 = vmatprep.subr.bf16.mxu0 0
      %4863 = vmatpush1.bf16.msra.mxu0 %v4804
      %4864 = vmatprep.mubr.bf16.mxu0 %v4679
      %4865 = vmatmul.mubr.bf16.gmra.mrb[0].mxu0 %v4678
      %v4866 = vpop.f32.mrb[0].mxu0
      %v4867 = vadd.f32 0.0, %v4866
      %v4868 = vpop.f32.mrb[0].mxu0
      %v4869 = vpop.f32.mrb[0].mxu0
      %v4870 = vadd.f32 0.0, %v4869
      %v4871 = vpop.f32.mrb[0].mxu0
      %4872 = vdwg.mxu0
      %4873 = vmatprep.subr.bf16.mxu0 0
      %4874 = vmatpush1.bf16.msra.mxu0 %v4805
      %4875 = vmatprep.subr.bf16.mxu0 0
      %4876 = vmatpush1.bf16.msra.mxu0 %v4830
      %4877 = vmatprep.subr.bf16.mxu0 0
      %4878 = vmatpush1.bf16.msra.mxu0 0
      %4879 = vmatprep.subr.bf16.mxu0 0
      %4880 = vmatpush1.bf16.msra.mxu0 0
      %4881 = vmatprep.subr.bf16.mxu0 0
      %4882 = vmatpush1.bf16.msra.mxu0 0
      %4883 = vmatprep.subr.bf16.mxu0 0
      %4884 = vmatpush1.bf16.msra.mxu0 0
      %4885 = vmatprep.subr.bf16.mxu0 0
      %4886 = vmatpush1.bf16.msra.mxu0 0
      %4887 = vmatprep.subr.bf16.mxu0 0
      %4888 = vmatpush1.bf16.msra.mxu0 0
      %4889 = vmatprep.subr.bf16.mxu0 0
      %4890 = vmatpush1.bf16.msra.mxu0 0
      %4891 = vmatprep.subr.bf16.mxu0 0
      %4892 = vmatpush1.bf16.msra.mxu0 0
      %4893 = vmatprep.subr.bf16.mxu0 0
      %4894 = vmatpush1.bf16.msra.mxu0 0
      %4895 = vmatprep.subr.bf16.mxu0 0
      %4896 = vmatpush1.bf16.msra.mxu0 0
      %4897 = vmatprep.subr.bf16.mxu0 0
      %4898 = vmatpush1.bf16.msra.mxu0 0
      %4899 = vmatprep.subr.bf16.mxu0 0
      %4900 = vmatpush1.bf16.msra.mxu0 0
      %4901 = vmatprep.subr.bf16.mxu0 0
      %4902 = vmatpush1.bf16.msra.mxu0 0
      %4903 = vmatprep.subr.bf16.mxu0 0
      %4904 = vmatpush1.bf16.msra.mxu0 0
      %4905 = vmatprep.mubr.bf16.mxu0 0
      %4906 = vmatmul.mubr.bf16.gmra.mrb[0].mxu0 %v4826
      %v4907 = vpop.f32.mrb[0].mxu0
      %v4908 = vadd.f32 %v4867, %v4907
      %v4909 = vpop.f32.mrb[0].mxu0
      %v4910 = vpop.f32.mrb[0].mxu0
      %v4911 = vadd.f32 %v4870, %v4910
      %v4912 = vpop.f32.mrb[0].mxu0
      %4913 = vdwg.mxu0
      %v4914 = vtanh.pop %v4908
      %v4915 = vtanh.pop %v4911
      %4916 = vst.msk [vmem:[%s474] sm:$0xff] %vm4555, %v4914
      %4917 = vst.msk [vmem:[%s474 + $0x8] sm:$0xff] %vm4555, %v4915
      %p4918 = scmp.lt.s32.totalorder %s24, 1
      %s4919 = scalar_select %p4918, %s24, 1
      %s4920 = smul.addr %s4919, 2
      %s4921 = smul.addr %s4920, 8
      %s4922 = scalar_lea.vmem %s13, %s4921
      // Predicated region
      $region73: #{motion_model_ts_forward.1} parent=71 // pred_check
        %p4923 = pneg %p330
      $region74: #{motion_model_ts_forward.1} parent=71 // pred_check_branch
        %4925 = sbr.rel (%p4923) target = $region76
      $region75: #{motion_model_ts_forward.1} parent=71 // pred_region
        _
      $region76: #{motion_model_ts_forward.1} parent=71 // pred_fallthru
        _
    $region72: #{motion_model_ts_forward.1} parent=5 // pred_fallthru
      _
    %p4926 = scmp.le.s32.totalorder 2, %s19
    // Predicated region
    $region77: #{motion_model_ts_forward.1} parent=5 // pred_check
      %p4927 = pneg %p4926
    $region78: #{motion_model_ts_forward.1} parent=5 // pred_check_branch
      %4929 = sbr.rel (%p4927) target = $region80
    $region79: #{motion_model_ts_forward.1} parent=5 // pred_region
      %s4930 = ssub.s32 %s19, 2
      // Predicated region
      $region81: #{motion_model_ts_forward.1} parent=79 // pred_check
        %p4931 = pneg %p336
      $region82: #{motion_model_ts_forward.1} parent=79 // pred_check_branch
        %4933 = sbr.rel (%p4931) target = $region84
      $region83: #{motion_model_ts_forward.1} parent=79 // pred_region
        %p4934 = scmp.lt.s32.totalorder %s25, 1
        %s4935 = scalar_select %p4934, %s25, 1
        %s4936 = smul.addr %s4935, 2
        %s4937 = smul.addr %s4936, 8
        %s4938 = scalar_lea.vmem %s13, %s4937
      $region84: #{motion_model_ts_forward.1} parent=79 // pred_fallthru
        _
    $region80: #{motion_model_ts_forward.1} parent=5 // pred_fallthru
      _
  $region6: #{motion_model_ts_forward.1} parent=0 // loop_footer
    %s23 = sadd.s32 1, %s19
  $region7: #{motion_model_ts_forward.1} parent=0 // loop_footer_branch
    %18 = sbr.rel target = $region3
  $region8: #{motion_model_ts_forward.1} parent=0 // loop_exit
    _

</llo_original>
